<compile_context>
chip_gen: v7x
topology: tpu7x:2x2x1
jax: 0.10.0
libtpu: 0.0.40
codegen_flags: <defaults>
</compile_context>

<pallas_src>
import functools
import math

import jax
import jax.numpy as jnp
from jax import lax
from jax.experimental import pallas as pl
from jax.experimental.pallas import tpu as pltpu


def _round_up(x, m):
    return (x + m - 1) // m * m


def _pick_head_block(num_heads, n_tokens, head_dim, c, c_pad, itemsize,
                     budget=12 * 1024 * 1024):
    """Largest divisor of num_heads whose per-grid-step VMEM stays under budget."""
    for hb in range(num_heads, 0, -1):
        if num_heads % hb:
            continue
        qkv_cols = 3 * hb * head_dim
        est = (2 * n_tokens * c * 4                # x block (double buffered, f32)
               + 2 * c * qkv_cols * itemsize       # fused Wqkv block
               + 2 * c * c_pad * itemsize          # full Wproj block
               + 2 * n_tokens * c_pad * 4          # output block
               + n_tokens * c * itemsize           # y scratch
               + n_tokens * qkv_cols * itemsize    # qkv scratch
               + 2 * n_tokens * n_tokens * 4)      # scores + exp temporaries
        if est <= budget:
            return hb
    return 1


def _attention_kernel(x_ref, wqkv_ref, bqkv_ref, wp_ref, bp_ref, o_ref,
                      qkv_ref, y_ref, *, head_block, head_dim, num_groups,
                      compute_dtype, approx_recip):
    # Per grid step (b, g):
    #   x_ref   : (1, N, C)            wqkv_ref: (1, C, 3*HB*hd)  [Qg|Kg|Vg]
    #   bqkv_ref: (1, 1, 3*HB*hd)      wp_ref  : (C, Cpad)  bp_ref: (1, Cpad)
    #   o_ref   : (1, N, Cpad)         qkv_ref : (N, 3*HB*hd) scratch
    #   y_ref   : (N, C) scratch holding merged head outputs across groups
    hb_hd = head_block * head_dim

    # Fused QKV projection for this head group: one wide MXU matmul.
    # (qk scale is already folded into the Q columns of wqkv / bqkv.)
    x = x_ref[0].astype(compute_dtype)
    qkv = jnp.dot(x, wqkv_ref[0], preferred_element_type=jnp.float32)
    qkv_ref[...] = (qkv + bqkv_ref[0]).astype(compute_dtype)

    if num_groups == 1:
        col_base = 0                                    # fully static slices
    else:
        col_base = pl.multiple_of(pl.program_id(1) * hb_hd, hb_hd)

    for j in range(head_block):                         # static unroll
        q = qkv_ref[:, pl.ds(j * head_dim, head_dim)]
        k = qkv_ref[:, pl.ds(hb_hd + j * head_dim, head_dim)]
        v = qkv_ref[:, pl.ds(2 * hb_hd + j * head_dim, head_dim)]

        # Contract both head dims directly -> no explicit k transpose.
        s = lax.dot_general(q, k, (((1,), (1,)), ((), ())),
                            preferred_element_type=jnp.float32)      # (N, N)
        s = s - jnp.max(s, axis=-1, keepdims=True)
        p = jnp.exp(s)                                                # f32
        l = jnp.sum(p, axis=-1, keepdims=True)                        # (N, 1)

        o = jnp.dot(p.astype(compute_dtype), v,
                    preferred_element_type=jnp.float32)               # (N, hd)
        # Deferred softmax normalization: N*hd multiplies + one reciprocal per
        # row instead of N*N divides.
        o = o * pl.reciprocal(l, approx=approx_recip)

        y_ref[:, pl.ds(col_base + j * head_dim, head_dim)] = o.astype(y_ref.dtype)

    # Single full-width output projection once all heads of this batch row are
    # in the y scratch: (N, C) @ (C, Cpad) + bias, lane-dense store.
    def _finalize():
        out = jnp.dot(y_ref[...], wp_ref[...],
                      preferred_element_type=jnp.float32) + bp_ref[...]
        o_ref[0] = out.astype(o_ref.dtype)

    if num_groups == 1:
        _finalize()
    else:
        pl.when(pl.program_id(1) == num_groups - 1)(_finalize)


def _fused_attention(x, wqkv_g, bqkv_g, wp_p, bp_p, *, num_heads, head_dim,
                     head_block, compute_dtype, approx_recip):
    B, N, C = x.shape
    num_groups = num_heads // head_block
    Cpad = wp_p.shape[1]
    hb3 = 3 * head_block * head_dim
    itemsize = jnp.dtype(compute_dtype).itemsize

    kernel = functools.partial(
        _attention_kernel, head_block=head_block, head_dim=head_dim,
        num_groups=num_groups, compute_dtype=compute_dtype,
        approx_recip=approx_recip)

    flops = int(2 * B * N * C * 3 * C                      # fused QKV
                + 4 * B * num_heads * N * N * head_dim     # scores + attn@v
                + 2 * B * N * C * Cpad)                    # output projection
    transcendentals = int(B * num_heads * N * N)
    bytes_accessed = int(x.size * x.dtype.itemsize
                         + (wqkv_g.size + wp_p.size) * itemsize
                         + (bqkv_g.size + bp_p.size) * 4
                         + B * N * Cpad * x.dtype.itemsize)

    vmem_est = int(2 * N * C * 4 + 2 * C * hb3 * itemsize + 2 * C * Cpad * itemsize
                   + 2 * N * Cpad * 4 + N * C * itemsize + N * hb3 * itemsize
                   + 2 * N * N * 4)
    vmem_limit = int(min(96 * 1024 * 1024, max(32 * 1024 * 1024, 2 * vmem_est)))

    out = pl.pallas_call(
        kernel,
        out_shape=jax.ShapeDtypeStruct((B, N, Cpad), x.dtype),
        grid_spec=pltpu.PrefetchScalarGridSpec(
            num_scalar_prefetch=0,
            grid=(B, num_groups),
            in_specs=[
                pl.BlockSpec((1, N, C), lambda b, g: (b, 0, 0)),      # x
                pl.BlockSpec((1, C, hb3), lambda b, g: (g, 0, 0)),    # fused Wqkv
                pl.BlockSpec((1, 1, hb3), lambda b, g: (g, 0, 0)),    # fused bqkv
                pl.BlockSpec((C, Cpad), lambda b, g: (0, 0)),         # full Wproj
                pl.BlockSpec((1, Cpad), lambda b, g: (0, 0)),         # proj bias
            ],
            out_specs=pl.BlockSpec((1, N, Cpad), lambda b, g: (b, 0, 0)),
            scratch_shapes=[
                pltpu.VMEM((N, hb3), compute_dtype),   # current group's qkv
                pltpu.VMEM((N, C), compute_dtype),     # merged head outputs
            ],
        ),
        compiler_params=pltpu.CompilerParams(
            dimension_semantics=("parallel", "arbitrary"),
            vmem_limit_bytes=vmem_limit,
        ),
        cost_estimate=pl.CostEstimate(flops=flops,
                                      transcendentals=transcendentals,
                                      bytes_accessed=bytes_accessed),
    )(x, wqkv_g, bqkv_g, wp_p, bp_p)

    if Cpad != C:                 # no-op path when C is already 128-aligned
        out = out[..., :C]
    return out


class AttentionPallas:
    """JAX/Pallas port of SpectralGPT Attention (dropout p=0 -> identity)."""

    def __init__(self, dim, num_heads=8, qkv_bias=False, qk_scale=None,
                 attn_drop=0.0, proj_drop=0.0, input_size=(4, 14, 14), *,
                 key, compute_dtype=jnp.float32, head_block=None):
        assert dim % num_heads == 0, "dim should be divisible by num_heads"
        assert attn_drop == 0.0
        self.dim = dim
        self.num_heads = num_heads
        self.head_dim = dim // num_heads
        self.scale = qk_scale or self.head_dim ** (-0.5)
        self.input_size = input_size
        assert self.input_size[1] == self.input_size[2]
        self.proj_drop = proj_drop            # identity at p=0 / eval
        self.compute_dtype = compute_dtype
        # Exact reciprocal for f32 runs (tight numerics); EUP approx for bf16.
        self.approx_recip = jnp.dtype(compute_dtype) != jnp.dtype(jnp.float32)

        # ---- raw parameters in PyTorch nn.Linear layout: (out, in) ----
        def linear_init(k, out_f, in_f, with_bias):
            kw, kb = jax.random.split(k)
            bound = 1.0 / math.sqrt(in_f)
            w = jax.random.uniform(kw, (out_f, in_f), jnp.float32, -bound, bound)
            b = (jax.random.uniform(kb, (out_f,), jnp.float32, -bound, bound)
                 if with_bias else jnp.zeros((out_f,), jnp.float32))
            return w, b

        kq, kk, kv, kp = jax.random.split(key, 4)
        self.wq, self.bq = linear_init(kq, dim, dim, qkv_bias)
        self.wk, self.bk = linear_init(kk, dim, dim, qkv_bias)
        self.wv, self.bv = linear_init(kv, dim, dim, qkv_bias)
        self.wp, self.bp = linear_init(kp, dim, dim, True)

        # ---- kernel-layout weights, prepared ONCE (hoisted out of forward) ----
        C, H, hd = dim, num_heads, self.head_dim
        Cpad = _round_up(C, 128)
        self.Cpad = Cpad
        itemsize = jnp.dtype(compute_dtype).itemsize
        if head_block is None:
            n_nominal = int(input_size[0] * input_size[1] * input_size[2]) + 1
            head_block = _pick_head_block(H, n_nominal, hd, C, Cpad, itemsize)
        assert H % head_block == 0
        self.head_block = head_block
        self.num_groups = H // head_block
        HB, HG = head_block, self.num_groups
        cdt = compute_dtype

        def per_head_io(w):                    # (out=C, in=C) -> (H, C, hd)
            return jnp.transpose(w.T.reshape(C, H, hd), (1, 0, 2))

        def group_cols(w_h):                   # (H, C, hd) -> (HG, C, HB*hd)
            return (w_h.reshape(HG, HB, C, hd)
                       .transpose(0, 2, 1, 3)
                       .reshape(HG, C, HB * hd))

        scale = jnp.float32(self.scale)
        wq_h = per_head_io(self.wq) * scale    # fold qk scale into Wq
        wk_h = per_head_io(self.wk)
        wv_h = per_head_io(self.wv)
        self._wqkv = jnp.concatenate(
            [group_cols(wq_h), group_cols(wk_h), group_cols(wv_h)],
            axis=-1).astype(cdt)                               # (HG, C, 3*HB*hd)

        def group_bias(b):                     # (C,) -> (HG, 1, HB*hd)
            return b.reshape(HG, 1, HB * hd)

        self._bqkv = jnp.concatenate(
            [group_bias(self.bq * scale), group_bias(self.bk),
             group_bias(self.bv)], axis=-1).astype(jnp.float32)  # (HG, 1, 3*HB*hd)

        self._wp = jnp.pad(self.wp.T, ((0, 0), (0, Cpad - C))).astype(cdt)  # (C, Cpad)
        self._bp = jnp.pad(self.bp, (0, Cpad - C)).reshape(1, Cpad).astype(jnp.float32)

    def __call__(self, x):
        B, N, C = x.shape
        assert C == self.dim
        out = _fused_attention(
            x, self._wqkv, self._bqkv, self._wp, self._bp,
            num_heads=self.num_heads, head_dim=self.head_dim,
            head_block=self.head_block, compute_dtype=self.compute_dtype,
            approx_recip=self.approx_recip)
        return out.reshape(B, -1, C)          # mirrors x.view(B, -1, C)


def _reference(x, m):
    """Pure-JAX reference matching the PyTorch forward exactly."""
    B, N, C = x.shape
    H, hd = m.num_heads, m.head_dim
    q = (x @ m.wq.T + m.bq).reshape(B, N, H, hd).transpose(0, 2, 1, 3)
    k = (x @ m.wk.T + m.bk).reshape(B, N, H, hd).transpose(0, 2, 1, 3)
    v = (x @ m.wv.T + m.bv).reshape(B, N, H, hd).transpose(0, 2, 1, 3)
    attn = (q @ jnp.swapaxes(k, -1, -2)) * m.scale
    attn = jax.nn.softmax(attn, axis=-1)
    y = jnp.swapaxes(attn @ v, 1, 2).reshape(B, N, C)
    return y @ m.wp.T + m.bp


if __name__ == "__main__":
    key = jax.random.PRNGKey(0)
    k_param, k_x = jax.random.split(key)

    B, N, C, num_heads = 2, 64, 32, 8        # seq=64, hidden=32, head_dim=4
    x = jax.random.normal(k_x, (B, N, C), jnp.float32)

    # f32 MXU operands here so the check against the pure-JAX reference is
    # tight; use compute_dtype=jnp.bfloat16 in production for MXU peak.
    module = AttentionPallas(dim=C, num_heads=num_heads, qkv_bias=False,
                             input_size=(4, 14, 14), key=k_param,
                             compute_dtype=jnp.float32)
    out = jax.block_until_ready(module(x))
    ref = _reference(x, module)
    assert out.shape == (B, N, C), out.shape
    max_err = float(jnp.max(jnp.abs(out - ref)))
    assert jnp.allclose(out, ref, atol=1e-4, rtol=1e-4), max_err

    # bf16-operand production path: smoke-test that it compiles and runs.
    module_bf16 = AttentionPallas(dim=C, num_heads=num_heads, qkv_bias=False,
                                  input_size=(4, 14, 14), key=k_param,
                                  compute_dtype=jnp.bfloat16)
    out_bf16 = jax.block_until_ready(module_bf16(x))
    assert out_bf16.shape == (B, N, C)
    assert bool(jnp.all(jnp.isfinite(out_bf16)))

    print("KERNEL_OK")
</pallas_src>

<mosaic_0001>
module attributes {stable_mosaic.version = 11 : i64} {
  func.func @_attention_kernel(%arg0: i32, %arg1: i32, %arg2: memref<1x64x32xf32, #tpu.memory_space<vmem>>, %arg3: memref<1x32x96xf32, #tpu.memory_space<vmem>>, %arg4: memref<1x1x96xf32, #tpu.memory_space<vmem>>, %arg5: memref<32x128xf32, #tpu.memory_space<vmem>>, %arg6: memref<1x128xf32, #tpu.memory_space<vmem>>, %arg7: memref<1x64x128xf32, #tpu.memory_space<vmem>>, %arg8: memref<64x96xf32, #tpu.memory_space<vmem>>, %arg9: memref<64x32xf32, #tpu.memory_space<vmem>>) attributes {dimension_semantics = [#tpu.dimension_semantics<parallel>, #tpu.dimension_semantics<arbitrary>], iteration_bounds = array<i64: 2, 1>, scalar_prefetch = 0 : i64, scratch_operands = 2 : i64, tpu.core_type = #tpu.core_type<tc>, window_params = [{transform_indices = @transform_0, window_bounds = array<i64: 1, 64, 32>}, {transform_indices = @transform_1, window_bounds = array<i64: 1, 32, 96>}, {transform_indices = @transform_2, window_bounds = array<i64: 1, 1, 96>}, {pipeline_mode = #tpu.pipeline_mode<synchronous>, transform_indices = @transform_3, window_bounds = array<i64: 32, 128>}, {pipeline_mode = #tpu.pipeline_mode<synchronous>, transform_indices = @transform_4, window_bounds = array<i64: 1, 128>}, {transform_indices = @transform_5, window_bounds = array<i64: 1, 64, 128>}]} {
    %c0 = arith.constant 0 : index
    %c0_0 = arith.constant 0 : index
    %c0_1 = arith.constant 0 : index
    %0 = vector.load %arg2[%c0, %c0_0, %c0_1] : memref<1x64x32xf32, #tpu.memory_space<vmem>>, vector<1x64x32xf32>
    %1 = vector.shape_cast %0 : vector<1x64x32xf32> to vector<64x32xf32>
    %c0_2 = arith.constant 0 : index
    %c0_3 = arith.constant 0 : index
    %c0_4 = arith.constant 0 : index
    %2 = vector.load %arg3[%c0_2, %c0_3, %c0_4] : memref<1x32x96xf32, #tpu.memory_space<vmem>>, vector<1x32x96xf32>
    %3 = vector.shape_cast %2 : vector<1x32x96xf32> to vector<32x96xf32>
    %cst = arith.constant dense<0.000000e+00> : vector<64x96xf32>
    %4 = tpu.matmul %1, %3, %cst {dimension_numbers = #tpu.dot_dimension_numbers<[1], [0], [0], [1], [0, 0, 1, 1], [], []>} : vector<64x32xf32>, vector<32x96xf32>, vector<64x96xf32> -> vector<64x96xf32>
    %c0_5 = arith.constant 0 : index
    %c0_6 = arith.constant 0 : index
    %c0_7 = arith.constant 0 : index
    %5 = vector.load %arg4[%c0_5, %c0_6, %c0_7] : memref<1x1x96xf32, #tpu.memory_space<vmem>>, vector<1x1x96xf32>
    %6 = vector.shape_cast %5 : vector<1x1x96xf32> to vector<1x96xf32>
    %7 = vector.broadcast %6 : vector<1x96xf32> to vector<64x96xf32>
    %8 = arith.addf %4, %7 : vector<64x96xf32>
    %c0_8 = arith.constant 0 : index
    %c0_9 = arith.constant 0 : index
    %9 = vector.load %arg8[%c0_8, %c0_9] : memref<64x96xf32, #tpu.memory_space<vmem>>, vector<64x96xf32>
    tpu.vector_store %arg8[%c0_8, %c0_9], %8 {strides = array<i32>} : memref<64x96xf32, #tpu.memory_space<vmem>>, vector<64x96xf32>,
    %c0_10 = arith.constant 0 : index
    %c0_11 = arith.constant 0 : index
    %10 = vector.load %arg8[%c0_10, %c0_11] : memref<64x96xf32, #tpu.memory_space<vmem>>, vector<64x4xf32>
    %c0_12 = arith.constant 0 : index
    %c32 = arith.constant 32 : index
    %11 = vector.load %arg8[%c0_12, %c32] : memref<64x96xf32, #tpu.memory_space<vmem>>, vector<64x4xf32>
    %c0_13 = arith.constant 0 : index
    %c64 = arith.constant 64 : index
    %12 = vector.load %arg8[%c0_13, %c64] : memref<64x96xf32, #tpu.memory_space<vmem>>, vector<64x4xf32>
    %cst_14 = arith.constant dense<0.000000e+00> : vector<64x64xf32>
    %13 = tpu.matmul %10, %11, %cst_14 {dimension_numbers = #tpu.dot_dimension_numbers<[1], [1], [0], [0], [0, 0, 1, 0], [], []>} : vector<64x4xf32>, vector<64x4xf32>, vector<64x64xf32> -> vector<64x64xf32>
    %cst_15 = arith.constant dense<0xFF800000> : vector<64xf32>
    %14 = vector.multi_reduction <maximumf>, %13, %cst_15 [1] : vector<64x64xf32> to vector<64xf32>
    %15 = vector.shape_cast %14 : vector<64xf32> to vector<64x1xf32>
    %16 = vector.broadcast %15 : vector<64x1xf32> to vector<64x64xf32>
    %17 = arith.subf %13, %16 : vector<64x64xf32>
    %18 = math.exp %17 : vector<64x64xf32>
    %cst_16 = arith.constant dense<0.000000e+00> : vector<64xf32>
    %19 = vector.multi_reduction <add>, %18, %cst_16 [1] : vector<64x64xf32> to vector<64xf32>
    %20 = vector.shape_cast %19 : vector<64xf32> to vector<64x1xf32>
    %cst_17 = arith.constant dense<0.000000e+00> : vector<64x4xf32>
    %21 = tpu.matmul %18, %12, %cst_17 {dimension_numbers = #tpu.dot_dimension_numbers<[1], [0], [0], [1], [0, 0, 1, 1], [], []>} : vector<64x64xf32>, vector<64x4xf32>, vector<64x4xf32> -> vector<64x4xf32>
    %22 = tpu.reciprocal %20 : vector<64x1xf32> -> vector<64x1xf32>
    %23 = vector.broadcast %22 : vector<64x1xf32> to vector<64x4xf32>
    %24 = arith.mulf %21, %23 : vector<64x4xf32>
    %c0_18 = arith.constant 0 : index
    %c0_19 = arith.constant 0 : index
    %25 = vector.load %arg9[%c0_18, %c0_19] : memref<64x32xf32, #tpu.memory_space<vmem>>, vector<64x4xf32>
    tpu.vector_store %arg9[%c0_18, %c0_19], %24 {strides = array<i32>} : memref<64x32xf32, #tpu.memory_space<vmem>>, vector<64x4xf32>,
    %c0_20 = arith.constant 0 : index
    %c4 = arith.constant 4 : index
    %26 = vector.load %arg8[%c0_20, %c4] : memref<64x96xf32, #tpu.memory_space<vmem>>, vector<64x4xf32>
    %c0_21 = arith.constant 0 : index
    %c36 = arith.constant 36 : index
    %27 = vector.load %arg8[%c0_21, %c36] : memref<64x96xf32, #tpu.memory_space<vmem>>, vector<64x4xf32>
    %c0_22 = arith.constant 0 : index
    %c68 = arith.constant 68 : index
    %28 = vector.load %arg8[%c0_22, %c68] : memref<64x96xf32, #tpu.memory_space<vmem>>, vector<64x4xf32>
    %cst_23 = arith.constant dense<0.000000e+00> : vector<64x64xf32>
    %29 = tpu.matmul %26, %27, %cst_23 {dimension_numbers = #tpu.dot_dimension_numbers<[1], [1], [0], [0], [0, 0, 1, 0], [], []>} : vector<64x4xf32>, vector<64x4xf32>, vector<64x64xf32> -> vector<64x64xf32>
    %cst_24 = arith.constant dense<0xFF800000> : vector<64xf32>
    %30 = vector.multi_reduction <maximumf>, %29, %cst_24 [1] : vector<64x64xf32> to vector<64xf32>
    %31 = vector.shape_cast %30 : vector<64xf32> to vector<64x1xf32>
    %32 = vector.broadcast %31 : vector<64x1xf32> to vector<64x64xf32>
    %33 = arith.subf %29, %32 : vector<64x64xf32>
    %34 = math.exp %33 : vector<64x64xf32>
    %cst_25 = arith.constant dense<0.000000e+00> : vector<64xf32>
    %35 = vector.multi_reduction <add>, %34, %cst_25 [1] : vector<64x64xf32> to vector<64xf32>
    %36 = vector.shape_cast %35 : vector<64xf32> to vector<64x1xf32>
    %cst_26 = arith.constant dense<0.000000e+00> : vector<64x4xf32>
    %37 = tpu.matmul %34, %28, %cst_26 {dimension_numbers = #tpu.dot_dimension_numbers<[1], [0], [0], [1], [0, 0, 1, 1], [], []>} : vector<64x64xf32>, vector<64x4xf32>, vector<64x4xf32> -> vector<64x4xf32>
    %38 = tpu.reciprocal %36 : vector<64x1xf32> -> vector<64x1xf32>
    %39 = vector.broadcast %38 : vector<64x1xf32> to vector<64x4xf32>
    %40 = arith.mulf %37, %39 : vector<64x4xf32>
    %c0_27 = arith.constant 0 : index
    %c4_28 = arith.constant 4 : index
    %41 = vector.load %arg9[%c0_27, %c4_28] : memref<64x32xf32, #tpu.memory_space<vmem>>, vector<64x4xf32>
    tpu.vector_store %arg9[%c0_27, %c4_28], %40 {strides = array<i32>} : memref<64x32xf32, #tpu.memory_space<vmem>>, vector<64x4xf32>,
    %c0_29 = arith.constant 0 : index
    %c8 = arith.constant 8 : index
    %42 = vector.load %arg8[%c0_29, %c8] : memref<64x96xf32, #tpu.memory_space<vmem>>, vector<64x4xf32>
    %c0_30 = arith.constant 0 : index
    %c40 = arith.constant 40 : index
    %43 = vector.load %arg8[%c0_30, %c40] : memref<64x96xf32, #tpu.memory_space<vmem>>, vector<64x4xf32>
    %c0_31 = arith.constant 0 : index
    %c72 = arith.constant 72 : index
    %44 = vector.load %arg8[%c0_31, %c72] : memref<64x96xf32, #tpu.memory_space<vmem>>, vector<64x4xf32>
    %cst_32 = arith.constant dense<0.000000e+00> : vector<64x64xf32>
    %45 = tpu.matmul %42, %43, %cst_32 {dimension_numbers = #tpu.dot_dimension_numbers<[1], [1], [0], [0], [0, 0, 1, 0], [], []>} : vector<64x4xf32>, vector<64x4xf32>, vector<64x64xf32> -> vector<64x64xf32>
    %cst_33 = arith.constant dense<0xFF800000> : vector<64xf32>
    %46 = vector.multi_reduction <maximumf>, %45, %cst_33 [1] : vector<64x64xf32> to vector<64xf32>
    %47 = vector.shape_cast %46 : vector<64xf32> to vector<64x1xf32>
    %48 = vector.broadcast %47 : vector<64x1xf32> to vector<64x64xf32>
    %49 = arith.subf %45, %48 : vector<64x64xf32>
    %50 = math.exp %49 : vector<64x64xf32>
    %cst_34 = arith.constant dense<0.000000e+00> : vector<64xf32>
    %51 = vector.multi_reduction <add>, %50, %cst_34 [1] : vector<64x64xf32> to vector<64xf32>
    %52 = vector.shape_cast %51 : vector<64xf32> to vector<64x1xf32>
    %cst_35 = arith.constant dense<0.000000e+00> : vector<64x4xf32>
    %53 = tpu.matmul %50, %44, %cst_35 {dimension_numbers = #tpu.dot_dimension_numbers<[1], [0], [0], [1], [0, 0, 1, 1], [], []>} : vector<64x64xf32>, vector<64x4xf32>, vector<64x4xf32> -> vector<64x4xf32>
    %54 = tpu.reciprocal %52 : vector<64x1xf32> -> vector<64x1xf32>
    %55 = vector.broadcast %54 : vector<64x1xf32> to vector<64x4xf32>
    %56 = arith.mulf %53, %55 : vector<64x4xf32>
    %c0_36 = arith.constant 0 : index
    %c8_37 = arith.constant 8 : index
    %57 = vector.load %arg9[%c0_36, %c8_37] : memref<64x32xf32, #tpu.memory_space<vmem>>, vector<64x4xf32>
    tpu.vector_store %arg9[%c0_36, %c8_37], %56 {strides = array<i32>} : memref<64x32xf32, #tpu.memory_space<vmem>>, vector<64x4xf32>,
    %c0_38 = arith.constant 0 : index
    %c12 = arith.constant 12 : index
    %58 = vector.load %arg8[%c0_38, %c12] : memref<64x96xf32, #tpu.memory_space<vmem>>, vector<64x4xf32>
    %c0_39 = arith.constant 0 : index
    %c44 = arith.constant 44 : index
    %59 = vector.load %arg8[%c0_39, %c44] : memref<64x96xf32, #tpu.memory_space<vmem>>, vector<64x4xf32>
    %c0_40 = arith.constant 0 : index
    %c76 = arith.constant 76 : index
    %60 = vector.load %arg8[%c0_40, %c76] : memref<64x96xf32, #tpu.memory_space<vmem>>, vector<64x4xf32>
    %cst_41 = arith.constant dense<0.000000e+00> : vector<64x64xf32>
    %61 = tpu.matmul %58, %59, %cst_41 {dimension_numbers = #tpu.dot_dimension_numbers<[1], [1], [0], [0], [0, 0, 1, 0], [], []>} : vector<64x4xf32>, vector<64x4xf32>, vector<64x64xf32> -> vector<64x64xf32>
    %cst_42 = arith.constant dense<0xFF800000> : vector<64xf32>
    %62 = vector.multi_reduction <maximumf>, %61, %cst_42 [1] : vector<64x64xf32> to vector<64xf32>
    %63 = vector.shape_cast %62 : vector<64xf32> to vector<64x1xf32>
    %64 = vector.broadcast %63 : vector<64x1xf32> to vector<64x64xf32>
    %65 = arith.subf %61, %64 : vector<64x64xf32>
    %66 = math.exp %65 : vector<64x64xf32>
    %cst_43 = arith.constant dense<0.000000e+00> : vector<64xf32>
    %67 = vector.multi_reduction <add>, %66, %cst_43 [1] : vector<64x64xf32> to vector<64xf32>
    %68 = vector.shape_cast %67 : vector<64xf32> to vector<64x1xf32>
    %cst_44 = arith.constant dense<0.000000e+00> : vector<64x4xf32>
    %69 = tpu.matmul %66, %60, %cst_44 {dimension_numbers = #tpu.dot_dimension_numbers<[1], [0], [0], [1], [0, 0, 1, 1], [], []>} : vector<64x64xf32>, vector<64x4xf32>, vector<64x4xf32> -> vector<64x4xf32>
    %70 = tpu.reciprocal %68 : vector<64x1xf32> -> vector<64x1xf32>
    %71 = vector.broadcast %70 : vector<64x1xf32> to vector<64x4xf32>
    %72 = arith.mulf %69, %71 : vector<64x4xf32>
    %c0_45 = arith.constant 0 : index
    %c12_46 = arith.constant 12 : index
    %73 = vector.load %arg9[%c0_45, %c12_46] : memref<64x32xf32, #tpu.memory_space<vmem>>, vector<64x4xf32>
    tpu.vector_store %arg9[%c0_45, %c12_46], %72 {strides = array<i32>} : memref<64x32xf32, #tpu.memory_space<vmem>>, vector<64x4xf32>,
    %c0_47 = arith.constant 0 : index
    %c16 = arith.constant 16 : index
    %74 = vector.load %arg8[%c0_47, %c16] : memref<64x96xf32, #tpu.memory_space<vmem>>, vector<64x4xf32>
    %c0_48 = arith.constant 0 : index
    %c48 = arith.constant 48 : index
    %75 = vector.load %arg8[%c0_48, %c48] : memref<64x96xf32, #tpu.memory_space<vmem>>, vector<64x4xf32>
    %c0_49 = arith.constant 0 : index
    %c80 = arith.constant 80 : index
    %76 = vector.load %arg8[%c0_49, %c80] : memref<64x96xf32, #tpu.memory_space<vmem>>, vector<64x4xf32>
    %cst_50 = arith.constant dense<0.000000e+00> : vector<64x64xf32>
    %77 = tpu.matmul %74, %75, %cst_50 {dimension_numbers = #tpu.dot_dimension_numbers<[1], [1], [0], [0], [0, 0, 1, 0], [], []>} : vector<64x4xf32>, vector<64x4xf32>, vector<64x64xf32> -> vector<64x64xf32>
    %cst_51 = arith.constant dense<0xFF800000> : vector<64xf32>
    %78 = vector.multi_reduction <maximumf>, %77, %cst_51 [1] : vector<64x64xf32> to vector<64xf32>
    %79 = vector.shape_cast %78 : vector<64xf32> to vector<64x1xf32>
    %80 = vector.broadcast %79 : vector<64x1xf32> to vector<64x64xf32>
    %81 = arith.subf %77, %80 : vector<64x64xf32>
    %82 = math.exp %81 : vector<64x64xf32>
    %cst_52 = arith.constant dense<0.000000e+00> : vector<64xf32>
    %83 = vector.multi_reduction <add>, %82, %cst_52 [1] : vector<64x64xf32> to vector<64xf32>
    %84 = vector.shape_cast %83 : vector<64xf32> to vector<64x1xf32>
    %cst_53 = arith.constant dense<0.000000e+00> : vector<64x4xf32>
    %85 = tpu.matmul %82, %76, %cst_53 {dimension_numbers = #tpu.dot_dimension_numbers<[1], [0], [0], [1], [0, 0, 1, 1], [], []>} : vector<64x64xf32>, vector<64x4xf32>, vector<64x4xf32> -> vector<64x4xf32>
    %86 = tpu.reciprocal %84 : vector<64x1xf32> -> vector<64x1xf32>
    %87 = vector.broadcast %86 : vector<64x1xf32> to vector<64x4xf32>
    %88 = arith.mulf %85, %87 : vector<64x4xf32>
    %c0_54 = arith.constant 0 : index
    %c16_55 = arith.constant 16 : index
    %89 = vector.load %arg9[%c0_54, %c16_55] : memref<64x32xf32, #tpu.memory_space<vmem>>, vector<64x4xf32>
    tpu.vector_store %arg9[%c0_54, %c16_55], %88 {strides = array<i32>} : memref<64x32xf32, #tpu.memory_space<vmem>>, vector<64x4xf32>,
    %c0_56 = arith.constant 0 : index
    %c20 = arith.constant 20 : index
    %90 = vector.load %arg8[%c0_56, %c20] : memref<64x96xf32, #tpu.memory_space<vmem>>, vector<64x4xf32>
    %c0_57 = arith.constant 0 : index
    %c52 = arith.constant 52 : index
    %91 = vector.load %arg8[%c0_57, %c52] : memref<64x96xf32, #tpu.memory_space<vmem>>, vector<64x4xf32>
    %c0_58 = arith.constant 0 : index
    %c84 = arith.constant 84 : index
    %92 = vector.load %arg8[%c0_58, %c84] : memref<64x96xf32, #tpu.memory_space<vmem>>, vector<64x4xf32>
    %cst_59 = arith.constant dense<0.000000e+00> : vector<64x64xf32>
    %93 = tpu.matmul %90, %91, %cst_59 {dimension_numbers = #tpu.dot_dimension_numbers<[1], [1], [0], [0], [0, 0, 1, 0], [], []>} : vector<64x4xf32>, vector<64x4xf32>, vector<64x64xf32> -> vector<64x64xf32>
    %cst_60 = arith.constant dense<0xFF800000> : vector<64xf32>
    %94 = vector.multi_reduction <maximumf>, %93, %cst_60 [1] : vector<64x64xf32> to vector<64xf32>
    %95 = vector.shape_cast %94 : vector<64xf32> to vector<64x1xf32>
    %96 = vector.broadcast %95 : vector<64x1xf32> to vector<64x64xf32>
    %97 = arith.subf %93, %96 : vector<64x64xf32>
    %98 = math.exp %97 : vector<64x64xf32>
    %cst_61 = arith.constant dense<0.000000e+00> : vector<64xf32>
    %99 = vector.multi_reduction <add>, %98, %cst_61 [1] : vector<64x64xf32> to vector<64xf32>
    %100 = vector.shape_cast %99 : vector<64xf32> to vector<64x1xf32>
    %cst_62 = arith.constant dense<0.000000e+00> : vector<64x4xf32>
    %101 = tpu.matmul %98, %92, %cst_62 {dimension_numbers = #tpu.dot_dimension_numbers<[1], [0], [0], [1], [0, 0, 1, 1], [], []>} : vector<64x64xf32>, vector<64x4xf32>, vector<64x4xf32> -> vector<64x4xf32>
    %102 = tpu.reciprocal %100 : vector<64x1xf32> -> vector<64x1xf32>
    %103 = vector.broadcast %102 : vector<64x1xf32> to vector<64x4xf32>
    %104 = arith.mulf %101, %103 : vector<64x4xf32>
    %c0_63 = arith.constant 0 : index
    %c20_64 = arith.constant 20 : index
    %105 = vector.load %arg9[%c0_63, %c20_64] : memref<64x32xf32, #tpu.memory_space<vmem>>, vector<64x4xf32>
    tpu.vector_store %arg9[%c0_63, %c20_64], %104 {strides = array<i32>} : memref<64x32xf32, #tpu.memory_space<vmem>>, vector<64x4xf32>,
    %c0_65 = arith.constant 0 : index
    %c24 = arith.constant 24 : index
    %106 = vector.load %arg8[%c0_65, %c24] : memref<64x96xf32, #tpu.memory_space<vmem>>, vector<64x4xf32>
    %c0_66 = arith.constant 0 : index
    %c56 = arith.constant 56 : index
    %107 = vector.load %arg8[%c0_66, %c56] : memref<64x96xf32, #tpu.memory_space<vmem>>, vector<64x4xf32>
    %c0_67 = arith.constant 0 : index
    %c88 = arith.constant 88 : index
    %108 = vector.load %arg8[%c0_67, %c88] : memref<64x96xf32, #tpu.memory_space<vmem>>, vector<64x4xf32>
    %cst_68 = arith.constant dense<0.000000e+00> : vector<64x64xf32>
    %109 = tpu.matmul %106, %107, %cst_68 {dimension_numbers = #tpu.dot_dimension_numbers<[1], [1], [0], [0], [0, 0, 1, 0], [], []>} : vector<64x4xf32>, vector<64x4xf32>, vector<64x64xf32> -> vector<64x64xf32>
    %cst_69 = arith.constant dense<0xFF800000> : vector<64xf32>
    %110 = vector.multi_reduction <maximumf>, %109, %cst_69 [1] : vector<64x64xf32> to vector<64xf32>
    %111 = vector.shape_cast %110 : vector<64xf32> to vector<64x1xf32>
    %112 = vector.broadcast %111 : vector<64x1xf32> to vector<64x64xf32>
    %113 = arith.subf %109, %112 : vector<64x64xf32>
    %114 = math.exp %113 : vector<64x64xf32>
    %cst_70 = arith.constant dense<0.000000e+00> : vector<64xf32>
    %115 = vector.multi_reduction <add>, %114, %cst_70 [1] : vector<64x64xf32> to vector<64xf32>
    %116 = vector.shape_cast %115 : vector<64xf32> to vector<64x1xf32>
    %cst_71 = arith.constant dense<0.000000e+00> : vector<64x4xf32>
    %117 = tpu.matmul %114, %108, %cst_71 {dimension_numbers = #tpu.dot_dimension_numbers<[1], [0], [0], [1], [0, 0, 1, 1], [], []>} : vector<64x64xf32>, vector<64x4xf32>, vector<64x4xf32> -> vector<64x4xf32>
    %118 = tpu.reciprocal %116 : vector<64x1xf32> -> vector<64x1xf32>
    %119 = vector.broadcast %118 : vector<64x1xf32> to vector<64x4xf32>
    %120 = arith.mulf %117, %119 : vector<64x4xf32>
    %c0_72 = arith.constant 0 : index
    %c24_73 = arith.constant 24 : index
    %121 = vector.load %arg9[%c0_72, %c24_73] : memref<64x32xf32, #tpu.memory_space<vmem>>, vector<64x4xf32>
    tpu.vector_store %arg9[%c0_72, %c24_73], %120 {strides = array<i32>} : memref<64x32xf32, #tpu.memory_space<vmem>>, vector<64x4xf32>,
    %c0_74 = arith.constant 0 : index
    %c28 = arith.constant 28 : index
    %122 = vector.load %arg8[%c0_74, %c28] : memref<64x96xf32, #tpu.memory_space<vmem>>, vector<64x4xf32>
    %c0_75 = arith.constant 0 : index
    %c60 = arith.constant 60 : index
    %123 = vector.load %arg8[%c0_75, %c60] : memref<64x96xf32, #tpu.memory_space<vmem>>, vector<64x4xf32>
    %c0_76 = arith.constant 0 : index
    %c92 = arith.constant 92 : index
    %124 = vector.load %arg8[%c0_76, %c92] : memref<64x96xf32, #tpu.memory_space<vmem>>, vector<64x4xf32>
    %cst_77 = arith.constant dense<0.000000e+00> : vector<64x64xf32>
    %125 = tpu.matmul %122, %123, %cst_77 {dimension_numbers = #tpu.dot_dimension_numbers<[1], [1], [0], [0], [0, 0, 1, 0], [], []>} : vector<64x4xf32>, vector<64x4xf32>, vector<64x64xf32> -> vector<64x64xf32>
    %cst_78 = arith.constant dense<0xFF800000> : vector<64xf32>
    %126 = vector.multi_reduction <maximumf>, %125, %cst_78 [1] : vector<64x64xf32> to vector<64xf32>
    %127 = vector.shape_cast %126 : vector<64xf32> to vector<64x1xf32>
    %128 = vector.broadcast %127 : vector<64x1xf32> to vector<64x64xf32>
    %129 = arith.subf %125, %128 : vector<64x64xf32>
    %130 = math.exp %129 : vector<64x64xf32>
    %cst_79 = arith.constant dense<0.000000e+00> : vector<64xf32>
    %131 = vector.multi_reduction <add>, %130, %cst_79 [1] : vector<64x64xf32> to vector<64xf32>
    %132 = vector.shape_cast %131 : vector<64xf32> to vector<64x1xf32>
    %cst_80 = arith.constant dense<0.000000e+00> : vector<64x4xf32>
    %133 = tpu.matmul %130, %124, %cst_80 {dimension_numbers = #tpu.dot_dimension_numbers<[1], [0], [0], [1], [0, 0, 1, 1], [], []>} : vector<64x64xf32>, vector<64x4xf32>, vector<64x4xf32> -> vector<64x4xf32>
    %134 = tpu.reciprocal %132 : vector<64x1xf32> -> vector<64x1xf32>
    %135 = vector.broadcast %134 : vector<64x1xf32> to vector<64x4xf32>
    %136 = arith.mulf %133, %135 : vector<64x4xf32>
    %c0_81 = arith.constant 0 : index
    %c28_82 = arith.constant 28 : index
    %137 = vector.load %arg9[%c0_81, %c28_82] : memref<64x32xf32, #tpu.memory_space<vmem>>, vector<64x4xf32>
    tpu.vector_store %arg9[%c0_81, %c28_82], %136 {strides = array<i32>} : memref<64x32xf32, #tpu.memory_space<vmem>>, vector<64x4xf32>,
    %c0_83 = arith.constant 0 : index
    %c0_84 = arith.constant 0 : index
    %138 = vector.load %arg9[%c0_83, %c0_84] : memref<64x32xf32, #tpu.memory_space<vmem>>, vector<64x32xf32>
    %c0_85 = arith.constant 0 : index
    %c0_86 = arith.constant 0 : index
    %139 = vector.load %arg5[%c0_85, %c0_86] : memref<32x128xf32, #tpu.memory_space<vmem>>, vector<32x128xf32>
    %cst_87 = arith.constant dense<0.000000e+00> : vector<64x128xf32>
    %140 = tpu.matmul %138, %139, %cst_87 {dimension_numbers = #tpu.dot_dimension_numbers<[1], [0], [0], [1], [0, 0, 1, 1], [], []>} : vector<64x32xf32>, vector<32x128xf32>, vector<64x128xf32> -> vector<64x128xf32>
    %c0_88 = arith.constant 0 : index
    %c0_89 = arith.constant 0 : index
    %141 = vector.load %arg6[%c0_88, %c0_89] : memref<1x128xf32, #tpu.memory_space<vmem>>, vector<1x128xf32>
    %142 = vector.broadcast %141 : vector<1x128xf32> to vector<64x128xf32>
    %143 = arith.addf %140, %142 : vector<64x128xf32>
    %c0_90 = arith.constant 0 : index
    %c0_91 = arith.constant 0 : index
    %c0_92 = arith.constant 0 : index
    %144 = vector.load %arg7[%c0_90, %c0_91, %c0_92] : memref<1x64x128xf32, #tpu.memory_space<vmem>>, vector<1x64x128xf32>
    %145 = vector.shape_cast %144 : vector<1x64x128xf32> to vector<64x128xf32>
    %146 = vector.shape_cast %143 : vector<64x128xf32> to vector<1x64x128xf32>
    tpu.vector_store %arg7[%c0_90, %c0_91, %c0_92], %146 {strides = array<i32>} : memref<1x64x128xf32, #tpu.memory_space<vmem>>, vector<1x64x128xf32>,
    return
  }
  func.func @transform_0(%arg0: i32, %arg1: i32) -> (i32, i32, i32) {
    %c0_i32 = arith.constant 0 : i32
    %c0_i32_0 = arith.constant 0 : i32
    %c0_i32_1 = arith.constant 0 : i32
    return %arg0, %c0_i32, %c0_i32_0 : i32, i32, i32
  }
  func.func @transform_1(%arg0: i32, %arg1: i32) -> (i32, i32, i32) {
    %c0_i32 = arith.constant 0 : i32
    %c0_i32_0 = arith.constant 0 : i32
    %c0_i32_1 = arith.constant 0 : i32
    return %arg1, %c0_i32, %c0_i32_0 : i32, i32, i32
  }
  func.func @transform_2(%arg0: i32, %arg1: i32) -> (i32, i32, i32) {
    %c0_i32 = arith.constant 0 : i32
    %c0_i32_0 = arith.constant 0 : i32
    %c0_i32_1 = arith.constant 0 : i32
    return %arg1, %c0_i32, %c0_i32_0 : i32, i32, i32
  }
  func.func @transform_3(%arg0: i32, %arg1: i32) -> (i32, i32) {
    %c0_i32 = arith.constant 0 : i32
    %c0_i32_0 = arith.constant 0 : i32
    %c0_i32_1 = arith.constant 0 : i32
    return %c0_i32, %c0_i32_0 : i32, i32
  }
  func.func @transform_4(%arg0: i32, %arg1: i32) -> (i32, i32) {
    %c0_i32 = arith.constant 0 : i32
    %c0_i32_0 = arith.constant 0 : i32
    %c0_i32_1 = arith.constant 0 : i32
    return %c0_i32, %c0_i32_0 : i32, i32
  }
  func.func @transform_5(%arg0: i32, %arg1: i32) -> (i32, i32, i32) {
    %c0_i32 = arith.constant 0 : i32
    %c0_i32_0 = arith.constant 0 : i32
    %c0_i32_1 = arith.constant 0 : i32
    return %arg0, %c0_i32, %c0_i32_0 : i32, i32, i32
  }
}

</mosaic_0001>

<llo_original>
// kernel: tpu_custom_call.1
$region0: #{tpu_custom_call.1}
  #allocation0 [shape = 'u32[]', space=smem, size = 0x4, offset = 0x4, fixed_abs, tag = 'smem constant byte address 0x4 - core index']
  #allocation1 [shape = 'u32[144,128]{1,0:T(1,128)}', space=vmem, size = 0x12000, scoped, tag = 'internal scratch']
  #allocation2 [shape = 'f32[64,96]{1,0:T(8,128)}', space=vmem, size = 0x8000, scoped, tag = 'scratch operand']
  #allocation3 [shape = 'f32[64,32]{1,0:T(8,128)}', space=vmem, size = 0x8000, scoped, tag = 'scratch operand']
  %s0 = inlined_call_operand.vmem [shape: f32[2,64,32], index: 0, kind: input, shape index: {}]
  %s1 = inlined_call_operand.vmem [shape: f32[1,32,96], index: 1, kind: input, shape index: {}]
  %s2 = inlined_call_operand.vmem [shape: f32[1,1,96], index: 2, kind: input, shape index: {}]
  %s3 = inlined_call_operand.vmem [shape: f32[32,128], index: 3, kind: input, shape index: {}]
  %s4 = inlined_call_operand.vmem [shape: f32[1,128], index: 4, kind: input, shape index: {}]
  %s5 = inlined_call_operand.hbm [shape: f32[2,64,128], index: 5, kind: output, shape index: {}]
  %s6 = sld [smem:[#allocation0]]
  $region53: #{tpu_custom_call.1} parent=0
    _
  %s8 = ssub.s32 1, %s6
  %s9 = scalar_select 0, %s8, %s6
  $region1: #{tpu_custom_call.1} parent=0
    #allocation4 [shape = 'u8[65536]{0}', space=vmem, size = 0x10000, scoped, tag = 'output window, operand 0']
    #allocation5 [shape = 's32[2]{0}', space=sflag, size = 0x8, scoped, tag = 'scoped memory for tpu_custom_call.1']
    %10 = vsyncpa [#allocation5], 0
    %s11 = scalar_lea.sflag [#allocation5], 1
    %12 = vsyncpa %s11, 0
    loop: start=0, step=1, limit=4
    $region2: #{tpu_custom_call.1} parent=1 // loop_pre_header
      _
    $region3: #{tpu_custom_call.1} parent=1 // loop_header
      %s14 = sphi 0, %s18
      %p15 = scmp.ge.s32.totalorder %s14, 4
      %s21 = sphi 0, %s33
      %s22 = sphi 0, %s29
      %s23 = sphi 0, %s21
      %s24 = sphi 0, %s22
      %s25 = sphi 0, %s23
      %s26 = sphi 0, %s24
      %s36 = sphi 0, %s38
      %s39 = sphi 0, %s36
      %s40 = sphi 0, %s39
      %s56 = sphi 0, %s40
      %s62 = sphi 0, %s64
      %s65 = sphi 0, %s62
      %s66 = sphi 0, %s65
      %s82 = sphi 0, %s66
      %s88 = sphi 0, %s90
      %s91 = sphi 0, %s88
      %s92 = sphi 0, %s91
      %s108 = sphi 0, %s92
      %s112 = sphi 0, %s112
      %s114 = sphi 0, %s112
      %s115 = sphi 0, %s114
      %s129 = sphi 0, %s115
      %s133 = sphi 0, %s133
      %s135 = sphi 0, %s133
      %s136 = sphi 0, %s135
      %s150 = sphi 0, %s136
      %s156 = sphi 0, %s158
      %s159 = sphi 0, %s156
      %s160 = sphi 0, %s159
      %s176 = sphi 0, %s160
    $region4: #{tpu_custom_call.1} parent=1 // loop_header_branch
      %17 = sbr.rel (%p15) target = $region8
    $region5: #{tpu_custom_call.1} parent=1 // loop_body
      %s19 = ssub.s32 %s14, 1
      %s20 = ssub.s32 %s14, 2
      %s27 = sadd.s32 1, %s22
      %p28 = scmp.ge.s32.totalorder %s27, 1
      %s29 = scalar_select %p28, 0, %s27
      %s30 = sadd.s32 1, %s21
      %s31 = scalar_select %p28, %s30, %s21
      %p32 = scmp.ge.s32.totalorder %s31, 2
      %s33 = scalar_select %p32, 0, %s31
      %s34 = ssub.s32 %s21, %s33
      %p35 = scmp.eq.s32.totalorder %s34, 0
      %s37 = sadd.s32 %s36, 1
      %s38 = scalar_select %p35, %s36, %s37
      %p41 = pneg %p35
      %p42 = scmp.eq.s32.totalorder %s14, 1
      %p43 = por %p41, %p42
      %p44 = scmp.ne.s32.totalorder %s36, %s39
      %p45 = scmp.eq.s32.totalorder %s14, 0
      %p46 = por %p44, %p45
      %p47 = scmp.ne.s32.totalorder %s36, %s39
      %p48 = scmp.eq.s32.totalorder %s19, 1
      %p49 = por %p47, %p48
      %p50 = scmp.ne.s32.totalorder %s39, %s40
      %p51 = scmp.eq.s32.totalorder %s19, 0
      %p52 = por %p50, %p51
      %p53 = scmp.ne.s32.totalorder %s39, %s40
      %p54 = scmp.eq.s32.totalorder %s20, 1
      %p55 = por %p53, %p54
      %p57 = scmp.ne.s32.totalorder %s40, %s56
      %p58 = scmp.eq.s32.totalorder %s20, 0
      %p59 = por %p57, %p58
      %s60 = ssub.s32 %s22, %s29
      %p61 = scmp.eq.s32.totalorder %s60, 0
      %s63 = sadd.s32 %s62, 1
      %s64 = scalar_select %p61, %s62, %s63
      %p67 = pneg %p61
      %p68 = scmp.eq.s32.totalorder %s14, 1
      %p69 = por %p67, %p68
      %p70 = scmp.ne.s32.totalorder %s62, %s65
      %p71 = scmp.eq.s32.totalorder %s14, 0
      %p72 = por %p70, %p71
      %p73 = scmp.ne.s32.totalorder %s62, %s65
      %p74 = scmp.eq.s32.totalorder %s19, 1
      %p75 = por %p73, %p74
      %p76 = scmp.ne.s32.totalorder %s65, %s66
      %p77 = scmp.eq.s32.totalorder %s19, 0
      %p78 = por %p76, %p77
      %p79 = scmp.ne.s32.totalorder %s65, %s66
      %p80 = scmp.eq.s32.totalorder %s20, 1
      %p81 = por %p79, %p80
      %p83 = scmp.ne.s32.totalorder %s66, %s82
      %p84 = scmp.eq.s32.totalorder %s20, 0
      %p85 = por %p83, %p84
      %s86 = ssub.s32 %s22, %s29
      %p87 = scmp.eq.s32.totalorder %s86, 0
      %s89 = sadd.s32 %s88, 1
      %s90 = scalar_select %p87, %s88, %s89
      %p93 = pneg %p87
      %p94 = scmp.eq.s32.totalorder %s14, 1
      %p95 = por %p93, %p94
      %p96 = scmp.ne.s32.totalorder %s88, %s91
      %p97 = scmp.eq.s32.totalorder %s14, 0
      %p98 = por %p96, %p97
      %p99 = scmp.ne.s32.totalorder %s88, %s91
      %p100 = scmp.eq.s32.totalorder %s19, 1
      %p101 = por %p99, %p100
      %p102 = scmp.ne.s32.totalorder %s91, %s92
      %p103 = scmp.eq.s32.totalorder %s19, 0
      %p104 = por %p102, %p103
      %p105 = scmp.ne.s32.totalorder %s91, %s92
      %p106 = scmp.eq.s32.totalorder %s20, 1
      %p107 = por %p105, %p106
      %p109 = scmp.ne.s32.totalorder %s92, %s108
      %p110 = scmp.eq.s32.totalorder %s20, 0
      %p111 = por %p109, %p110
      %s113 = sadd.s32 %s112, 1
      %p116 = scmp.eq.s32.totalorder %s14, 1
      %p117 = scmp.ne.s32.totalorder %s112, %s114
      %p118 = scmp.eq.s32.totalorder %s14, 0
      %p119 = por %p117, %p118
      %p120 = scmp.ne.s32.totalorder %s112, %s114
      %p121 = scmp.eq.s32.totalorder %s19, 1
      %p122 = por %p120, %p121
      %p123 = scmp.ne.s32.totalorder %s114, %s115
      %p124 = scmp.eq.s32.totalorder %s19, 0
      %p125 = por %p123, %p124
      %p126 = scmp.ne.s32.totalorder %s114, %s115
      %p127 = scmp.eq.s32.totalorder %s20, 1
      %p128 = por %p126, %p127
      %p130 = scmp.ne.s32.totalorder %s115, %s129
      %p131 = scmp.eq.s32.totalorder %s20, 0
      %p132 = por %p130, %p131
      %s134 = sadd.s32 %s133, 1
      %p137 = scmp.eq.s32.totalorder %s14, 1
      %p138 = scmp.ne.s32.totalorder %s133, %s135
      %p139 = scmp.eq.s32.totalorder %s14, 0
      %p140 = por %p138, %p139
      %p141 = scmp.ne.s32.totalorder %s133, %s135
      %p142 = scmp.eq.s32.totalorder %s19, 1
      %p143 = por %p141, %p142
      %p144 = scmp.ne.s32.totalorder %s135, %s136
      %p145 = scmp.eq.s32.totalorder %s19, 0
      %p146 = por %p144, %p145
      %p147 = scmp.ne.s32.totalorder %s135, %s136
      %p148 = scmp.eq.s32.totalorder %s20, 1
      %p149 = por %p147, %p148
      %p151 = scmp.ne.s32.totalorder %s136, %s150
      %p152 = scmp.eq.s32.totalorder %s20, 0
      %p153 = por %p151, %p152
      %s154 = ssub.s32 %s21, %s33
      %p155 = scmp.eq.s32.totalorder %s154, 0
      %s157 = sadd.s32 %s156, 1
      %s158 = scalar_select %p155, %s156, %s157
      %p161 = pneg %p155
      %p162 = scmp.eq.s32.totalorder %s14, 1
      %p163 = por %p161, %p162
      %p164 = scmp.ne.s32.totalorder %s156, %s159
      %p165 = scmp.eq.s32.totalorder %s14, 0
      %p166 = por %p164, %p165
      %p167 = scmp.ne.s32.totalorder %s156, %s159
      %p168 = scmp.eq.s32.totalorder %s19, 1
      %p169 = por %p167, %p168
      %p170 = scmp.ne.s32.totalorder %s159, %s160
      %p171 = scmp.eq.s32.totalorder %s19, 0
      %p172 = por %p170, %p171
      %p173 = scmp.ne.s32.totalorder %s159, %s160
      %p174 = scmp.eq.s32.totalorder %s20, 1
      %p175 = por %p173, %p174
      %p177 = scmp.ne.s32.totalorder %s160, %s176
      %p178 = scmp.eq.s32.totalorder %s20, 0
      %p179 = por %p177, %p178
      %p180 = scmp.le.s32.totalorder 1, %s14
      %p181 = scmp.lt.s32.totalorder %s14, 3
      %p182 = pnand %p180, %p181
      %p183 = pneg %p182
      // Predicated region
      $region9: #{tpu_custom_call.1} parent=5 // pred_check
        _
      $region10: #{tpu_custom_call.1} parent=5 // pred_check_branch
        %185 = sbr.rel (%p182) target = $region12
      $region11: #{tpu_custom_call.1} parent=5 // pred_region
        %s186 = ssub.s32 %s14, 1
        // Predicated region
        $region13: #{tpu_custom_call.1} parent=11 // pred_check
          %p187 = pneg %p78
        $region14: #{tpu_custom_call.1} parent=11 // pred_check_branch
          %189 = sbr.rel (%p187) target = $region16
        $region15: #{tpu_custom_call.1} parent=11 // pred_region
          %p190 = scmp.lt.s32.totalorder %s24, 0
          %s191 = scalar_select %p190, %s24, 0
          %s192 = smul.addr %s191, 4
          %s193 = smul.addr %s192, 8
          %s194 = scalar_lea.vmem %s1, %s193
        $region16: #{tpu_custom_call.1} parent=11 // pred_fallthru
          _
        // Predicated region
        $region17: #{tpu_custom_call.1} parent=11 // pred_check
          %p195 = pneg %p104
        $region18: #{tpu_custom_call.1} parent=11 // pred_check_branch
          %197 = sbr.rel (%p195) target = $region20
        $region19: #{tpu_custom_call.1} parent=11 // pred_region
          %p198 = scmp.lt.s32.totalorder %s24, 0
          %s199 = scalar_select %p198, %s24, 0
          %s200 = scalar_lea.vmem %s2, %s199
        $region20: #{tpu_custom_call.1} parent=11 // pred_fallthru
          _
        // Predicated region
        $region21: #{tpu_custom_call.1} parent=11 // pred_check
          %p201 = pneg %p125
        $region22: #{tpu_custom_call.1} parent=11 // pred_check_branch
          %203 = sbr.rel (%p201) target = $region24
        $region23: #{tpu_custom_call.1} parent=11 // pred_region
          _
        $region24: #{tpu_custom_call.1} parent=11 // pred_fallthru
          _
        // Predicated region
        $region25: #{tpu_custom_call.1} parent=11 // pred_check
          %p204 = pneg %p146
        $region26: #{tpu_custom_call.1} parent=11 // pred_check_branch
          %206 = sbr.rel (%p204) target = $region28
        $region27: #{tpu_custom_call.1} parent=11 // pred_region
          _
        $region28: #{tpu_custom_call.1} parent=11 // pred_fallthru
          _
      $region12: #{tpu_custom_call.1} parent=5 // pred_fallthru
        _
      %p207 = scmp.lt.s32.totalorder %s14, 2
      // Predicated region
      $region29: #{tpu_custom_call.1} parent=5 // pred_check
        %p208 = pneg %p207
      $region30: #{tpu_custom_call.1} parent=5 // pred_check_branch
        %210 = sbr.rel (%p208) target = $region32
      $region31: #{tpu_custom_call.1} parent=5 // pred_region
        // Predicated region
        $region33: #{tpu_custom_call.1} parent=31 // pred_check
          %p211 = pneg %p46
        $region34: #{tpu_custom_call.1} parent=31 // pred_check_branch
          %213 = sbr.rel (%p211) target = $region36
        $region35: #{tpu_custom_call.1} parent=31 // pred_region
          %p214 = scmp.lt.s32.totalorder %s21, 1
          %s215 = scalar_select %p214, %s21, 1
          %s216 = smul.addr %s215, 8
          %s217 = smul.addr %s216, 8
          %s218 = scalar_lea.vmem %s0, %s217
        $region36: #{tpu_custom_call.1} parent=31 // pred_fallthru
          _
      $region32: #{tpu_custom_call.1} parent=5 // pred_fallthru
        _
      %p219 = scmp.le.s32.totalorder 1, %s14
      %p220 = scmp.lt.s32.totalorder %s14, 3
      %p221 = pnand %p219, %p220
      %p222 = pneg %p221
      // Predicated region
      $region37: #{tpu_custom_call.1} parent=5 // pred_check
        _
      $region38: #{tpu_custom_call.1} parent=5 // pred_check_branch
        %224 = sbr.rel (%p221) target = $region40
      $region39: #{tpu_custom_call.1} parent=5 // pred_region
        %s225 = ssub.s32 %s14, 1
        %p226 = scmp.lt.s32.totalorder %s23, 1
        %s227 = scalar_select %p226, %s23, 1
        %s228 = smul.addr %s227, 8
        %s229 = smul.addr %s228, 8
        %s230 = scalar_lea.vmem %s0, %s229
        %p231 = pneg %p52
        %p232 = pneg %p49
        %p233 = scmp.lt.s32.totalorder %s24, 0
        %s234 = scalar_select %p233, %s24, 0
        %s235 = smul.addr %s234, 4
        %s236 = smul.addr %s235, 8
        %s237 = scalar_lea.vmem %s1, %s236
        %p238 = pneg %p78
        %p239 = pneg %p75
        %p240 = scmp.lt.s32.totalorder %s24, 0
        %s241 = scalar_select %p240, %s24, 0
        %s242 = scalar_lea.vmem %s2, %s241
        %p243 = pneg %p104
        %p244 = pneg %p101
        %p245 = pneg %p125
        %p246 = pneg %p122
        %p247 = pneg %p146
        %p248 = pneg %p143
        %p249 = pneg %p172
        %p250 = pneg %p169
        %s251 = sand.u32 %s159, 1
        %s252 = scalar_lea.sflag [#allocation5], %s251
        %s253 = sand.u32 %s159, 1
        %s254 = smul.addr %s253, 64
        %s255 = scalar_lea.vmem [#allocation4], %s254
        %p256 = scmp.lt.s32.totalorder %s23, 1
        %s257 = scalar_select %p256, %s23, 1
        %s258 = smul.addr %s257, 8
        %s259 = smul.addr %s258, 8
        %s260 = scalar_lea.vmem %s0, %s259
        %p261 = scmp.lt.s32.totalorder %s24, 0
        %s262 = scalar_select %p261, %s24, 0
        %s263 = smul.addr %s262, 4
        %s264 = smul.addr %s263, 8
        %s265 = scalar_lea.vmem %s1, %s264
        %p266 = scmp.lt.s32.totalorder %s24, 0
        %s267 = scalar_select %p266, %s24, 0
        %s268 = scalar_lea.vmem %s2, %s267
        %v269 = vld [vmem:[%s260] sm:$0xff]
        %v270 = vld [vmem:[%s260 + $0x8] sm:$0xff]
        %v271 = vld [vmem:[%s260 + $0x10] sm:$0xff]
        %v272 = vld [vmem:[%s260 + $0x18] sm:$0xff]
        %v273 = vld [vmem:[%s260 + $0x20] sm:$0xff]
        %v274 = vld [vmem:[%s260 + $0x28] sm:$0xff]
        %v275 = vld [vmem:[%s260 + $0x30] sm:$0xff]
        %v276 = vld [vmem:[%s260 + $0x38] sm:$0xff]
        %v277 = vld [vmem:[%s265] sm:$0xff]
        %v278 = vld [vmem:[%s265 + $0x8] sm:$0xff]
        %v279 = vld [vmem:[%s265 + $0x10] sm:$0xff]
        %v280 = vld [vmem:[%s265 + $0x18] sm:$0xff]
        %v281 = vld [vmem:[%s268] sm:$0x1]
        %v283 = vlaneseq
        %v284 = vshrl.u32 %v283, 7
        %v285 = vsub.s32 0, %v284
        %v286 = vrot.slane %v281, %v285
        %vm288 = vcmask 261120
        %v290 = vsel %vm288, %v269, 0
        %v293 = vsel %vm288, %v270, 0
        %v296 = vsel %vm288, %v271, 0
        %v299 = vsel %vm288, %v272, 0
        %v302 = vsel %vm288, %v273, 0
        %v305 = vsel %vm288, %v274, 0
        %v308 = vsel %vm288, %v275, 0
        %v311 = vsel %vm288, %v276, 0
        %313 = vmatprep.subr.mxu0 0.0
        %314 = vmatpush1.msra.mxu0 %v277
        %315 = vmatprep.subr.mxu0 0.0
        %316 = vmatpush1.msra.mxu0 %v278
        %317 = vmatprep.subr.mxu0 0.0
        %318 = vmatpush1.msra.mxu0 %v279
        %319 = vmatprep.subr.mxu0 0.0
        %320 = vmatpush1.msra.mxu0 %v280
        %321 = vmatprep.subr.mxu0 0.0
        %322 = vmatpush1.msra.mxu0 0.0
        %323 = vmatprep.subr.mxu0 0.0
        %324 = vmatpush1.msra.mxu0 0.0
        %325 = vmatprep.subr.mxu0 0.0
        %326 = vmatpush1.msra.mxu0 0.0
        %327 = vmatprep.subr.mxu0 0.0
        %328 = vmatpush1.msra.mxu0 0.0
        %329 = vmatprep.subr.mxu0 0.0
        %330 = vmatpush1.msra.mxu0 0.0
        %331 = vmatprep.subr.mxu0 0.0
        %332 = vmatpush1.msra.mxu0 0.0
        %333 = vmatprep.subr.mxu0 0.0
        %334 = vmatpush1.msra.mxu0 0.0
        %335 = vmatprep.subr.mxu0 0.0
        %336 = vmatpush1.msra.mxu0 0.0
        %337 = vmatprep.subr.mxu0 0.0
        %338 = vmatpush1.msra.mxu0 0.0
        %339 = vmatprep.subr.mxu0 0.0
        %340 = vmatpush1.msra.mxu0 0.0
        %341 = vmatprep.subr.mxu0 0.0
        %342 = vmatpush1.msra.mxu0 0.0
        %343 = vmatprep.subr.mxu0 0.0
        %344 = vmatpush1.msra.mxu0 0.0
        %345 = vmatprep.subr.mxu0 0.0
        %346 = vmatpush1.msra.mxu0 0.0
        %347 = vmatprep.subr.mxu0 0.0
        %348 = vmatpush1.msra.mxu0 0.0
        %349 = vmatprep.subr.mxu0 0.0
        %350 = vmatpush1.msra.mxu0 0.0
        %351 = vmatprep.subr.mxu0 0.0
        %352 = vmatpush1.msra.mxu0 0.0
        %353 = vmatprep.subr.mxu0 0.0
        %354 = vmatpush1.msra.mxu0 0.0
        %355 = vmatprep.subr.mxu0 0.0
        %356 = vmatpush1.msra.mxu0 0.0
        %357 = vmatprep.subr.mxu0 0.0
        %358 = vmatpush1.msra.mxu0 0.0
        %359 = vmatprep.subr.mxu0 0.0
        %360 = vmatpush1.msra.mxu0 0.0
        %361 = vmatprep.subr.mxu0 0.0
        %362 = vmatpush1.msra.mxu0 0.0
        %363 = vmatprep.subr.mxu0 0.0
        %364 = vmatpush1.msra.mxu0 0.0
        %365 = vmatprep.subr.mxu0 0.0
        %366 = vmatpush1.msra.mxu0 0.0
        %367 = vmatprep.subr.mxu0 0.0
        %368 = vmatpush1.msra.mxu0 0.0
        %369 = vmatprep.subr.mxu0 0.0
        %370 = vmatpush1.msra.mxu0 0.0
        %371 = vmatprep.subr.mxu0 0.0
        %372 = vmatpush1.msra.mxu0 0.0
        %373 = vmatprep.subr.mxu0 0.0
        %374 = vmatpush1.msra.mxu0 0.0
        %375 = vmatprep.subr.mxu0 0.0
        %376 = vmatpush1.msra.mxu0 0.0
        %377 = vmatprep.mubr.f32.mxu0 0.0
        %378 = vmatmul.mubr.f32.gmra.mrb[0].mxu0 %v290
        %v379 = vpop.f32.mrb[0].mxu0
        %v380 = vadd.f32 %v286, %v379
        %v381 = vpop.f32.mrb[0].mxu0
        %382 = vmatprep.mubr.f32.mxu0 0.0
        %383 = vmatmul.mubr.f32.gmra.mrb[0].mxu0 %v293
        %v384 = vpop.f32.mrb[0].mxu0
        %v385 = vadd.f32 %v286, %v384
        %v386 = vpop.f32.mrb[0].mxu0
        %387 = vmatprep.mubr.f32.mxu0 0.0
        %388 = vmatmul.mubr.f32.gmra.mrb[0].mxu0 %v296
        %v389 = vpop.f32.mrb[0].mxu0
        %v390 = vadd.f32 %v286, %v389
        %v391 = vpop.f32.mrb[0].mxu0
        %392 = vmatprep.mubr.f32.mxu0 0.0
        %393 = vmatmul.mubr.f32.gmra.mrb[0].mxu0 %v299
        %v394 = vpop.f32.mrb[0].mxu0
        %v395 = vadd.f32 %v286, %v394
        %v396 = vpop.f32.mrb[0].mxu0
        %397 = vmatprep.mubr.f32.mxu0 0.0
        %398 = vmatmul.mubr.f32.gmra.mrb[0].mxu0 %v302
        %v399 = vpop.f32.mrb[0].mxu0
        %v400 = vadd.f32 %v286, %v399
        %v401 = vpop.f32.mrb[0].mxu0
        %402 = vmatprep.mubr.f32.mxu0 0.0
        %403 = vmatmul.mubr.f32.gmra.mrb[0].mxu0 %v305
        %v404 = vpop.f32.mrb[0].mxu0
        %v405 = vadd.f32 %v286, %v404
        %v406 = vpop.f32.mrb[0].mxu0
        %407 = vmatprep.mubr.f32.mxu0 0.0
        %408 = vmatmul.mubr.f32.gmra.mrb[0].mxu0 %v308
        %v409 = vpop.f32.mrb[0].mxu0
        %v410 = vadd.f32 %v286, %v409
        %v411 = vpop.f32.mrb[0].mxu0
        %412 = vmatprep.mubr.f32.mxu0 0.0
        %413 = vmatmul.mubr.f32.gmra.mrb[0].mxu0 %v311
        %v414 = vpop.f32.mrb[0].mxu0
        %v415 = vadd.f32 %v286, %v414
        %v416 = vpop.f32.mrb[0].mxu0
        %417 = vdwg.mxu0
        %vm418 = vcmask 785408
        %419 = vst.msk [vmem:[#allocation2] sm:$0xff] %vm418, %v380
        %420 = vst.msk [vmem:[#allocation2 + $0x8] sm:$0xff] %vm418, %v385
        %421 = vst.msk [vmem:[#allocation2 + $0x10] sm:$0xff] %vm418, %v390
        %422 = vst.msk [vmem:[#allocation2 + $0x18] sm:$0xff] %vm418, %v395
        %423 = vst.msk [vmem:[#allocation2 + $0x20] sm:$0xff] %vm418, %v400
        %424 = vst.msk [vmem:[#allocation2 + $0x28] sm:$0xff] %vm418, %v405
        %425 = vst.msk [vmem:[#allocation2 + $0x30] sm:$0xff] %vm418, %v410
        %426 = vst.msk [vmem:[#allocation2 + $0x38] sm:$0xff] %vm418, %v415
        %v427 = vld [vmem:[#allocation2] sm:$0xff]
        %v428 = vld [vmem:[#allocation2 + $0x8] sm:$0xff]
        %v429 = vld [vmem:[#allocation2 + $0x10] sm:$0xff]
        %v430 = vld [vmem:[#allocation2 + $0x18] sm:$0xff]
        %v431 = vld [vmem:[#allocation2 + $0x20] sm:$0xff]
        %v432 = vld [vmem:[#allocation2 + $0x28] sm:$0xff]
        %v433 = vld [vmem:[#allocation2 + $0x30] sm:$0xff]
        %v434 = vld [vmem:[#allocation2 + $0x38] sm:$0xff]
        %443 = vrot.lane.b32.xlu0 %v427, 96
        %v444 = vpop.permute.xlu0 %443
        %445 = vrot.lane.b32.xlu0 %v428, 96
        %v446 = vpop.permute.xlu0 %445
        %447 = vrot.lane.b32.xlu0 %v429, 96
        %v448 = vpop.permute.xlu0 %447
        %449 = vrot.lane.b32.xlu0 %v430, 96
        %v450 = vpop.permute.xlu0 %449
        %451 = vrot.lane.b32.xlu0 %v431, 96
        %v452 = vpop.permute.xlu0 %451
        %453 = vrot.lane.b32.xlu0 %v432, 96
        %v454 = vpop.permute.xlu0 %453
        %455 = vrot.lane.b32.xlu0 %v433, 96
        %v456 = vpop.permute.xlu0 %455
        %457 = vrot.lane.b32.xlu0 %v434, 96
        %v458 = vpop.permute.xlu0 %457
        %vm459 = vcmask 31744
        %v460 = vsel %vm459, %v427, 0
        %v462 = vsel %vm459, %v428, 0
        %v464 = vsel %vm459, %v429, 0
        %v466 = vsel %vm459, %v430, 0
        %v468 = vsel %vm459, %v431, 0
        %v470 = vsel %vm459, %v432, 0
        %v472 = vsel %vm459, %v433, 0
        %v474 = vsel %vm459, %v434, 0
        %v476 = vsel %vm459, %v444, 0
        %v478 = vsel %vm459, %v446, 0
        %v480 = vsel %vm459, %v448, 0
        %v482 = vsel %vm459, %v450, 0
        %v484 = vsel %vm459, %v452, 0
        %v486 = vsel %vm459, %v454, 0
        %v488 = vsel %vm459, %v456, 0
        %v490 = vsel %vm459, %v458, 0
        %492 = vmatprep.subr.mxu0 0.0
        %493 = vmatpush1.xpose.msra.mxu0 %v476
        %494 = vmatprep.subr.mxu0 0.0
        %495 = vmatpush1.xpose.msra.mxu0 %v478
        %496 = vmatprep.subr.mxu0 0.0
        %497 = vmatpush1.xpose.msra.mxu0 %v480
        %498 = vmatprep.subr.mxu0 0.0
        %499 = vmatpush1.xpose.msra.mxu0 %v482
        %500 = vmatprep.subr.mxu0 0.0
        %501 = vmatpush1.xpose.msra.mxu0 %v484
        %502 = vmatprep.subr.mxu0 0.0
        %503 = vmatpush1.xpose.msra.mxu0 %v486
        %504 = vmatprep.subr.mxu0 0.0
        %505 = vmatpush1.xpose.msra.mxu0 %v488
        %506 = vmatprep.subr.mxu0 0.0
        %507 = vmatpush1.xpose.msra.mxu0 %v490
        %508 = vmatprep.subr.mxu0 0.0
        %509 = vmatpush1.xpose.msra.mxu0 0.0
        %510 = vmatprep.subr.mxu0 0.0
        %511 = vmatpush1.xpose.msra.mxu0 0.0
        %512 = vmatprep.subr.mxu0 0.0
        %513 = vmatpush1.xpose.msra.mxu0 0.0
        %514 = vmatprep.subr.mxu0 0.0
        %515 = vmatpush1.xpose.msra.mxu0 0.0
        %516 = vmatprep.subr.mxu0 0.0
        %517 = vmatpush1.xpose.msra.mxu0 0.0
        %518 = vmatprep.subr.mxu0 0.0
        %519 = vmatpush1.xpose.msra.mxu0 0.0
        %520 = vmatprep.subr.mxu0 0.0
        %521 = vmatpush1.xpose.msra.mxu0 0.0
        %522 = vmatprep.subr.mxu0 0.0
        %523 = vmatpush1.xpose.msra.mxu0 0.0
        %524 = vmatprep.subr.mxu0 0.0
        %525 = vmatpush1.xpose.msra.mxu0 0.0
        %526 = vmatprep.subr.mxu0 0.0
        %527 = vmatpush1.xpose.msra.mxu0 0.0
        %528 = vmatprep.subr.mxu0 0.0
        %529 = vmatpush1.xpose.msra.mxu0 0.0
        %530 = vmatprep.subr.mxu0 0.0
        %531 = vmatpush1.xpose.msra.mxu0 0.0
        %532 = vmatprep.subr.mxu0 0.0
        %533 = vmatpush1.xpose.msra.mxu0 0.0
        %534 = vmatprep.subr.mxu0 0.0
        %535 = vmatpush1.xpose.msra.mxu0 0.0
        %536 = vmatprep.subr.mxu0 0.0
        %537 = vmatpush1.xpose.msra.mxu0 0.0
        %538 = vmatprep.subr.mxu0 0.0
        %539 = vmatpush1.xpose.msra.mxu0 0.0
        %540 = vmatprep.subr.mxu0 0.0
        %541 = vmatpush1.xpose.msra.mxu0 0.0
        %542 = vmatprep.subr.mxu0 0.0
        %543 = vmatpush1.xpose.msra.mxu0 0.0
        %544 = vmatprep.subr.mxu0 0.0
        %545 = vmatpush1.xpose.msra.mxu0 0.0
        %546 = vmatprep.subr.mxu0 0.0
        %547 = vmatpush1.xpose.msra.mxu0 0.0
        %548 = vmatprep.subr.mxu0 0.0
        %549 = vmatpush1.xpose.msra.mxu0 0.0
        %550 = vmatprep.subr.mxu0 0.0
        %551 = vmatpush1.xpose.msra.mxu0 0.0
        %552 = vmatprep.subr.mxu0 0.0
        %553 = vmatpush1.xpose.msra.mxu0 0.0
        %554 = vmatprep.subr.mxu0 0.0
        %555 = vmatpush1.xpose.msra.mxu0 0.0
        %556 = vmatprep.mubr.f32.mxu0 0.0
        %557 = vmatmul.mubr.f32.gmra.mrb[0].mxu0 %v460
        %v558 = vpop.f32.mrb[0].mxu0
        %v559 = vadd.f32 0.0, %v558
        %v560 = vpop.f32.mrb[0].mxu0
        %561 = vmatprep.mubr.f32.mxu0 0.0
        %562 = vmatmul.mubr.f32.gmra.mrb[0].mxu0 %v462
        %v563 = vpop.f32.mrb[0].mxu0
        %v564 = vadd.f32 0.0, %v563
        %v565 = vpop.f32.mrb[0].mxu0
        %566 = vmatprep.mubr.f32.mxu0 0.0
        %567 = vmatmul.mubr.f32.gmra.mrb[0].mxu0 %v464
        %v568 = vpop.f32.mrb[0].mxu0
        %v569 = vadd.f32 0.0, %v568
        %v570 = vpop.f32.mrb[0].mxu0
        %571 = vmatprep.mubr.f32.mxu0 0.0
        %572 = vmatmul.mubr.f32.gmra.mrb[0].mxu0 %v466
        %v573 = vpop.f32.mrb[0].mxu0
        %v574 = vadd.f32 0.0, %v573
        %v575 = vpop.f32.mrb[0].mxu0
        %576 = vmatprep.mubr.f32.mxu0 0.0
        %577 = vmatmul.mubr.f32.gmra.mrb[0].mxu0 %v468
        %v578 = vpop.f32.mrb[0].mxu0
        %v579 = vadd.f32 0.0, %v578
        %v580 = vpop.f32.mrb[0].mxu0
        %581 = vmatprep.mubr.f32.mxu0 0.0
        %582 = vmatmul.mubr.f32.gmra.mrb[0].mxu0 %v470
        %v583 = vpop.f32.mrb[0].mxu0
        %v584 = vadd.f32 0.0, %v583
        %v585 = vpop.f32.mrb[0].mxu0
        %586 = vmatprep.mubr.f32.mxu0 0.0
        %587 = vmatmul.mubr.f32.gmra.mrb[0].mxu0 %v472
        %v588 = vpop.f32.mrb[0].mxu0
        %v589 = vadd.f32 0.0, %v588
        %v590 = vpop.f32.mrb[0].mxu0
        %591 = vmatprep.mubr.f32.mxu0 0.0
        %592 = vmatmul.mubr.f32.gmra.mrb[0].mxu0 %v474
        %v593 = vpop.f32.mrb[0].mxu0
        %v594 = vadd.f32 0.0, %v593
        %v595 = vpop.f32.mrb[0].mxu0
        %596 = vdwg.mxu0
        %vm597 = vcmask 523264
        %v598 = vsel %vm597, %v559, -inf
        %599 = vmax.xlane.f32.xlu0 %v598
        %v600 = vpop.xlane.xlu0 %599
        %v601 = vsel %vm597, %v564, -inf
        %602 = vmax.xlane.f32.xlu0 %v601
        %v603 = vpop.xlane.xlu0 %602
        %v604 = vsel %vm597, %v569, -inf
        %605 = vmax.xlane.f32.xlu0 %v604
        %v606 = vpop.xlane.xlu0 %605
        %v607 = vsel %vm597, %v574, -inf
        %608 = vmax.xlane.f32.xlu0 %v607
        %v609 = vpop.xlane.xlu0 %608
        %v610 = vsel %vm597, %v579, -inf
        %611 = vmax.xlane.f32.xlu0 %v610
        %v612 = vpop.xlane.xlu0 %611
        %v613 = vsel %vm597, %v584, -inf
        %614 = vmax.xlane.f32.xlu0 %v613
        %v615 = vpop.xlane.xlu0 %614
        %v616 = vsel %vm597, %v589, -inf
        %617 = vmax.xlane.f32.xlu0 %v616
        %v618 = vpop.xlane.xlu0 %617
        %v619 = vsel %vm597, %v594, -inf
        %620 = vmax.xlane.f32.xlu0 %v619
        %v621 = vpop.xlane.xlu0 %620
        %v622 = vsub.f32 %v559, %v600
        %v623 = vsub.f32 %v564, %v603
        %v624 = vsub.f32 %v569, %v606
        %v625 = vsub.f32 %v574, %v609
        %v626 = vsub.f32 %v579, %v612
        %v627 = vsub.f32 %v584, %v615
        %v628 = vsub.f32 %v589, %v618
        %v629 = vsub.f32 %v594, %v621
        %v630 = vmul.f32 %v622, 1.442695
        %v631 = vpow.pop %v630
        %v632 = vmul.f32 %v623, 1.442695
        %v633 = vpow.pop %v632
        %v634 = vmul.f32 %v624, 1.442695
        %v635 = vpow.pop %v634
        %v636 = vmul.f32 %v625, 1.442695
        %v637 = vpow.pop %v636
        %v638 = vmul.f32 %v626, 1.442695
        %v639 = vpow.pop %v638
        %v640 = vmul.f32 %v627, 1.442695
        %v641 = vpow.pop %v640
        %v642 = vmul.f32 %v628, 1.442695
        %v643 = vpow.pop %v642
        %v644 = vmul.f32 %v629, 1.442695
        %v645 = vpow.pop %v644
        %v646 = vsel %vm597, %v631, 0.0
        %647 = vadd.xlane.f32.xlu0 %v646
        %v648 = vpop.xlane.xlu0 %647
        %v649 = vsel %vm597, %v633, 0.0
        %650 = vadd.xlane.f32.xlu0 %v649
        %v651 = vpop.xlane.xlu0 %650
        %v652 = vsel %vm597, %v635, 0.0
        %653 = vadd.xlane.f32.xlu0 %v652
        %v654 = vpop.xlane.xlu0 %653
        %v655 = vsel %vm597, %v637, 0.0
        %656 = vadd.xlane.f32.xlu0 %v655
        %v657 = vpop.xlane.xlu0 %656
        %v658 = vsel %vm597, %v639, 0.0
        %659 = vadd.xlane.f32.xlu0 %v658
        %v660 = vpop.xlane.xlu0 %659
        %v661 = vsel %vm597, %v641, 0.0
        %662 = vadd.xlane.f32.xlu0 %v661
        %v663 = vpop.xlane.xlu0 %662
        %v664 = vsel %vm597, %v643, 0.0
        %665 = vadd.xlane.f32.xlu0 %v664
        %v666 = vpop.xlane.xlu0 %665
        %v667 = vsel %vm597, %v645, 0.0
        %668 = vadd.xlane.f32.xlu0 %v667
        %v669 = vpop.xlane.xlu0 %668
        %670 = vrot.lane.b32.xlu0 %v427, 64
        %v671 = vpop.permute.xlu0 %670
        %672 = vrot.lane.b32.xlu0 %v428, 64
        %v673 = vpop.permute.xlu0 %672
        %674 = vrot.lane.b32.xlu0 %v429, 64
        %v675 = vpop.permute.xlu0 %674
        %676 = vrot.lane.b32.xlu0 %v430, 64
        %v677 = vpop.permute.xlu0 %676
        %678 = vrot.lane.b32.xlu0 %v431, 64
        %v679 = vpop.permute.xlu0 %678
        %680 = vrot.lane.b32.xlu0 %v432, 64
        %v681 = vpop.permute.xlu0 %680
        %682 = vrot.lane.b32.xlu0 %v433, 64
        %v683 = vpop.permute.xlu0 %682
        %684 = vrot.lane.b32.xlu0 %v434, 64
        %v685 = vpop.permute.xlu0 %684
        %v695 = vsel %vm597, %v631, 0
        %v698 = vsel %vm597, %v633, 0
        %v701 = vsel %vm597, %v635, 0
        %v704 = vsel %vm597, %v637, 0
        %v707 = vsel %vm597, %v639, 0
        %v710 = vsel %vm597, %v641, 0
        %v713 = vsel %vm597, %v643, 0
        %v716 = vsel %vm597, %v645, 0
        %718 = vmatprep.subr.mxu0 0.0
        %719 = vmatpush1.msra.mxu0 %v671
        %720 = vmatprep.subr.mxu0 0.0
        %721 = vmatpush1.msra.mxu0 %v673
        %722 = vmatprep.subr.mxu0 0.0
        %723 = vmatpush1.msra.mxu0 %v675
        %724 = vmatprep.subr.mxu0 0.0
        %725 = vmatpush1.msra.mxu0 %v677
        %726 = vmatprep.subr.mxu0 0.0
        %727 = vmatpush1.msra.mxu0 %v679
        %728 = vmatprep.subr.mxu0 0.0
        %729 = vmatpush1.msra.mxu0 %v681
        %730 = vmatprep.subr.mxu0 0.0
        %731 = vmatpush1.msra.mxu0 %v683
        %732 = vmatprep.subr.mxu0 0.0
        %733 = vmatpush1.msra.mxu0 %v685
        %734 = vmatprep.subr.mxu0 0.0
        %735 = vmatpush1.msra.mxu0 0.0
        %736 = vmatprep.subr.mxu0 0.0
        %737 = vmatpush1.msra.mxu0 0.0
        %738 = vmatprep.subr.mxu0 0.0
        %739 = vmatpush1.msra.mxu0 0.0
        %740 = vmatprep.subr.mxu0 0.0
        %741 = vmatpush1.msra.mxu0 0.0
        %742 = vmatprep.subr.mxu0 0.0
        %743 = vmatpush1.msra.mxu0 0.0
        %744 = vmatprep.subr.mxu0 0.0
        %745 = vmatpush1.msra.mxu0 0.0
        %746 = vmatprep.subr.mxu0 0.0
        %747 = vmatpush1.msra.mxu0 0.0
        %748 = vmatprep.subr.mxu0 0.0
        %749 = vmatpush1.msra.mxu0 0.0
        %750 = vmatprep.subr.mxu0 0.0
        %751 = vmatpush1.msra.mxu0 0.0
        %752 = vmatprep.subr.mxu0 0.0
        %753 = vmatpush1.msra.mxu0 0.0
        %754 = vmatprep.subr.mxu0 0.0
        %755 = vmatpush1.msra.mxu0 0.0
        %756 = vmatprep.subr.mxu0 0.0
        %757 = vmatpush1.msra.mxu0 0.0
        %758 = vmatprep.subr.mxu0 0.0
        %759 = vmatpush1.msra.mxu0 0.0
        %760 = vmatprep.subr.mxu0 0.0
        %761 = vmatpush1.msra.mxu0 0.0
        %762 = vmatprep.subr.mxu0 0.0
        %763 = vmatpush1.msra.mxu0 0.0
        %764 = vmatprep.subr.mxu0 0.0
        %765 = vmatpush1.msra.mxu0 0.0
        %766 = vmatprep.subr.mxu0 0.0
        %767 = vmatpush1.msra.mxu0 0.0
        %768 = vmatprep.subr.mxu0 0.0
        %769 = vmatpush1.msra.mxu0 0.0
        %770 = vmatprep.subr.mxu0 0.0
        %771 = vmatpush1.msra.mxu0 0.0
        %772 = vmatprep.subr.mxu0 0.0
        %773 = vmatpush1.msra.mxu0 0.0
        %774 = vmatprep.subr.mxu0 0.0
        %775 = vmatpush1.msra.mxu0 0.0
        %776 = vmatprep.subr.mxu0 0.0
        %777 = vmatpush1.msra.mxu0 0.0
        %778 = vmatprep.subr.mxu0 0.0
        %779 = vmatpush1.msra.mxu0 0.0
        %780 = vmatprep.subr.mxu0 0.0
        %781 = vmatpush1.msra.mxu0 0.0
        %782 = vmatprep.mubr.f32.mxu0 0.0
        %783 = vmatmul.mubr.f32.gmra.mrb[0].mxu0 %v695
        %v784 = vpop.f32.mrb[0].mxu0
        %v785 = vadd.f32 0.0, %v784
        %v786 = vpop.f32.mrb[0].mxu0
        %787 = vmatprep.mubr.f32.mxu0 0.0
        %788 = vmatmul.mubr.f32.gmra.mrb[0].mxu0 %v698
        %v789 = vpop.f32.mrb[0].mxu0
        %v790 = vadd.f32 0.0, %v789
        %v791 = vpop.f32.mrb[0].mxu0
        %792 = vmatprep.mubr.f32.mxu0 0.0
        %793 = vmatmul.mubr.f32.gmra.mrb[0].mxu0 %v701
        %v794 = vpop.f32.mrb[0].mxu0
        %v795 = vadd.f32 0.0, %v794
        %v796 = vpop.f32.mrb[0].mxu0
        %797 = vmatprep.mubr.f32.mxu0 0.0
        %798 = vmatmul.mubr.f32.gmra.mrb[0].mxu0 %v704
        %v799 = vpop.f32.mrb[0].mxu0
        %v800 = vadd.f32 0.0, %v799
        %v801 = vpop.f32.mrb[0].mxu0
        %802 = vmatprep.mubr.f32.mxu0 0.0
        %803 = vmatmul.mubr.f32.gmra.mrb[0].mxu0 %v707
        %v804 = vpop.f32.mrb[0].mxu0
        %v805 = vadd.f32 0.0, %v804
        %v806 = vpop.f32.mrb[0].mxu0
        %807 = vmatprep.mubr.f32.mxu0 0.0
        %808 = vmatmul.mubr.f32.gmra.mrb[0].mxu0 %v710
        %v809 = vpop.f32.mrb[0].mxu0
        %v810 = vadd.f32 0.0, %v809
        %v811 = vpop.f32.mrb[0].mxu0
        %812 = vmatprep.mubr.f32.mxu0 0.0
        %813 = vmatmul.mubr.f32.gmra.mrb[0].mxu0 %v713
        %v814 = vpop.f32.mrb[0].mxu0
        %v815 = vadd.f32 0.0, %v814
        %v816 = vpop.f32.mrb[0].mxu0
        %817 = vmatprep.mubr.f32.mxu0 0.0
        %818 = vmatmul.mubr.f32.gmra.mrb[0].mxu0 %v716
        %v819 = vpop.f32.mrb[0].mxu0
        %v820 = vadd.f32 0.0, %v819
        %v821 = vpop.f32.mrb[0].mxu0
        %822 = vdwg.mxu0
        %v823 = vrcp.pop %v648
        %v824 = vrcp.pop %v651
        %v825 = vrcp.pop %v654
        %v826 = vrcp.pop %v657
        %v827 = vrcp.pop %v660
        %v828 = vrcp.pop %v663
        %v829 = vrcp.pop %v666
        %v830 = vrcp.pop %v669
        %v831 = vmul.f32 %v785, %v823
        %v832 = vmul.f32 %v790, %v824
        %v833 = vmul.f32 %v795, %v825
        %v834 = vmul.f32 %v800, %v826
        %v835 = vmul.f32 %v805, %v827
        %v836 = vmul.f32 %v810, %v828
        %v837 = vmul.f32 %v815, %v829
        %v838 = vmul.f32 %v820, %v830
        %839 = vst.msk [vmem:[#allocation3] sm:$0xff] %vm459, %v831
        %840 = vst.msk [vmem:[#allocation3 + $0x8] sm:$0xff] %vm459, %v832
        %841 = vst.msk [vmem:[#allocation3 + $0x10] sm:$0xff] %vm459, %v833
        %842 = vst.msk [vmem:[#allocation3 + $0x18] sm:$0xff] %vm459, %v834
        %843 = vst.msk [vmem:[#allocation3 + $0x20] sm:$0xff] %vm459, %v835
        %844 = vst.msk [vmem:[#allocation3 + $0x28] sm:$0xff] %vm459, %v836
        %845 = vst.msk [vmem:[#allocation3 + $0x30] sm:$0xff] %vm459, %v837
        %846 = vst.msk [vmem:[#allocation3 + $0x38] sm:$0xff] %vm459, %v838
        %v847 = vld [vmem:[#allocation2] sm:$0xff]
        %v848 = vld [vmem:[#allocation2 + $0x8] sm:$0xff]
        %v849 = vld [vmem:[#allocation2 + $0x10] sm:$0xff]
        %v850 = vld [vmem:[#allocation2 + $0x18] sm:$0xff]
        %v851 = vld [vmem:[#allocation2 + $0x20] sm:$0xff]
        %v852 = vld [vmem:[#allocation2 + $0x28] sm:$0xff]
        %v853 = vld [vmem:[#allocation2 + $0x30] sm:$0xff]
        %v854 = vld [vmem:[#allocation2 + $0x38] sm:$0xff]
        %863 = vrot.lane.b32.xlu0 %v847, 124
        %v864 = vpop.permute.xlu0 %863
        %865 = vrot.lane.b32.xlu0 %v848, 124
        %v866 = vpop.permute.xlu0 %865
        %867 = vrot.lane.b32.xlu0 %v849, 124
        %v868 = vpop.permute.xlu0 %867
        %869 = vrot.lane.b32.xlu0 %v850, 124
        %v870 = vpop.permute.xlu0 %869
        %871 = vrot.lane.b32.xlu0 %v851, 124
        %v872 = vpop.permute.xlu0 %871
        %873 = vrot.lane.b32.xlu0 %v852, 124
        %v874 = vpop.permute.xlu0 %873
        %875 = vrot.lane.b32.xlu0 %v853, 124
        %v876 = vpop.permute.xlu0 %875
        %877 = vrot.lane.b32.xlu0 %v854, 124
        %v878 = vpop.permute.xlu0 %877
        %879 = vrot.lane.b32.xlu0 %v847, 92
        %v880 = vpop.permute.xlu0 %879
        %881 = vrot.lane.b32.xlu0 %v848, 92
        %v882 = vpop.permute.xlu0 %881
        %883 = vrot.lane.b32.xlu0 %v849, 92
        %v884 = vpop.permute.xlu0 %883
        %885 = vrot.lane.b32.xlu0 %v850, 92
        %v886 = vpop.permute.xlu0 %885
        %887 = vrot.lane.b32.xlu0 %v851, 92
        %v888 = vpop.permute.xlu0 %887
        %889 = vrot.lane.b32.xlu0 %v852, 92
        %v890 = vpop.permute.xlu0 %889
        %891 = vrot.lane.b32.xlu0 %v853, 92
        %v892 = vpop.permute.xlu0 %891
        %893 = vrot.lane.b32.xlu0 %v854, 92
        %v894 = vpop.permute.xlu0 %893
        %v895 = vsel %vm459, %v864, 0
        %v897 = vsel %vm459, %v866, 0
        %v899 = vsel %vm459, %v868, 0
        %v901 = vsel %vm459, %v870, 0
        %v903 = vsel %vm459, %v872, 0
        %v905 = vsel %vm459, %v874, 0
        %v907 = vsel %vm459, %v876, 0
        %v909 = vsel %vm459, %v878, 0
        %v911 = vsel %vm459, %v880, 0
        %v913 = vsel %vm459, %v882, 0
        %v915 = vsel %vm459, %v884, 0
        %v917 = vsel %vm459, %v886, 0
        %v919 = vsel %vm459, %v888, 0
        %v921 = vsel %vm459, %v890, 0
        %v923 = vsel %vm459, %v892, 0
        %v925 = vsel %vm459, %v894, 0
        %927 = vmatprep.subr.mxu0 0.0
        %928 = vmatpush1.xpose.msra.mxu0 %v911
        %929 = vmatprep.subr.mxu0 0.0
        %930 = vmatpush1.xpose.msra.mxu0 %v913
        %931 = vmatprep.subr.mxu0 0.0
        %932 = vmatpush1.xpose.msra.mxu0 %v915
        %933 = vmatprep.subr.mxu0 0.0
        %934 = vmatpush1.xpose.msra.mxu0 %v917
        %935 = vmatprep.subr.mxu0 0.0
        %936 = vmatpush1.xpose.msra.mxu0 %v919
        %937 = vmatprep.subr.mxu0 0.0
        %938 = vmatpush1.xpose.msra.mxu0 %v921
        %939 = vmatprep.subr.mxu0 0.0
        %940 = vmatpush1.xpose.msra.mxu0 %v923
        %941 = vmatprep.subr.mxu0 0.0
        %942 = vmatpush1.xpose.msra.mxu0 %v925
        %943 = vmatprep.subr.mxu0 0.0
        %944 = vmatpush1.xpose.msra.mxu0 0.0
        %945 = vmatprep.subr.mxu0 0.0
        %946 = vmatpush1.xpose.msra.mxu0 0.0
        %947 = vmatprep.subr.mxu0 0.0
        %948 = vmatpush1.xpose.msra.mxu0 0.0
        %949 = vmatprep.subr.mxu0 0.0
        %950 = vmatpush1.xpose.msra.mxu0 0.0
        %951 = vmatprep.subr.mxu0 0.0
        %952 = vmatpush1.xpose.msra.mxu0 0.0
        %953 = vmatprep.subr.mxu0 0.0
        %954 = vmatpush1.xpose.msra.mxu0 0.0
        %955 = vmatprep.subr.mxu0 0.0
        %956 = vmatpush1.xpose.msra.mxu0 0.0
        %957 = vmatprep.subr.mxu0 0.0
        %958 = vmatpush1.xpose.msra.mxu0 0.0
        %959 = vmatprep.subr.mxu0 0.0
        %960 = vmatpush1.xpose.msra.mxu0 0.0
        %961 = vmatprep.subr.mxu0 0.0
        %962 = vmatpush1.xpose.msra.mxu0 0.0
        %963 = vmatprep.subr.mxu0 0.0
        %964 = vmatpush1.xpose.msra.mxu0 0.0
        %965 = vmatprep.subr.mxu0 0.0
        %966 = vmatpush1.xpose.msra.mxu0 0.0
        %967 = vmatprep.subr.mxu0 0.0
        %968 = vmatpush1.xpose.msra.mxu0 0.0
        %969 = vmatprep.subr.mxu0 0.0
        %970 = vmatpush1.xpose.msra.mxu0 0.0
        %971 = vmatprep.subr.mxu0 0.0
        %972 = vmatpush1.xpose.msra.mxu0 0.0
        %973 = vmatprep.subr.mxu0 0.0
        %974 = vmatpush1.xpose.msra.mxu0 0.0
        %975 = vmatprep.subr.mxu0 0.0
        %976 = vmatpush1.xpose.msra.mxu0 0.0
        %977 = vmatprep.subr.mxu0 0.0
        %978 = vmatpush1.xpose.msra.mxu0 0.0
        %979 = vmatprep.subr.mxu0 0.0
        %980 = vmatpush1.xpose.msra.mxu0 0.0
        %981 = vmatprep.subr.mxu0 0.0
        %982 = vmatpush1.xpose.msra.mxu0 0.0
        %983 = vmatprep.subr.mxu0 0.0
        %984 = vmatpush1.xpose.msra.mxu0 0.0
        %985 = vmatprep.subr.mxu0 0.0
        %986 = vmatpush1.xpose.msra.mxu0 0.0
        %987 = vmatprep.subr.mxu0 0.0
        %988 = vmatpush1.xpose.msra.mxu0 0.0
        %989 = vmatprep.subr.mxu0 0.0
        %990 = vmatpush1.xpose.msra.mxu0 0.0
        %991 = vmatprep.mubr.f32.mxu0 0.0
        %992 = vmatmul.mubr.f32.gmra.mrb[0].mxu0 %v895
        %v993 = vpop.f32.mrb[0].mxu0
        %v994 = vadd.f32 0.0, %v993
        %v995 = vpop.f32.mrb[0].mxu0
        %996 = vmatprep.mubr.f32.mxu0 0.0
        %997 = vmatmul.mubr.f32.gmra.mrb[0].mxu0 %v897
        %v998 = vpop.f32.mrb[0].mxu0
        %v999 = vadd.f32 0.0, %v998
        %v1000 = vpop.f32.mrb[0].mxu0
        %1001 = vmatprep.mubr.f32.mxu0 0.0
        %1002 = vmatmul.mubr.f32.gmra.mrb[0].mxu0 %v899
        %v1003 = vpop.f32.mrb[0].mxu0
        %v1004 = vadd.f32 0.0, %v1003
        %v1005 = vpop.f32.mrb[0].mxu0
        %1006 = vmatprep.mubr.f32.mxu0 0.0
        %1007 = vmatmul.mubr.f32.gmra.mrb[0].mxu0 %v901
        %v1008 = vpop.f32.mrb[0].mxu0
        %v1009 = vadd.f32 0.0, %v1008
        %v1010 = vpop.f32.mrb[0].mxu0
        %1011 = vmatprep.mubr.f32.mxu0 0.0
        %1012 = vmatmul.mubr.f32.gmra.mrb[0].mxu0 %v903
        %v1013 = vpop.f32.mrb[0].mxu0
        %v1014 = vadd.f32 0.0, %v1013
        %v1015 = vpop.f32.mrb[0].mxu0
        %1016 = vmatprep.mubr.f32.mxu0 0.0
        %1017 = vmatmul.mubr.f32.gmra.mrb[0].mxu0 %v905
        %v1018 = vpop.f32.mrb[0].mxu0
        %v1019 = vadd.f32 0.0, %v1018
        %v1020 = vpop.f32.mrb[0].mxu0
        %1021 = vmatprep.mubr.f32.mxu0 0.0
        %1022 = vmatmul.mubr.f32.gmra.mrb[0].mxu0 %v907
        %v1023 = vpop.f32.mrb[0].mxu0
        %v1024 = vadd.f32 0.0, %v1023
        %v1025 = vpop.f32.mrb[0].mxu0
        %1026 = vmatprep.mubr.f32.mxu0 0.0
        %1027 = vmatmul.mubr.f32.gmra.mrb[0].mxu0 %v909
        %v1028 = vpop.f32.mrb[0].mxu0
        %v1029 = vadd.f32 0.0, %v1028
        %v1030 = vpop.f32.mrb[0].mxu0
        %1031 = vdwg.mxu0
        %v1032 = vsel %vm597, %v994, -inf
        %1033 = vmax.xlane.f32.xlu0 %v1032
        %v1034 = vpop.xlane.xlu0 %1033
        %v1035 = vsel %vm597, %v999, -inf
        %1036 = vmax.xlane.f32.xlu0 %v1035
        %v1037 = vpop.xlane.xlu0 %1036
        %v1038 = vsel %vm597, %v1004, -inf
        %1039 = vmax.xlane.f32.xlu0 %v1038
        %v1040 = vpop.xlane.xlu0 %1039
        %v1041 = vsel %vm597, %v1009, -inf
        %1042 = vmax.xlane.f32.xlu0 %v1041
        %v1043 = vpop.xlane.xlu0 %1042
        %v1044 = vsel %vm597, %v1014, -inf
        %1045 = vmax.xlane.f32.xlu0 %v1044
        %v1046 = vpop.xlane.xlu0 %1045
        %v1047 = vsel %vm597, %v1019, -inf
        %1048 = vmax.xlane.f32.xlu0 %v1047
        %v1049 = vpop.xlane.xlu0 %1048
        %v1050 = vsel %vm597, %v1024, -inf
        %1051 = vmax.xlane.f32.xlu0 %v1050
        %v1052 = vpop.xlane.xlu0 %1051
        %v1053 = vsel %vm597, %v1029, -inf
        %1054 = vmax.xlane.f32.xlu0 %v1053
        %v1055 = vpop.xlane.xlu0 %1054
        %v1056 = vsub.f32 %v994, %v1034
        %v1057 = vsub.f32 %v999, %v1037
        %v1058 = vsub.f32 %v1004, %v1040
        %v1059 = vsub.f32 %v1009, %v1043
        %v1060 = vsub.f32 %v1014, %v1046
        %v1061 = vsub.f32 %v1019, %v1049
        %v1062 = vsub.f32 %v1024, %v1052
        %v1063 = vsub.f32 %v1029, %v1055
        %v1064 = vmul.f32 %v1056, 1.442695
        %v1065 = vpow.pop %v1064
        %v1066 = vmul.f32 %v1057, 1.442695
        %v1067 = vpow.pop %v1066
        %v1068 = vmul.f32 %v1058, 1.442695
        %v1069 = vpow.pop %v1068
        %v1070 = vmul.f32 %v1059, 1.442695
        %v1071 = vpow.pop %v1070
        %v1072 = vmul.f32 %v1060, 1.442695
        %v1073 = vpow.pop %v1072
        %v1074 = vmul.f32 %v1061, 1.442695
        %v1075 = vpow.pop %v1074
        %v1076 = vmul.f32 %v1062, 1.442695
        %v1077 = vpow.pop %v1076
        %v1078 = vmul.f32 %v1063, 1.442695
        %v1079 = vpow.pop %v1078
        %v1080 = vsel %vm597, %v1065, 0.0
        %1081 = vadd.xlane.f32.xlu0 %v1080
        %v1082 = vpop.xlane.xlu0 %1081
        %v1083 = vsel %vm597, %v1067, 0.0
        %1084 = vadd.xlane.f32.xlu0 %v1083
        %v1085 = vpop.xlane.xlu0 %1084
        %v1086 = vsel %vm597, %v1069, 0.0
        %1087 = vadd.xlane.f32.xlu0 %v1086
        %v1088 = vpop.xlane.xlu0 %1087
        %v1089 = vsel %vm597, %v1071, 0.0
        %1090 = vadd.xlane.f32.xlu0 %v1089
        %v1091 = vpop.xlane.xlu0 %1090
        %v1092 = vsel %vm597, %v1073, 0.0
        %1093 = vadd.xlane.f32.xlu0 %v1092
        %v1094 = vpop.xlane.xlu0 %1093
        %v1095 = vsel %vm597, %v1075, 0.0
        %1096 = vadd.xlane.f32.xlu0 %v1095
        %v1097 = vpop.xlane.xlu0 %1096
        %v1098 = vsel %vm597, %v1077, 0.0
        %1099 = vadd.xlane.f32.xlu0 %v1098
        %v1100 = vpop.xlane.xlu0 %1099
        %v1101 = vsel %vm597, %v1079, 0.0
        %1102 = vadd.xlane.f32.xlu0 %v1101
        %v1103 = vpop.xlane.xlu0 %1102
        %1104 = vrot.lane.b32.xlu0 %v847, 60
        %v1105 = vpop.permute.xlu0 %1104
        %1106 = vrot.lane.b32.xlu0 %v848, 60
        %v1107 = vpop.permute.xlu0 %1106
        %1108 = vrot.lane.b32.xlu0 %v849, 60
        %v1109 = vpop.permute.xlu0 %1108
        %1110 = vrot.lane.b32.xlu0 %v850, 60
        %v1111 = vpop.permute.xlu0 %1110
        %1112 = vrot.lane.b32.xlu0 %v851, 60
        %v1113 = vpop.permute.xlu0 %1112
        %1114 = vrot.lane.b32.xlu0 %v852, 60
        %v1115 = vpop.permute.xlu0 %1114
        %1116 = vrot.lane.b32.xlu0 %v853, 60
        %v1117 = vpop.permute.xlu0 %1116
        %1118 = vrot.lane.b32.xlu0 %v854, 60
        %v1119 = vpop.permute.xlu0 %1118
        %v1129 = vsel %vm597, %v1065, 0
        %v1132 = vsel %vm597, %v1067, 0
        %v1135 = vsel %vm597, %v1069, 0
        %v1138 = vsel %vm597, %v1071, 0
        %v1141 = vsel %vm597, %v1073, 0
        %v1144 = vsel %vm597, %v1075, 0
        %v1147 = vsel %vm597, %v1077, 0
        %v1150 = vsel %vm597, %v1079, 0
        %1152 = vmatprep.subr.mxu0 0.0
        %1153 = vmatpush1.msra.mxu0 %v1105
        %1154 = vmatprep.subr.mxu0 0.0
        %1155 = vmatpush1.msra.mxu0 %v1107
        %1156 = vmatprep.subr.mxu0 0.0
        %1157 = vmatpush1.msra.mxu0 %v1109
        %1158 = vmatprep.subr.mxu0 0.0
        %1159 = vmatpush1.msra.mxu0 %v1111
        %1160 = vmatprep.subr.mxu0 0.0
        %1161 = vmatpush1.msra.mxu0 %v1113
        %1162 = vmatprep.subr.mxu0 0.0
        %1163 = vmatpush1.msra.mxu0 %v1115
        %1164 = vmatprep.subr.mxu0 0.0
        %1165 = vmatpush1.msra.mxu0 %v1117
        %1166 = vmatprep.subr.mxu0 0.0
        %1167 = vmatpush1.msra.mxu0 %v1119
        %1168 = vmatprep.subr.mxu0 0.0
        %1169 = vmatpush1.msra.mxu0 0.0
        %1170 = vmatprep.subr.mxu0 0.0
        %1171 = vmatpush1.msra.mxu0 0.0
        %1172 = vmatprep.subr.mxu0 0.0
        %1173 = vmatpush1.msra.mxu0 0.0
        %1174 = vmatprep.subr.mxu0 0.0
        %1175 = vmatpush1.msra.mxu0 0.0
        %1176 = vmatprep.subr.mxu0 0.0
        %1177 = vmatpush1.msra.mxu0 0.0
        %1178 = vmatprep.subr.mxu0 0.0
        %1179 = vmatpush1.msra.mxu0 0.0
        %1180 = vmatprep.subr.mxu0 0.0
        %1181 = vmatpush1.msra.mxu0 0.0
        %1182 = vmatprep.subr.mxu0 0.0
        %1183 = vmatpush1.msra.mxu0 0.0
        %1184 = vmatprep.subr.mxu0 0.0
        %1185 = vmatpush1.msra.mxu0 0.0
        %1186 = vmatprep.subr.mxu0 0.0
        %1187 = vmatpush1.msra.mxu0 0.0
        %1188 = vmatprep.subr.mxu0 0.0
        %1189 = vmatpush1.msra.mxu0 0.0
        %1190 = vmatprep.subr.mxu0 0.0
        %1191 = vmatpush1.msra.mxu0 0.0
        %1192 = vmatprep.subr.mxu0 0.0
        %1193 = vmatpush1.msra.mxu0 0.0
        %1194 = vmatprep.subr.mxu0 0.0
        %1195 = vmatpush1.msra.mxu0 0.0
        %1196 = vmatprep.subr.mxu0 0.0
        %1197 = vmatpush1.msra.mxu0 0.0
        %1198 = vmatprep.subr.mxu0 0.0
        %1199 = vmatpush1.msra.mxu0 0.0
        %1200 = vmatprep.subr.mxu0 0.0
        %1201 = vmatpush1.msra.mxu0 0.0
        %1202 = vmatprep.subr.mxu0 0.0
        %1203 = vmatpush1.msra.mxu0 0.0
        %1204 = vmatprep.subr.mxu0 0.0
        %1205 = vmatpush1.msra.mxu0 0.0
        %1206 = vmatprep.subr.mxu0 0.0
        %1207 = vmatpush1.msra.mxu0 0.0
        %1208 = vmatprep.subr.mxu0 0.0
        %1209 = vmatpush1.msra.mxu0 0.0
        %1210 = vmatprep.subr.mxu0 0.0
        %1211 = vmatpush1.msra.mxu0 0.0
        %1212 = vmatprep.subr.mxu0 0.0
        %1213 = vmatpush1.msra.mxu0 0.0
        %1214 = vmatprep.subr.mxu0 0.0
        %1215 = vmatpush1.msra.mxu0 0.0
        %1216 = vmatprep.mubr.f32.mxu0 0.0
        %1217 = vmatmul.mubr.f32.gmra.mrb[0].mxu0 %v1129
        %v1218 = vpop.f32.mrb[0].mxu0
        %v1219 = vadd.f32 0.0, %v1218
        %v1220 = vpop.f32.mrb[0].mxu0
        %1221 = vmatprep.mubr.f32.mxu0 0.0
        %1222 = vmatmul.mubr.f32.gmra.mrb[0].mxu0 %v1132
        %v1223 = vpop.f32.mrb[0].mxu0
        %v1224 = vadd.f32 0.0, %v1223
        %v1225 = vpop.f32.mrb[0].mxu0
        %1226 = vmatprep.mubr.f32.mxu0 0.0
        %1227 = vmatmul.mubr.f32.gmra.mrb[0].mxu0 %v1135
        %v1228 = vpop.f32.mrb[0].mxu0
        %v1229 = vadd.f32 0.0, %v1228
        %v1230 = vpop.f32.mrb[0].mxu0
        %1231 = vmatprep.mubr.f32.mxu0 0.0
        %1232 = vmatmul.mubr.f32.gmra.mrb[0].mxu0 %v1138
        %v1233 = vpop.f32.mrb[0].mxu0
        %v1234 = vadd.f32 0.0, %v1233
        %v1235 = vpop.f32.mrb[0].mxu0
        %1236 = vmatprep.mubr.f32.mxu0 0.0
        %1237 = vmatmul.mubr.f32.gmra.mrb[0].mxu0 %v1141
        %v1238 = vpop.f32.mrb[0].mxu0
        %v1239 = vadd.f32 0.0, %v1238
        %v1240 = vpop.f32.mrb[0].mxu0
        %1241 = vmatprep.mubr.f32.mxu0 0.0
        %1242 = vmatmul.mubr.f32.gmra.mrb[0].mxu0 %v1144
        %v1243 = vpop.f32.mrb[0].mxu0
        %v1244 = vadd.f32 0.0, %v1243
        %v1245 = vpop.f32.mrb[0].mxu0
        %1246 = vmatprep.mubr.f32.mxu0 0.0
        %1247 = vmatmul.mubr.f32.gmra.mrb[0].mxu0 %v1147
        %v1248 = vpop.f32.mrb[0].mxu0
        %v1249 = vadd.f32 0.0, %v1248
        %v1250 = vpop.f32.mrb[0].mxu0
        %1251 = vmatprep.mubr.f32.mxu0 0.0
        %1252 = vmatmul.mubr.f32.gmra.mrb[0].mxu0 %v1150
        %v1253 = vpop.f32.mrb[0].mxu0
        %v1254 = vadd.f32 0.0, %v1253
        %v1255 = vpop.f32.mrb[0].mxu0
        %1256 = vdwg.mxu0
        %v1257 = vrcp.pop %v1082
        %v1258 = vrcp.pop %v1085
        %v1259 = vrcp.pop %v1088
        %v1260 = vrcp.pop %v1091
        %v1261 = vrcp.pop %v1094
        %v1262 = vrcp.pop %v1097
        %v1263 = vrcp.pop %v1100
        %v1264 = vrcp.pop %v1103
        %v1265 = vmul.f32 %v1219, %v1257
        %v1266 = vmul.f32 %v1224, %v1258
        %v1267 = vmul.f32 %v1229, %v1259
        %v1268 = vmul.f32 %v1234, %v1260
        %v1269 = vmul.f32 %v1239, %v1261
        %v1270 = vmul.f32 %v1244, %v1262
        %v1271 = vmul.f32 %v1249, %v1263
        %v1272 = vmul.f32 %v1254, %v1264
        %1281 = vrot.lane.b32.xlu0 %v1265, 4
        %v1282 = vpop.permute.xlu0 %1281
        %1283 = vrot.lane.b32.xlu0 %v1266, 4
        %v1284 = vpop.permute.xlu0 %1283
        %1285 = vrot.lane.b32.xlu0 %v1267, 4
        %v1286 = vpop.permute.xlu0 %1285
        %1287 = vrot.lane.b32.xlu0 %v1268, 4
        %v1288 = vpop.permute.xlu0 %1287
        %1289 = vrot.lane.b32.xlu0 %v1269, 4
        %v1290 = vpop.permute.xlu0 %1289
        %1291 = vrot.lane.b32.xlu0 %v1270, 4
        %v1292 = vpop.permute.xlu0 %1291
        %1293 = vrot.lane.b32.xlu0 %v1271, 4
        %v1294 = vpop.permute.xlu0 %1293
        %1295 = vrot.lane.b32.xlu0 %v1272, 4
        %v1296 = vpop.permute.xlu0 %1295
        %vm1305 = vcmask 64544
        %1306 = vst.msk [vmem:[#allocation3] sm:$0xff] %vm1305, %v1282
        %1307 = vst.msk [vmem:[#allocation3 + $0x8] sm:$0xff] %vm1305, %v1284
        %1308 = vst.msk [vmem:[#allocation3 + $0x10] sm:$0xff] %vm1305, %v1286
        %1309 = vst.msk [vmem:[#allocation3 + $0x18] sm:$0xff] %vm1305, %v1288
        %1310 = vst.msk [vmem:[#allocation3 + $0x20] sm:$0xff] %vm1305, %v1290
        %1311 = vst.msk [vmem:[#allocation3 + $0x28] sm:$0xff] %vm1305, %v1292
        %1312 = vst.msk [vmem:[#allocation3 + $0x30] sm:$0xff] %vm1305, %v1294
        %1313 = vst.msk [vmem:[#allocation3 + $0x38] sm:$0xff] %vm1305, %v1296
        %v1314 = vld [vmem:[#allocation2] sm:$0xff]
        %v1315 = vld [vmem:[#allocation2 + $0x8] sm:$0xff]
        %v1316 = vld [vmem:[#allocation2 + $0x10] sm:$0xff]
        %v1317 = vld [vmem:[#allocation2 + $0x18] sm:$0xff]
        %v1318 = vld [vmem:[#allocation2 + $0x20] sm:$0xff]
        %v1319 = vld [vmem:[#allocation2 + $0x28] sm:$0xff]
        %v1320 = vld [vmem:[#allocation2 + $0x30] sm:$0xff]
        %v1321 = vld [vmem:[#allocation2 + $0x38] sm:$0xff]
        %1330 = vrot.lane.b32.xlu0 %v1314, 120
        %v1331 = vpop.permute.xlu0 %1330
        %1332 = vrot.lane.b32.xlu0 %v1315, 120
        %v1333 = vpop.permute.xlu0 %1332
        %1334 = vrot.lane.b32.xlu0 %v1316, 120
        %v1335 = vpop.permute.xlu0 %1334
        %1336 = vrot.lane.b32.xlu0 %v1317, 120
        %v1337 = vpop.permute.xlu0 %1336
        %1338 = vrot.lane.b32.xlu0 %v1318, 120
        %v1339 = vpop.permute.xlu0 %1338
        %1340 = vrot.lane.b32.xlu0 %v1319, 120
        %v1341 = vpop.permute.xlu0 %1340
        %1342 = vrot.lane.b32.xlu0 %v1320, 120
        %v1343 = vpop.permute.xlu0 %1342
        %1344 = vrot.lane.b32.xlu0 %v1321, 120
        %v1345 = vpop.permute.xlu0 %1344
        %1346 = vrot.lane.b32.xlu0 %v1314, 88
        %v1347 = vpop.permute.xlu0 %1346
        %1348 = vrot.lane.b32.xlu0 %v1315, 88
        %v1349 = vpop.permute.xlu0 %1348
        %1350 = vrot.lane.b32.xlu0 %v1316, 88
        %v1351 = vpop.permute.xlu0 %1350
        %1352 = vrot.lane.b32.xlu0 %v1317, 88
        %v1353 = vpop.permute.xlu0 %1352
        %1354 = vrot.lane.b32.xlu0 %v1318, 88
        %v1355 = vpop.permute.xlu0 %1354
        %1356 = vrot.lane.b32.xlu0 %v1319, 88
        %v1357 = vpop.permute.xlu0 %1356
        %1358 = vrot.lane.b32.xlu0 %v1320, 88
        %v1359 = vpop.permute.xlu0 %1358
        %1360 = vrot.lane.b32.xlu0 %v1321, 88
        %v1361 = vpop.permute.xlu0 %1360
        %v1362 = vsel %vm459, %v1331, 0
        %v1364 = vsel %vm459, %v1333, 0
        %v1366 = vsel %vm459, %v1335, 0
        %v1368 = vsel %vm459, %v1337, 0
        %v1370 = vsel %vm459, %v1339, 0
        %v1372 = vsel %vm459, %v1341, 0
        %v1374 = vsel %vm459, %v1343, 0
        %v1376 = vsel %vm459, %v1345, 0
        %v1378 = vsel %vm459, %v1347, 0
        %v1380 = vsel %vm459, %v1349, 0
        %v1382 = vsel %vm459, %v1351, 0
        %v1384 = vsel %vm459, %v1353, 0
        %v1386 = vsel %vm459, %v1355, 0
        %v1388 = vsel %vm459, %v1357, 0
        %v1390 = vsel %vm459, %v1359, 0
        %v1392 = vsel %vm459, %v1361, 0
        %1394 = vmatprep.subr.mxu0 0.0
        %1395 = vmatpush1.xpose.msra.mxu0 %v1378
        %1396 = vmatprep.subr.mxu0 0.0
        %1397 = vmatpush1.xpose.msra.mxu0 %v1380
        %1398 = vmatprep.subr.mxu0 0.0
        %1399 = vmatpush1.xpose.msra.mxu0 %v1382
        %1400 = vmatprep.subr.mxu0 0.0
        %1401 = vmatpush1.xpose.msra.mxu0 %v1384
        %1402 = vmatprep.subr.mxu0 0.0
        %1403 = vmatpush1.xpose.msra.mxu0 %v1386
        %1404 = vmatprep.subr.mxu0 0.0
        %1405 = vmatpush1.xpose.msra.mxu0 %v1388
        %1406 = vmatprep.subr.mxu0 0.0
        %1407 = vmatpush1.xpose.msra.mxu0 %v1390
        %1408 = vmatprep.subr.mxu0 0.0
        %1409 = vmatpush1.xpose.msra.mxu0 %v1392
        %1410 = vmatprep.subr.mxu0 0.0
        %1411 = vmatpush1.xpose.msra.mxu0 0.0
        %1412 = vmatprep.subr.mxu0 0.0
        %1413 = vmatpush1.xpose.msra.mxu0 0.0
        %1414 = vmatprep.subr.mxu0 0.0
        %1415 = vmatpush1.xpose.msra.mxu0 0.0
        %1416 = vmatprep.subr.mxu0 0.0
        %1417 = vmatpush1.xpose.msra.mxu0 0.0
        %1418 = vmatprep.subr.mxu0 0.0
        %1419 = vmatpush1.xpose.msra.mxu0 0.0
        %1420 = vmatprep.subr.mxu0 0.0
        %1421 = vmatpush1.xpose.msra.mxu0 0.0
        %1422 = vmatprep.subr.mxu0 0.0
        %1423 = vmatpush1.xpose.msra.mxu0 0.0
        %1424 = vmatprep.subr.mxu0 0.0
        %1425 = vmatpush1.xpose.msra.mxu0 0.0
        %1426 = vmatprep.subr.mxu0 0.0
        %1427 = vmatpush1.xpose.msra.mxu0 0.0
        %1428 = vmatprep.subr.mxu0 0.0
        %1429 = vmatpush1.xpose.msra.mxu0 0.0
        %1430 = vmatprep.subr.mxu0 0.0
        %1431 = vmatpush1.xpose.msra.mxu0 0.0
        %1432 = vmatprep.subr.mxu0 0.0
        %1433 = vmatpush1.xpose.msra.mxu0 0.0
        %1434 = vmatprep.subr.mxu0 0.0
        %1435 = vmatpush1.xpose.msra.mxu0 0.0
        %1436 = vmatprep.subr.mxu0 0.0
        %1437 = vmatpush1.xpose.msra.mxu0 0.0
        %1438 = vmatprep.subr.mxu0 0.0
        %1439 = vmatpush1.xpose.msra.mxu0 0.0
        %1440 = vmatprep.subr.mxu0 0.0
        %1441 = vmatpush1.xpose.msra.mxu0 0.0
        %1442 = vmatprep.subr.mxu0 0.0
        %1443 = vmatpush1.xpose.msra.mxu0 0.0
        %1444 = vmatprep.subr.mxu0 0.0
        %1445 = vmatpush1.xpose.msra.mxu0 0.0
        %1446 = vmatprep.subr.mxu0 0.0
        %1447 = vmatpush1.xpose.msra.mxu0 0.0
        %1448 = vmatprep.subr.mxu0 0.0
        %1449 = vmatpush1.xpose.msra.mxu0 0.0
        %1450 = vmatprep.subr.mxu0 0.0
        %1451 = vmatpush1.xpose.msra.mxu0 0.0
        %1452 = vmatprep.subr.mxu0 0.0
        %1453 = vmatpush1.xpose.msra.mxu0 0.0
        %1454 = vmatprep.subr.mxu0 0.0
        %1455 = vmatpush1.xpose.msra.mxu0 0.0
        %1456 = vmatprep.subr.mxu0 0.0
        %1457 = vmatpush1.xpose.msra.mxu0 0.0
        %1458 = vmatprep.mubr.f32.mxu0 0.0
        %1459 = vmatmul.mubr.f32.gmra.mrb[0].mxu0 %v1362
        %v1460 = vpop.f32.mrb[0].mxu0
        %v1461 = vadd.f32 0.0, %v1460
        %v1462 = vpop.f32.mrb[0].mxu0
        %1463 = vmatprep.mubr.f32.mxu0 0.0
        %1464 = vmatmul.mubr.f32.gmra.mrb[0].mxu0 %v1364
        %v1465 = vpop.f32.mrb[0].mxu0
        %v1466 = vadd.f32 0.0, %v1465
        %v1467 = vpop.f32.mrb[0].mxu0
        %1468 = vmatprep.mubr.f32.mxu0 0.0
        %1469 = vmatmul.mubr.f32.gmra.mrb[0].mxu0 %v1366
        %v1470 = vpop.f32.mrb[0].mxu0
        %v1471 = vadd.f32 0.0, %v1470
        %v1472 = vpop.f32.mrb[0].mxu0
        %1473 = vmatprep.mubr.f32.mxu0 0.0
        %1474 = vmatmul.mubr.f32.gmra.mrb[0].mxu0 %v1368
        %v1475 = vpop.f32.mrb[0].mxu0
        %v1476 = vadd.f32 0.0, %v1475
        %v1477 = vpop.f32.mrb[0].mxu0
        %1478 = vmatprep.mubr.f32.mxu0 0.0
        %1479 = vmatmul.mubr.f32.gmra.mrb[0].mxu0 %v1370
        %v1480 = vpop.f32.mrb[0].mxu0
        %v1481 = vadd.f32 0.0, %v1480
        %v1482 = vpop.f32.mrb[0].mxu0
        %1483 = vmatprep.mubr.f32.mxu0 0.0
        %1484 = vmatmul.mubr.f32.gmra.mrb[0].mxu0 %v1372
        %v1485 = vpop.f32.mrb[0].mxu0
        %v1486 = vadd.f32 0.0, %v1485
        %v1487 = vpop.f32.mrb[0].mxu0
        %1488 = vmatprep.mubr.f32.mxu0 0.0
        %1489 = vmatmul.mubr.f32.gmra.mrb[0].mxu0 %v1374
        %v1490 = vpop.f32.mrb[0].mxu0
        %v1491 = vadd.f32 0.0, %v1490
        %v1492 = vpop.f32.mrb[0].mxu0
        %1493 = vmatprep.mubr.f32.mxu0 0.0
        %1494 = vmatmul.mubr.f32.gmra.mrb[0].mxu0 %v1376
        %v1495 = vpop.f32.mrb[0].mxu0
        %v1496 = vadd.f32 0.0, %v1495
        %v1497 = vpop.f32.mrb[0].mxu0
        %1498 = vdwg.mxu0
        %v1499 = vsel %vm597, %v1461, -inf
        %1500 = vmax.xlane.f32.xlu0 %v1499
        %v1501 = vpop.xlane.xlu0 %1500
        %v1502 = vsel %vm597, %v1466, -inf
        %1503 = vmax.xlane.f32.xlu0 %v1502
        %v1504 = vpop.xlane.xlu0 %1503
        %v1505 = vsel %vm597, %v1471, -inf
        %1506 = vmax.xlane.f32.xlu0 %v1505
        %v1507 = vpop.xlane.xlu0 %1506
        %v1508 = vsel %vm597, %v1476, -inf
        %1509 = vmax.xlane.f32.xlu0 %v1508
        %v1510 = vpop.xlane.xlu0 %1509
        %v1511 = vsel %vm597, %v1481, -inf
        %1512 = vmax.xlane.f32.xlu0 %v1511
        %v1513 = vpop.xlane.xlu0 %1512
        %v1514 = vsel %vm597, %v1486, -inf
        %1515 = vmax.xlane.f32.xlu0 %v1514
        %v1516 = vpop.xlane.xlu0 %1515
        %v1517 = vsel %vm597, %v1491, -inf
        %1518 = vmax.xlane.f32.xlu0 %v1517
        %v1519 = vpop.xlane.xlu0 %1518
        %v1520 = vsel %vm597, %v1496, -inf
        %1521 = vmax.xlane.f32.xlu0 %v1520
        %v1522 = vpop.xlane.xlu0 %1521
        %v1523 = vsub.f32 %v1461, %v1501
        %v1524 = vsub.f32 %v1466, %v1504
        %v1525 = vsub.f32 %v1471, %v1507
        %v1526 = vsub.f32 %v1476, %v1510
        %v1527 = vsub.f32 %v1481, %v1513
        %v1528 = vsub.f32 %v1486, %v1516
        %v1529 = vsub.f32 %v1491, %v1519
        %v1530 = vsub.f32 %v1496, %v1522
        %v1531 = vmul.f32 %v1523, 1.442695
        %v1532 = vpow.pop %v1531
        %v1533 = vmul.f32 %v1524, 1.442695
        %v1534 = vpow.pop %v1533
        %v1535 = vmul.f32 %v1525, 1.442695
        %v1536 = vpow.pop %v1535
        %v1537 = vmul.f32 %v1526, 1.442695
        %v1538 = vpow.pop %v1537
        %v1539 = vmul.f32 %v1527, 1.442695
        %v1540 = vpow.pop %v1539
        %v1541 = vmul.f32 %v1528, 1.442695
        %v1542 = vpow.pop %v1541
        %v1543 = vmul.f32 %v1529, 1.442695
        %v1544 = vpow.pop %v1543
        %v1545 = vmul.f32 %v1530, 1.442695
        %v1546 = vpow.pop %v1545
        %v1547 = vsel %vm597, %v1532, 0.0
        %1548 = vadd.xlane.f32.xlu0 %v1547
        %v1549 = vpop.xlane.xlu0 %1548
        %v1550 = vsel %vm597, %v1534, 0.0
        %1551 = vadd.xlane.f32.xlu0 %v1550
        %v1552 = vpop.xlane.xlu0 %1551
        %v1553 = vsel %vm597, %v1536, 0.0
        %1554 = vadd.xlane.f32.xlu0 %v1553
        %v1555 = vpop.xlane.xlu0 %1554
        %v1556 = vsel %vm597, %v1538, 0.0
        %1557 = vadd.xlane.f32.xlu0 %v1556
        %v1558 = vpop.xlane.xlu0 %1557
        %v1559 = vsel %vm597, %v1540, 0.0
        %1560 = vadd.xlane.f32.xlu0 %v1559
        %v1561 = vpop.xlane.xlu0 %1560
        %v1562 = vsel %vm597, %v1542, 0.0
        %1563 = vadd.xlane.f32.xlu0 %v1562
        %v1564 = vpop.xlane.xlu0 %1563
        %v1565 = vsel %vm597, %v1544, 0.0
        %1566 = vadd.xlane.f32.xlu0 %v1565
        %v1567 = vpop.xlane.xlu0 %1566
        %v1568 = vsel %vm597, %v1546, 0.0
        %1569 = vadd.xlane.f32.xlu0 %v1568
        %v1570 = vpop.xlane.xlu0 %1569
        %1571 = vrot.lane.b32.xlu0 %v1314, 56
        %v1572 = vpop.permute.xlu0 %1571
        %1573 = vrot.lane.b32.xlu0 %v1315, 56
        %v1574 = vpop.permute.xlu0 %1573
        %1575 = vrot.lane.b32.xlu0 %v1316, 56
        %v1576 = vpop.permute.xlu0 %1575
        %1577 = vrot.lane.b32.xlu0 %v1317, 56
        %v1578 = vpop.permute.xlu0 %1577
        %1579 = vrot.lane.b32.xlu0 %v1318, 56
        %v1580 = vpop.permute.xlu0 %1579
        %1581 = vrot.lane.b32.xlu0 %v1319, 56
        %v1582 = vpop.permute.xlu0 %1581
        %1583 = vrot.lane.b32.xlu0 %v1320, 56
        %v1584 = vpop.permute.xlu0 %1583
        %1585 = vrot.lane.b32.xlu0 %v1321, 56
        %v1586 = vpop.permute.xlu0 %1585
        %v1596 = vsel %vm597, %v1532, 0
        %v1599 = vsel %vm597, %v1534, 0
        %v1602 = vsel %vm597, %v1536, 0
        %v1605 = vsel %vm597, %v1538, 0
        %v1608 = vsel %vm597, %v1540, 0
        %v1611 = vsel %vm597, %v1542, 0
        %v1614 = vsel %vm597, %v1544, 0
        %v1617 = vsel %vm597, %v1546, 0
        %1619 = vmatprep.subr.mxu0 0.0
        %1620 = vmatpush1.msra.mxu0 %v1572
        %1621 = vmatprep.subr.mxu0 0.0
        %1622 = vmatpush1.msra.mxu0 %v1574
        %1623 = vmatprep.subr.mxu0 0.0
        %1624 = vmatpush1.msra.mxu0 %v1576
        %1625 = vmatprep.subr.mxu0 0.0
        %1626 = vmatpush1.msra.mxu0 %v1578
        %1627 = vmatprep.subr.mxu0 0.0
        %1628 = vmatpush1.msra.mxu0 %v1580
        %1629 = vmatprep.subr.mxu0 0.0
        %1630 = vmatpush1.msra.mxu0 %v1582
        %1631 = vmatprep.subr.mxu0 0.0
        %1632 = vmatpush1.msra.mxu0 %v1584
        %1633 = vmatprep.subr.mxu0 0.0
        %1634 = vmatpush1.msra.mxu0 %v1586
        %1635 = vmatprep.subr.mxu0 0.0
        %1636 = vmatpush1.msra.mxu0 0.0
        %1637 = vmatprep.subr.mxu0 0.0
        %1638 = vmatpush1.msra.mxu0 0.0
        %1639 = vmatprep.subr.mxu0 0.0
        %1640 = vmatpush1.msra.mxu0 0.0
        %1641 = vmatprep.subr.mxu0 0.0
        %1642 = vmatpush1.msra.mxu0 0.0
        %1643 = vmatprep.subr.mxu0 0.0
        %1644 = vmatpush1.msra.mxu0 0.0
        %1645 = vmatprep.subr.mxu0 0.0
        %1646 = vmatpush1.msra.mxu0 0.0
        %1647 = vmatprep.subr.mxu0 0.0
        %1648 = vmatpush1.msra.mxu0 0.0
        %1649 = vmatprep.subr.mxu0 0.0
        %1650 = vmatpush1.msra.mxu0 0.0
        %1651 = vmatprep.subr.mxu0 0.0
        %1652 = vmatpush1.msra.mxu0 0.0
        %1653 = vmatprep.subr.mxu0 0.0
        %1654 = vmatpush1.msra.mxu0 0.0
        %1655 = vmatprep.subr.mxu0 0.0
        %1656 = vmatpush1.msra.mxu0 0.0
        %1657 = vmatprep.subr.mxu0 0.0
        %1658 = vmatpush1.msra.mxu0 0.0
        %1659 = vmatprep.subr.mxu0 0.0
        %1660 = vmatpush1.msra.mxu0 0.0
        %1661 = vmatprep.subr.mxu0 0.0
        %1662 = vmatpush1.msra.mxu0 0.0
        %1663 = vmatprep.subr.mxu0 0.0
        %1664 = vmatpush1.msra.mxu0 0.0
        %1665 = vmatprep.subr.mxu0 0.0
        %1666 = vmatpush1.msra.mxu0 0.0
        %1667 = vmatprep.subr.mxu0 0.0
        %1668 = vmatpush1.msra.mxu0 0.0
        %1669 = vmatprep.subr.mxu0 0.0
        %1670 = vmatpush1.msra.mxu0 0.0
        %1671 = vmatprep.subr.mxu0 0.0
        %1672 = vmatpush1.msra.mxu0 0.0
        %1673 = vmatprep.subr.mxu0 0.0
        %1674 = vmatpush1.msra.mxu0 0.0
        %1675 = vmatprep.subr.mxu0 0.0
        %1676 = vmatpush1.msra.mxu0 0.0
        %1677 = vmatprep.subr.mxu0 0.0
        %1678 = vmatpush1.msra.mxu0 0.0
        %1679 = vmatprep.subr.mxu0 0.0
        %1680 = vmatpush1.msra.mxu0 0.0
        %1681 = vmatprep.subr.mxu0 0.0
        %1682 = vmatpush1.msra.mxu0 0.0
        %1683 = vmatprep.mubr.f32.mxu0 0.0
        %1684 = vmatmul.mubr.f32.gmra.mrb[0].mxu0 %v1596
        %v1685 = vpop.f32.mrb[0].mxu0
        %v1686 = vadd.f32 0.0, %v1685
        %v1687 = vpop.f32.mrb[0].mxu0
        %1688 = vmatprep.mubr.f32.mxu0 0.0
        %1689 = vmatmul.mubr.f32.gmra.mrb[0].mxu0 %v1599
        %v1690 = vpop.f32.mrb[0].mxu0
        %v1691 = vadd.f32 0.0, %v1690
        %v1692 = vpop.f32.mrb[0].mxu0
        %1693 = vmatprep.mubr.f32.mxu0 0.0
        %1694 = vmatmul.mubr.f32.gmra.mrb[0].mxu0 %v1602
        %v1695 = vpop.f32.mrb[0].mxu0
        %v1696 = vadd.f32 0.0, %v1695
        %v1697 = vpop.f32.mrb[0].mxu0
        %1698 = vmatprep.mubr.f32.mxu0 0.0
        %1699 = vmatmul.mubr.f32.gmra.mrb[0].mxu0 %v1605
        %v1700 = vpop.f32.mrb[0].mxu0
        %v1701 = vadd.f32 0.0, %v1700
        %v1702 = vpop.f32.mrb[0].mxu0
        %1703 = vmatprep.mubr.f32.mxu0 0.0
        %1704 = vmatmul.mubr.f32.gmra.mrb[0].mxu0 %v1608
        %v1705 = vpop.f32.mrb[0].mxu0
        %v1706 = vadd.f32 0.0, %v1705
        %v1707 = vpop.f32.mrb[0].mxu0
        %1708 = vmatprep.mubr.f32.mxu0 0.0
        %1709 = vmatmul.mubr.f32.gmra.mrb[0].mxu0 %v1611
        %v1710 = vpop.f32.mrb[0].mxu0
        %v1711 = vadd.f32 0.0, %v1710
        %v1712 = vpop.f32.mrb[0].mxu0
        %1713 = vmatprep.mubr.f32.mxu0 0.0
        %1714 = vmatmul.mubr.f32.gmra.mrb[0].mxu0 %v1614
        %v1715 = vpop.f32.mrb[0].mxu0
        %v1716 = vadd.f32 0.0, %v1715
        %v1717 = vpop.f32.mrb[0].mxu0
        %1718 = vmatprep.mubr.f32.mxu0 0.0
        %1719 = vmatmul.mubr.f32.gmra.mrb[0].mxu0 %v1617
        %v1720 = vpop.f32.mrb[0].mxu0
        %v1721 = vadd.f32 0.0, %v1720
        %v1722 = vpop.f32.mrb[0].mxu0
        %1723 = vdwg.mxu0
        %v1724 = vrcp.pop %v1549
        %v1725 = vrcp.pop %v1552
        %v1726 = vrcp.pop %v1555
        %v1727 = vrcp.pop %v1558
        %v1728 = vrcp.pop %v1561
        %v1729 = vrcp.pop %v1564
        %v1730 = vrcp.pop %v1567
        %v1731 = vrcp.pop %v1570
        %v1732 = vmul.f32 %v1686, %v1724
        %v1733 = vmul.f32 %v1691, %v1725
        %v1734 = vmul.f32 %v1696, %v1726
        %v1735 = vmul.f32 %v1701, %v1727
        %v1736 = vmul.f32 %v1706, %v1728
        %v1737 = vmul.f32 %v1711, %v1729
        %v1738 = vmul.f32 %v1716, %v1730
        %v1739 = vmul.f32 %v1721, %v1731
        %1748 = vrot.lane.b32.xlu0 %v1732, 8
        %v1749 = vpop.permute.xlu0 %1748
        %1750 = vrot.lane.b32.xlu0 %v1733, 8
        %v1751 = vpop.permute.xlu0 %1750
        %1752 = vrot.lane.b32.xlu0 %v1734, 8
        %v1753 = vpop.permute.xlu0 %1752
        %1754 = vrot.lane.b32.xlu0 %v1735, 8
        %v1755 = vpop.permute.xlu0 %1754
        %1756 = vrot.lane.b32.xlu0 %v1736, 8
        %v1757 = vpop.permute.xlu0 %1756
        %1758 = vrot.lane.b32.xlu0 %v1737, 8
        %v1759 = vpop.permute.xlu0 %1758
        %1760 = vrot.lane.b32.xlu0 %v1738, 8
        %v1761 = vpop.permute.xlu0 %1760
        %1762 = vrot.lane.b32.xlu0 %v1739, 8
        %v1763 = vpop.permute.xlu0 %1762
        %vm1772 = vcmask 97344
        %1773 = vst.msk [vmem:[#allocation3] sm:$0xff] %vm1772, %v1749
        %1774 = vst.msk [vmem:[#allocation3 + $0x8] sm:$0xff] %vm1772, %v1751
        %1775 = vst.msk [vmem:[#allocation3 + $0x10] sm:$0xff] %vm1772, %v1753
        %1776 = vst.msk [vmem:[#allocation3 + $0x18] sm:$0xff] %vm1772, %v1755
        %1777 = vst.msk [vmem:[#allocation3 + $0x20] sm:$0xff] %vm1772, %v1757
        %1778 = vst.msk [vmem:[#allocation3 + $0x28] sm:$0xff] %vm1772, %v1759
        %1779 = vst.msk [vmem:[#allocation3 + $0x30] sm:$0xff] %vm1772, %v1761
        %1780 = vst.msk [vmem:[#allocation3 + $0x38] sm:$0xff] %vm1772, %v1763
        %v1781 = vld [vmem:[#allocation2] sm:$0xff]
        %v1782 = vld [vmem:[#allocation2 + $0x8] sm:$0xff]
        %v1783 = vld [vmem:[#allocation2 + $0x10] sm:$0xff]
        %v1784 = vld [vmem:[#allocation2 + $0x18] sm:$0xff]
        %v1785 = vld [vmem:[#allocation2 + $0x20] sm:$0xff]
        %v1786 = vld [vmem:[#allocation2 + $0x28] sm:$0xff]
        %v1787 = vld [vmem:[#allocation2 + $0x30] sm:$0xff]
        %v1788 = vld [vmem:[#allocation2 + $0x38] sm:$0xff]
        %1797 = vrot.lane.b32.xlu0 %v1781, 116
        %v1798 = vpop.permute.xlu0 %1797
        %1799 = vrot.lane.b32.xlu0 %v1782, 116
        %v1800 = vpop.permute.xlu0 %1799
        %1801 = vrot.lane.b32.xlu0 %v1783, 116
        %v1802 = vpop.permute.xlu0 %1801
        %1803 = vrot.lane.b32.xlu0 %v1784, 116
        %v1804 = vpop.permute.xlu0 %1803
        %1805 = vrot.lane.b32.xlu0 %v1785, 116
        %v1806 = vpop.permute.xlu0 %1805
        %1807 = vrot.lane.b32.xlu0 %v1786, 116
        %v1808 = vpop.permute.xlu0 %1807
        %1809 = vrot.lane.b32.xlu0 %v1787, 116
        %v1810 = vpop.permute.xlu0 %1809
        %1811 = vrot.lane.b32.xlu0 %v1788, 116
        %v1812 = vpop.permute.xlu0 %1811
        %1813 = vrot.lane.b32.xlu0 %v1781, 84
        %v1814 = vpop.permute.xlu0 %1813
        %1815 = vrot.lane.b32.xlu0 %v1782, 84
        %v1816 = vpop.permute.xlu0 %1815
        %1817 = vrot.lane.b32.xlu0 %v1783, 84
        %v1818 = vpop.permute.xlu0 %1817
        %1819 = vrot.lane.b32.xlu0 %v1784, 84
        %v1820 = vpop.permute.xlu0 %1819
        %1821 = vrot.lane.b32.xlu0 %v1785, 84
        %v1822 = vpop.permute.xlu0 %1821
        %1823 = vrot.lane.b32.xlu0 %v1786, 84
        %v1824 = vpop.permute.xlu0 %1823
        %1825 = vrot.lane.b32.xlu0 %v1787, 84
        %v1826 = vpop.permute.xlu0 %1825
        %1827 = vrot.lane.b32.xlu0 %v1788, 84
        %v1828 = vpop.permute.xlu0 %1827
        %v1829 = vsel %vm459, %v1798, 0
        %v1831 = vsel %vm459, %v1800, 0
        %v1833 = vsel %vm459, %v1802, 0
        %v1835 = vsel %vm459, %v1804, 0
        %v1837 = vsel %vm459, %v1806, 0
        %v1839 = vsel %vm459, %v1808, 0
        %v1841 = vsel %vm459, %v1810, 0
        %v1843 = vsel %vm459, %v1812, 0
        %v1845 = vsel %vm459, %v1814, 0
        %v1847 = vsel %vm459, %v1816, 0
        %v1849 = vsel %vm459, %v1818, 0
        %v1851 = vsel %vm459, %v1820, 0
        %v1853 = vsel %vm459, %v1822, 0
        %v1855 = vsel %vm459, %v1824, 0
        %v1857 = vsel %vm459, %v1826, 0
        %v1859 = vsel %vm459, %v1828, 0
        %1861 = vmatprep.subr.mxu0 0.0
        %1862 = vmatpush1.xpose.msra.mxu0 %v1845
        %1863 = vmatprep.subr.mxu0 0.0
        %1864 = vmatpush1.xpose.msra.mxu0 %v1847
        %1865 = vmatprep.subr.mxu0 0.0
        %1866 = vmatpush1.xpose.msra.mxu0 %v1849
        %1867 = vmatprep.subr.mxu0 0.0
        %1868 = vmatpush1.xpose.msra.mxu0 %v1851
        %1869 = vmatprep.subr.mxu0 0.0
        %1870 = vmatpush1.xpose.msra.mxu0 %v1853
        %1871 = vmatprep.subr.mxu0 0.0
        %1872 = vmatpush1.xpose.msra.mxu0 %v1855
        %1873 = vmatprep.subr.mxu0 0.0
        %1874 = vmatpush1.xpose.msra.mxu0 %v1857
        %1875 = vmatprep.subr.mxu0 0.0
        %1876 = vmatpush1.xpose.msra.mxu0 %v1859
        %1877 = vmatprep.subr.mxu0 0.0
        %1878 = vmatpush1.xpose.msra.mxu0 0.0
        %1879 = vmatprep.subr.mxu0 0.0
        %1880 = vmatpush1.xpose.msra.mxu0 0.0
        %1881 = vmatprep.subr.mxu0 0.0
        %1882 = vmatpush1.xpose.msra.mxu0 0.0
        %1883 = vmatprep.subr.mxu0 0.0
        %1884 = vmatpush1.xpose.msra.mxu0 0.0
        %1885 = vmatprep.subr.mxu0 0.0
        %1886 = vmatpush1.xpose.msra.mxu0 0.0
        %1887 = vmatprep.subr.mxu0 0.0
        %1888 = vmatpush1.xpose.msra.mxu0 0.0
        %1889 = vmatprep.subr.mxu0 0.0
        %1890 = vmatpush1.xpose.msra.mxu0 0.0
        %1891 = vmatprep.subr.mxu0 0.0
        %1892 = vmatpush1.xpose.msra.mxu0 0.0
        %1893 = vmatprep.subr.mxu0 0.0
        %1894 = vmatpush1.xpose.msra.mxu0 0.0
        %1895 = vmatprep.subr.mxu0 0.0
        %1896 = vmatpush1.xpose.msra.mxu0 0.0
        %1897 = vmatprep.subr.mxu0 0.0
        %1898 = vmatpush1.xpose.msra.mxu0 0.0
        %1899 = vmatprep.subr.mxu0 0.0
        %1900 = vmatpush1.xpose.msra.mxu0 0.0
        %1901 = vmatprep.subr.mxu0 0.0
        %1902 = vmatpush1.xpose.msra.mxu0 0.0
        %1903 = vmatprep.subr.mxu0 0.0
        %1904 = vmatpush1.xpose.msra.mxu0 0.0
        %1905 = vmatprep.subr.mxu0 0.0
        %1906 = vmatpush1.xpose.msra.mxu0 0.0
        %1907 = vmatprep.subr.mxu0 0.0
        %1908 = vmatpush1.xpose.msra.mxu0 0.0
        %1909 = vmatprep.subr.mxu0 0.0
        %1910 = vmatpush1.xpose.msra.mxu0 0.0
        %1911 = vmatprep.subr.mxu0 0.0
        %1912 = vmatpush1.xpose.msra.mxu0 0.0
        %1913 = vmatprep.subr.mxu0 0.0
        %1914 = vmatpush1.xpose.msra.mxu0 0.0
        %1915 = vmatprep.subr.mxu0 0.0
        %1916 = vmatpush1.xpose.msra.mxu0 0.0
        %1917 = vmatprep.subr.mxu0 0.0
        %1918 = vmatpush1.xpose.msra.mxu0 0.0
        %1919 = vmatprep.subr.mxu0 0.0
        %1920 = vmatpush1.xpose.msra.mxu0 0.0
        %1921 = vmatprep.subr.mxu0 0.0
        %1922 = vmatpush1.xpose.msra.mxu0 0.0
        %1923 = vmatprep.subr.mxu0 0.0
        %1924 = vmatpush1.xpose.msra.mxu0 0.0
        %1925 = vmatprep.mubr.f32.mxu0 0.0
        %1926 = vmatmul.mubr.f32.gmra.mrb[0].mxu0 %v1829
        %v1927 = vpop.f32.mrb[0].mxu0
        %v1928 = vadd.f32 0.0, %v1927
        %v1929 = vpop.f32.mrb[0].mxu0
        %1930 = vmatprep.mubr.f32.mxu0 0.0
        %1931 = vmatmul.mubr.f32.gmra.mrb[0].mxu0 %v1831
        %v1932 = vpop.f32.mrb[0].mxu0
        %v1933 = vadd.f32 0.0, %v1932
        %v1934 = vpop.f32.mrb[0].mxu0
        %1935 = vmatprep.mubr.f32.mxu0 0.0
        %1936 = vmatmul.mubr.f32.gmra.mrb[0].mxu0 %v1833
        %v1937 = vpop.f32.mrb[0].mxu0
        %v1938 = vadd.f32 0.0, %v1937
        %v1939 = vpop.f32.mrb[0].mxu0
        %1940 = vmatprep.mubr.f32.mxu0 0.0
        %1941 = vmatmul.mubr.f32.gmra.mrb[0].mxu0 %v1835
        %v1942 = vpop.f32.mrb[0].mxu0
        %v1943 = vadd.f32 0.0, %v1942
        %v1944 = vpop.f32.mrb[0].mxu0
        %1945 = vmatprep.mubr.f32.mxu0 0.0
        %1946 = vmatmul.mubr.f32.gmra.mrb[0].mxu0 %v1837
        %v1947 = vpop.f32.mrb[0].mxu0
        %v1948 = vadd.f32 0.0, %v1947
        %v1949 = vpop.f32.mrb[0].mxu0
        %1950 = vmatprep.mubr.f32.mxu0 0.0
        %1951 = vmatmul.mubr.f32.gmra.mrb[0].mxu0 %v1839
        %v1952 = vpop.f32.mrb[0].mxu0
        %v1953 = vadd.f32 0.0, %v1952
        %v1954 = vpop.f32.mrb[0].mxu0
        %1955 = vmatprep.mubr.f32.mxu0 0.0
        %1956 = vmatmul.mubr.f32.gmra.mrb[0].mxu0 %v1841
        %v1957 = vpop.f32.mrb[0].mxu0
        %v1958 = vadd.f32 0.0, %v1957
        %v1959 = vpop.f32.mrb[0].mxu0
        %1960 = vmatprep.mubr.f32.mxu0 0.0
        %1961 = vmatmul.mubr.f32.gmra.mrb[0].mxu0 %v1843
        %v1962 = vpop.f32.mrb[0].mxu0
        %v1963 = vadd.f32 0.0, %v1962
        %v1964 = vpop.f32.mrb[0].mxu0
        %1965 = vdwg.mxu0
        %v1966 = vsel %vm597, %v1928, -inf
        %1967 = vmax.xlane.f32.xlu0 %v1966
        %v1968 = vpop.xlane.xlu0 %1967
        %v1969 = vsel %vm597, %v1933, -inf
        %1970 = vmax.xlane.f32.xlu0 %v1969
        %v1971 = vpop.xlane.xlu0 %1970
        %v1972 = vsel %vm597, %v1938, -inf
        %1973 = vmax.xlane.f32.xlu0 %v1972
        %v1974 = vpop.xlane.xlu0 %1973
        %v1975 = vsel %vm597, %v1943, -inf
        %1976 = vmax.xlane.f32.xlu0 %v1975
        %v1977 = vpop.xlane.xlu0 %1976
        %v1978 = vsel %vm597, %v1948, -inf
        %1979 = vmax.xlane.f32.xlu0 %v1978
        %v1980 = vpop.xlane.xlu0 %1979
        %v1981 = vsel %vm597, %v1953, -inf
        %1982 = vmax.xlane.f32.xlu0 %v1981
        %v1983 = vpop.xlane.xlu0 %1982
        %v1984 = vsel %vm597, %v1958, -inf
        %1985 = vmax.xlane.f32.xlu0 %v1984
        %v1986 = vpop.xlane.xlu0 %1985
        %v1987 = vsel %vm597, %v1963, -inf
        %1988 = vmax.xlane.f32.xlu0 %v1987
        %v1989 = vpop.xlane.xlu0 %1988
        %v1990 = vsub.f32 %v1928, %v1968
        %v1991 = vsub.f32 %v1933, %v1971
        %v1992 = vsub.f32 %v1938, %v1974
        %v1993 = vsub.f32 %v1943, %v1977
        %v1994 = vsub.f32 %v1948, %v1980
        %v1995 = vsub.f32 %v1953, %v1983
        %v1996 = vsub.f32 %v1958, %v1986
        %v1997 = vsub.f32 %v1963, %v1989
        %v1998 = vmul.f32 %v1990, 1.442695
        %v1999 = vpow.pop %v1998
        %v2000 = vmul.f32 %v1991, 1.442695
        %v2001 = vpow.pop %v2000
        %v2002 = vmul.f32 %v1992, 1.442695
        %v2003 = vpow.pop %v2002
        %v2004 = vmul.f32 %v1993, 1.442695
        %v2005 = vpow.pop %v2004
        %v2006 = vmul.f32 %v1994, 1.442695
        %v2007 = vpow.pop %v2006
        %v2008 = vmul.f32 %v1995, 1.442695
        %v2009 = vpow.pop %v2008
        %v2010 = vmul.f32 %v1996, 1.442695
        %v2011 = vpow.pop %v2010
        %v2012 = vmul.f32 %v1997, 1.442695
        %v2013 = vpow.pop %v2012
        %v2014 = vsel %vm597, %v1999, 0.0
        %2015 = vadd.xlane.f32.xlu0 %v2014
        %v2016 = vpop.xlane.xlu0 %2015
        %v2017 = vsel %vm597, %v2001, 0.0
        %2018 = vadd.xlane.f32.xlu0 %v2017
        %v2019 = vpop.xlane.xlu0 %2018
        %v2020 = vsel %vm597, %v2003, 0.0
        %2021 = vadd.xlane.f32.xlu0 %v2020
        %v2022 = vpop.xlane.xlu0 %2021
        %v2023 = vsel %vm597, %v2005, 0.0
        %2024 = vadd.xlane.f32.xlu0 %v2023
        %v2025 = vpop.xlane.xlu0 %2024
        %v2026 = vsel %vm597, %v2007, 0.0
        %2027 = vadd.xlane.f32.xlu0 %v2026
        %v2028 = vpop.xlane.xlu0 %2027
        %v2029 = vsel %vm597, %v2009, 0.0
        %2030 = vadd.xlane.f32.xlu0 %v2029
        %v2031 = vpop.xlane.xlu0 %2030
        %v2032 = vsel %vm597, %v2011, 0.0
        %2033 = vadd.xlane.f32.xlu0 %v2032
        %v2034 = vpop.xlane.xlu0 %2033
        %v2035 = vsel %vm597, %v2013, 0.0
        %2036 = vadd.xlane.f32.xlu0 %v2035
        %v2037 = vpop.xlane.xlu0 %2036
        %2038 = vrot.lane.b32.xlu0 %v1781, 52
        %v2039 = vpop.permute.xlu0 %2038
        %2040 = vrot.lane.b32.xlu0 %v1782, 52
        %v2041 = vpop.permute.xlu0 %2040
        %2042 = vrot.lane.b32.xlu0 %v1783, 52
        %v2043 = vpop.permute.xlu0 %2042
        %2044 = vrot.lane.b32.xlu0 %v1784, 52
        %v2045 = vpop.permute.xlu0 %2044
        %2046 = vrot.lane.b32.xlu0 %v1785, 52
        %v2047 = vpop.permute.xlu0 %2046
        %2048 = vrot.lane.b32.xlu0 %v1786, 52
        %v2049 = vpop.permute.xlu0 %2048
        %2050 = vrot.lane.b32.xlu0 %v1787, 52
        %v2051 = vpop.permute.xlu0 %2050
        %2052 = vrot.lane.b32.xlu0 %v1788, 52
        %v2053 = vpop.permute.xlu0 %2052
        %v2063 = vsel %vm597, %v1999, 0
        %v2066 = vsel %vm597, %v2001, 0
        %v2069 = vsel %vm597, %v2003, 0
        %v2072 = vsel %vm597, %v2005, 0
        %v2075 = vsel %vm597, %v2007, 0
        %v2078 = vsel %vm597, %v2009, 0
        %v2081 = vsel %vm597, %v2011, 0
        %v2084 = vsel %vm597, %v2013, 0
        %2086 = vmatprep.subr.mxu0 0.0
        %2087 = vmatpush1.msra.mxu0 %v2039
        %2088 = vmatprep.subr.mxu0 0.0
        %2089 = vmatpush1.msra.mxu0 %v2041
        %2090 = vmatprep.subr.mxu0 0.0
        %2091 = vmatpush1.msra.mxu0 %v2043
        %2092 = vmatprep.subr.mxu0 0.0
        %2093 = vmatpush1.msra.mxu0 %v2045
        %2094 = vmatprep.subr.mxu0 0.0
        %2095 = vmatpush1.msra.mxu0 %v2047
        %2096 = vmatprep.subr.mxu0 0.0
        %2097 = vmatpush1.msra.mxu0 %v2049
        %2098 = vmatprep.subr.mxu0 0.0
        %2099 = vmatpush1.msra.mxu0 %v2051
        %2100 = vmatprep.subr.mxu0 0.0
        %2101 = vmatpush1.msra.mxu0 %v2053
        %2102 = vmatprep.subr.mxu0 0.0
        %2103 = vmatpush1.msra.mxu0 0.0
        %2104 = vmatprep.subr.mxu0 0.0
        %2105 = vmatpush1.msra.mxu0 0.0
        %2106 = vmatprep.subr.mxu0 0.0
        %2107 = vmatpush1.msra.mxu0 0.0
        %2108 = vmatprep.subr.mxu0 0.0
        %2109 = vmatpush1.msra.mxu0 0.0
        %2110 = vmatprep.subr.mxu0 0.0
        %2111 = vmatpush1.msra.mxu0 0.0
        %2112 = vmatprep.subr.mxu0 0.0
        %2113 = vmatpush1.msra.mxu0 0.0
        %2114 = vmatprep.subr.mxu0 0.0
        %2115 = vmatpush1.msra.mxu0 0.0
        %2116 = vmatprep.subr.mxu0 0.0
        %2117 = vmatpush1.msra.mxu0 0.0
        %2118 = vmatprep.subr.mxu0 0.0
        %2119 = vmatpush1.msra.mxu0 0.0
        %2120 = vmatprep.subr.mxu0 0.0
        %2121 = vmatpush1.msra.mxu0 0.0
        %2122 = vmatprep.subr.mxu0 0.0
        %2123 = vmatpush1.msra.mxu0 0.0
        %2124 = vmatprep.subr.mxu0 0.0
        %2125 = vmatpush1.msra.mxu0 0.0
        %2126 = vmatprep.subr.mxu0 0.0
        %2127 = vmatpush1.msra.mxu0 0.0
        %2128 = vmatprep.subr.mxu0 0.0
        %2129 = vmatpush1.msra.mxu0 0.0
        %2130 = vmatprep.subr.mxu0 0.0
        %2131 = vmatpush1.msra.mxu0 0.0
        %2132 = vmatprep.subr.mxu0 0.0
        %2133 = vmatpush1.msra.mxu0 0.0
        %2134 = vmatprep.subr.mxu0 0.0
        %2135 = vmatpush1.msra.mxu0 0.0
        %2136 = vmatprep.subr.mxu0 0.0
        %2137 = vmatpush1.msra.mxu0 0.0
        %2138 = vmatprep.subr.mxu0 0.0
        %2139 = vmatpush1.msra.mxu0 0.0
        %2140 = vmatprep.subr.mxu0 0.0
        %2141 = vmatpush1.msra.mxu0 0.0
        %2142 = vmatprep.subr.mxu0 0.0
        %2143 = vmatpush1.msra.mxu0 0.0
        %2144 = vmatprep.subr.mxu0 0.0
        %2145 = vmatpush1.msra.mxu0 0.0
        %2146 = vmatprep.subr.mxu0 0.0
        %2147 = vmatpush1.msra.mxu0 0.0
        %2148 = vmatprep.subr.mxu0 0.0
        %2149 = vmatpush1.msra.mxu0 0.0
        %2150 = vmatprep.mubr.f32.mxu0 0.0
        %2151 = vmatmul.mubr.f32.gmra.mrb[0].mxu0 %v2063
        %v2152 = vpop.f32.mrb[0].mxu0
        %v2153 = vadd.f32 0.0, %v2152
        %v2154 = vpop.f32.mrb[0].mxu0
        %2155 = vmatprep.mubr.f32.mxu0 0.0
        %2156 = vmatmul.mubr.f32.gmra.mrb[0].mxu0 %v2066
        %v2157 = vpop.f32.mrb[0].mxu0
        %v2158 = vadd.f32 0.0, %v2157
        %v2159 = vpop.f32.mrb[0].mxu0
        %2160 = vmatprep.mubr.f32.mxu0 0.0
        %2161 = vmatmul.mubr.f32.gmra.mrb[0].mxu0 %v2069
        %v2162 = vpop.f32.mrb[0].mxu0
        %v2163 = vadd.f32 0.0, %v2162
        %v2164 = vpop.f32.mrb[0].mxu0
        %2165 = vmatprep.mubr.f32.mxu0 0.0
        %2166 = vmatmul.mubr.f32.gmra.mrb[0].mxu0 %v2072
        %v2167 = vpop.f32.mrb[0].mxu0
        %v2168 = vadd.f32 0.0, %v2167
        %v2169 = vpop.f32.mrb[0].mxu0
        %2170 = vmatprep.mubr.f32.mxu0 0.0
        %2171 = vmatmul.mubr.f32.gmra.mrb[0].mxu0 %v2075
        %v2172 = vpop.f32.mrb[0].mxu0
        %v2173 = vadd.f32 0.0, %v2172
        %v2174 = vpop.f32.mrb[0].mxu0
        %2175 = vmatprep.mubr.f32.mxu0 0.0
        %2176 = vmatmul.mubr.f32.gmra.mrb[0].mxu0 %v2078
        %v2177 = vpop.f32.mrb[0].mxu0
        %v2178 = vadd.f32 0.0, %v2177
        %v2179 = vpop.f32.mrb[0].mxu0
        %2180 = vmatprep.mubr.f32.mxu0 0.0
        %2181 = vmatmul.mubr.f32.gmra.mrb[0].mxu0 %v2081
        %v2182 = vpop.f32.mrb[0].mxu0
        %v2183 = vadd.f32 0.0, %v2182
        %v2184 = vpop.f32.mrb[0].mxu0
        %2185 = vmatprep.mubr.f32.mxu0 0.0
        %2186 = vmatmul.mubr.f32.gmra.mrb[0].mxu0 %v2084
        %v2187 = vpop.f32.mrb[0].mxu0
        %v2188 = vadd.f32 0.0, %v2187
        %v2189 = vpop.f32.mrb[0].mxu0
        %2190 = vdwg.mxu0
        %v2191 = vrcp.pop %v2016
        %v2192 = vrcp.pop %v2019
        %v2193 = vrcp.pop %v2022
        %v2194 = vrcp.pop %v2025
        %v2195 = vrcp.pop %v2028
        %v2196 = vrcp.pop %v2031
        %v2197 = vrcp.pop %v2034
        %v2198 = vrcp.pop %v2037
        %v2199 = vmul.f32 %v2153, %v2191
        %v2200 = vmul.f32 %v2158, %v2192
        %v2201 = vmul.f32 %v2163, %v2193
        %v2202 = vmul.f32 %v2168, %v2194
        %v2203 = vmul.f32 %v2173, %v2195
        %v2204 = vmul.f32 %v2178, %v2196
        %v2205 = vmul.f32 %v2183, %v2197
        %v2206 = vmul.f32 %v2188, %v2198
        %2215 = vrot.lane.b32.xlu0 %v2199, 12
        %v2216 = vpop.permute.xlu0 %2215
        %2217 = vrot.lane.b32.xlu0 %v2200, 12
        %v2218 = vpop.permute.xlu0 %2217
        %2219 = vrot.lane.b32.xlu0 %v2201, 12
        %v2220 = vpop.permute.xlu0 %2219
        %2221 = vrot.lane.b32.xlu0 %v2202, 12
        %v2222 = vpop.permute.xlu0 %2221
        %2223 = vrot.lane.b32.xlu0 %v2203, 12
        %v2224 = vpop.permute.xlu0 %2223
        %2225 = vrot.lane.b32.xlu0 %v2204, 12
        %v2226 = vpop.permute.xlu0 %2225
        %2227 = vrot.lane.b32.xlu0 %v2205, 12
        %v2228 = vpop.permute.xlu0 %2227
        %2229 = vrot.lane.b32.xlu0 %v2206, 12
        %v2230 = vpop.permute.xlu0 %2229
        %vm2239 = vcmask 130144
        %2240 = vst.msk [vmem:[#allocation3] sm:$0xff] %vm2239, %v2216
        %2241 = vst.msk [vmem:[#allocation3 + $0x8] sm:$0xff] %vm2239, %v2218
        %2242 = vst.msk [vmem:[#allocation3 + $0x10] sm:$0xff] %vm2239, %v2220
        %2243 = vst.msk [vmem:[#allocation3 + $0x18] sm:$0xff] %vm2239, %v2222
        %2244 = vst.msk [vmem:[#allocation3 + $0x20] sm:$0xff] %vm2239, %v2224
        %2245 = vst.msk [vmem:[#allocation3 + $0x28] sm:$0xff] %vm2239, %v2226
        %2246 = vst.msk [vmem:[#allocation3 + $0x30] sm:$0xff] %vm2239, %v2228
        %2247 = vst.msk [vmem:[#allocation3 + $0x38] sm:$0xff] %vm2239, %v2230
        %v2248 = vld [vmem:[#allocation2] sm:$0xff]
        %v2249 = vld [vmem:[#allocation2 + $0x8] sm:$0xff]
        %v2250 = vld [vmem:[#allocation2 + $0x10] sm:$0xff]
        %v2251 = vld [vmem:[#allocation2 + $0x18] sm:$0xff]
        %v2252 = vld [vmem:[#allocation2 + $0x20] sm:$0xff]
        %v2253 = vld [vmem:[#allocation2 + $0x28] sm:$0xff]
        %v2254 = vld [vmem:[#allocation2 + $0x30] sm:$0xff]
        %v2255 = vld [vmem:[#allocation2 + $0x38] sm:$0xff]
        %2264 = vrot.lane.b32.xlu0 %v2248, 112
        %v2265 = vpop.permute.xlu0 %2264
        %2266 = vrot.lane.b32.xlu0 %v2249, 112
        %v2267 = vpop.permute.xlu0 %2266
        %2268 = vrot.lane.b32.xlu0 %v2250, 112
        %v2269 = vpop.permute.xlu0 %2268
        %2270 = vrot.lane.b32.xlu0 %v2251, 112
        %v2271 = vpop.permute.xlu0 %2270
        %2272 = vrot.lane.b32.xlu0 %v2252, 112
        %v2273 = vpop.permute.xlu0 %2272
        %2274 = vrot.lane.b32.xlu0 %v2253, 112
        %v2275 = vpop.permute.xlu0 %2274
        %2276 = vrot.lane.b32.xlu0 %v2254, 112
        %v2277 = vpop.permute.xlu0 %2276
        %2278 = vrot.lane.b32.xlu0 %v2255, 112
        %v2279 = vpop.permute.xlu0 %2278
        %2280 = vrot.lane.b32.xlu0 %v2248, 80
        %v2281 = vpop.permute.xlu0 %2280
        %2282 = vrot.lane.b32.xlu0 %v2249, 80
        %v2283 = vpop.permute.xlu0 %2282
        %2284 = vrot.lane.b32.xlu0 %v2250, 80
        %v2285 = vpop.permute.xlu0 %2284
        %2286 = vrot.lane.b32.xlu0 %v2251, 80
        %v2287 = vpop.permute.xlu0 %2286
        %2288 = vrot.lane.b32.xlu0 %v2252, 80
        %v2289 = vpop.permute.xlu0 %2288
        %2290 = vrot.lane.b32.xlu0 %v2253, 80
        %v2291 = vpop.permute.xlu0 %2290
        %2292 = vrot.lane.b32.xlu0 %v2254, 80
        %v2293 = vpop.permute.xlu0 %2292
        %2294 = vrot.lane.b32.xlu0 %v2255, 80
        %v2295 = vpop.permute.xlu0 %2294
        %v2296 = vsel %vm459, %v2265, 0
        %v2298 = vsel %vm459, %v2267, 0
        %v2300 = vsel %vm459, %v2269, 0
        %v2302 = vsel %vm459, %v2271, 0
        %v2304 = vsel %vm459, %v2273, 0
        %v2306 = vsel %vm459, %v2275, 0
        %v2308 = vsel %vm459, %v2277, 0
        %v2310 = vsel %vm459, %v2279, 0
        %v2312 = vsel %vm459, %v2281, 0
        %v2314 = vsel %vm459, %v2283, 0
        %v2316 = vsel %vm459, %v2285, 0
        %v2318 = vsel %vm459, %v2287, 0
        %v2320 = vsel %vm459, %v2289, 0
        %v2322 = vsel %vm459, %v2291, 0
        %v2324 = vsel %vm459, %v2293, 0
        %v2326 = vsel %vm459, %v2295, 0
        %2328 = vmatprep.subr.mxu0 0.0
        %2329 = vmatpush1.xpose.msra.mxu0 %v2312
        %2330 = vmatprep.subr.mxu0 0.0
        %2331 = vmatpush1.xpose.msra.mxu0 %v2314
        %2332 = vmatprep.subr.mxu0 0.0
        %2333 = vmatpush1.xpose.msra.mxu0 %v2316
        %2334 = vmatprep.subr.mxu0 0.0
        %2335 = vmatpush1.xpose.msra.mxu0 %v2318
        %2336 = vmatprep.subr.mxu0 0.0
        %2337 = vmatpush1.xpose.msra.mxu0 %v2320
        %2338 = vmatprep.subr.mxu0 0.0
        %2339 = vmatpush1.xpose.msra.mxu0 %v2322
        %2340 = vmatprep.subr.mxu0 0.0
        %2341 = vmatpush1.xpose.msra.mxu0 %v2324
        %2342 = vmatprep.subr.mxu0 0.0
        %2343 = vmatpush1.xpose.msra.mxu0 %v2326
        %2344 = vmatprep.subr.mxu0 0.0
        %2345 = vmatpush1.xpose.msra.mxu0 0.0
        %2346 = vmatprep.subr.mxu0 0.0
        %2347 = vmatpush1.xpose.msra.mxu0 0.0
        %2348 = vmatprep.subr.mxu0 0.0
        %2349 = vmatpush1.xpose.msra.mxu0 0.0
        %2350 = vmatprep.subr.mxu0 0.0
        %2351 = vmatpush1.xpose.msra.mxu0 0.0
        %2352 = vmatprep.subr.mxu0 0.0
        %2353 = vmatpush1.xpose.msra.mxu0 0.0
        %2354 = vmatprep.subr.mxu0 0.0
        %2355 = vmatpush1.xpose.msra.mxu0 0.0
        %2356 = vmatprep.subr.mxu0 0.0
        %2357 = vmatpush1.xpose.msra.mxu0 0.0
        %2358 = vmatprep.subr.mxu0 0.0
        %2359 = vmatpush1.xpose.msra.mxu0 0.0
        %2360 = vmatprep.subr.mxu0 0.0
        %2361 = vmatpush1.xpose.msra.mxu0 0.0
        %2362 = vmatprep.subr.mxu0 0.0
        %2363 = vmatpush1.xpose.msra.mxu0 0.0
        %2364 = vmatprep.subr.mxu0 0.0
        %2365 = vmatpush1.xpose.msra.mxu0 0.0
        %2366 = vmatprep.subr.mxu0 0.0
        %2367 = vmatpush1.xpose.msra.mxu0 0.0
        %2368 = vmatprep.subr.mxu0 0.0
        %2369 = vmatpush1.xpose.msra.mxu0 0.0
        %2370 = vmatprep.subr.mxu0 0.0
        %2371 = vmatpush1.xpose.msra.mxu0 0.0
        %2372 = vmatprep.subr.mxu0 0.0
        %2373 = vmatpush1.xpose.msra.mxu0 0.0
        %2374 = vmatprep.subr.mxu0 0.0
        %2375 = vmatpush1.xpose.msra.mxu0 0.0
        %2376 = vmatprep.subr.mxu0 0.0
        %2377 = vmatpush1.xpose.msra.mxu0 0.0
        %2378 = vmatprep.subr.mxu0 0.0
        %2379 = vmatpush1.xpose.msra.mxu0 0.0
        %2380 = vmatprep.subr.mxu0 0.0
        %2381 = vmatpush1.xpose.msra.mxu0 0.0
        %2382 = vmatprep.subr.mxu0 0.0
        %2383 = vmatpush1.xpose.msra.mxu0 0.0
        %2384 = vmatprep.subr.mxu0 0.0
        %2385 = vmatpush1.xpose.msra.mxu0 0.0
        %2386 = vmatprep.subr.mxu0 0.0
        %2387 = vmatpush1.xpose.msra.mxu0 0.0
        %2388 = vmatprep.subr.mxu0 0.0
        %2389 = vmatpush1.xpose.msra.mxu0 0.0
        %2390 = vmatprep.subr.mxu0 0.0
        %2391 = vmatpush1.xpose.msra.mxu0 0.0
        %2392 = vmatprep.mubr.f32.mxu0 0.0
        %2393 = vmatmul.mubr.f32.gmra.mrb[0].mxu0 %v2296
        %v2394 = vpop.f32.mrb[0].mxu0
        %v2395 = vadd.f32 0.0, %v2394
        %v2396 = vpop.f32.mrb[0].mxu0
        %2397 = vmatprep.mubr.f32.mxu0 0.0
        %2398 = vmatmul.mubr.f32.gmra.mrb[0].mxu0 %v2298
        %v2399 = vpop.f32.mrb[0].mxu0
        %v2400 = vadd.f32 0.0, %v2399
        %v2401 = vpop.f32.mrb[0].mxu0
        %2402 = vmatprep.mubr.f32.mxu0 0.0
        %2403 = vmatmul.mubr.f32.gmra.mrb[0].mxu0 %v2300
        %v2404 = vpop.f32.mrb[0].mxu0
        %v2405 = vadd.f32 0.0, %v2404
        %v2406 = vpop.f32.mrb[0].mxu0
        %2407 = vmatprep.mubr.f32.mxu0 0.0
        %2408 = vmatmul.mubr.f32.gmra.mrb[0].mxu0 %v2302
        %v2409 = vpop.f32.mrb[0].mxu0
        %v2410 = vadd.f32 0.0, %v2409
        %v2411 = vpop.f32.mrb[0].mxu0
        %2412 = vmatprep.mubr.f32.mxu0 0.0
        %2413 = vmatmul.mubr.f32.gmra.mrb[0].mxu0 %v2304
        %v2414 = vpop.f32.mrb[0].mxu0
        %v2415 = vadd.f32 0.0, %v2414
        %v2416 = vpop.f32.mrb[0].mxu0
        %2417 = vmatprep.mubr.f32.mxu0 0.0
        %2418 = vmatmul.mubr.f32.gmra.mrb[0].mxu0 %v2306
        %v2419 = vpop.f32.mrb[0].mxu0
        %v2420 = vadd.f32 0.0, %v2419
        %v2421 = vpop.f32.mrb[0].mxu0
        %2422 = vmatprep.mubr.f32.mxu0 0.0
        %2423 = vmatmul.mubr.f32.gmra.mrb[0].mxu0 %v2308
        %v2424 = vpop.f32.mrb[0].mxu0
        %v2425 = vadd.f32 0.0, %v2424
        %v2426 = vpop.f32.mrb[0].mxu0
        %2427 = vmatprep.mubr.f32.mxu0 0.0
        %2428 = vmatmul.mubr.f32.gmra.mrb[0].mxu0 %v2310
        %v2429 = vpop.f32.mrb[0].mxu0
        %v2430 = vadd.f32 0.0, %v2429
        %v2431 = vpop.f32.mrb[0].mxu0
        %2432 = vdwg.mxu0
        %v2433 = vsel %vm597, %v2395, -inf
        %2434 = vmax.xlane.f32.xlu0 %v2433
        %v2435 = vpop.xlane.xlu0 %2434
        %v2436 = vsel %vm597, %v2400, -inf
        %2437 = vmax.xlane.f32.xlu0 %v2436
        %v2438 = vpop.xlane.xlu0 %2437
        %v2439 = vsel %vm597, %v2405, -inf
        %2440 = vmax.xlane.f32.xlu0 %v2439
        %v2441 = vpop.xlane.xlu0 %2440
        %v2442 = vsel %vm597, %v2410, -inf
        %2443 = vmax.xlane.f32.xlu0 %v2442
        %v2444 = vpop.xlane.xlu0 %2443
        %v2445 = vsel %vm597, %v2415, -inf
        %2446 = vmax.xlane.f32.xlu0 %v2445
        %v2447 = vpop.xlane.xlu0 %2446
        %v2448 = vsel %vm597, %v2420, -inf
        %2449 = vmax.xlane.f32.xlu0 %v2448
        %v2450 = vpop.xlane.xlu0 %2449
        %v2451 = vsel %vm597, %v2425, -inf
        %2452 = vmax.xlane.f32.xlu0 %v2451
        %v2453 = vpop.xlane.xlu0 %2452
        %v2454 = vsel %vm597, %v2430, -inf
        %2455 = vmax.xlane.f32.xlu0 %v2454
        %v2456 = vpop.xlane.xlu0 %2455
        %v2457 = vsub.f32 %v2395, %v2435
        %v2458 = vsub.f32 %v2400, %v2438
        %v2459 = vsub.f32 %v2405, %v2441
        %v2460 = vsub.f32 %v2410, %v2444
        %v2461 = vsub.f32 %v2415, %v2447
        %v2462 = vsub.f32 %v2420, %v2450
        %v2463 = vsub.f32 %v2425, %v2453
        %v2464 = vsub.f32 %v2430, %v2456
        %v2465 = vmul.f32 %v2457, 1.442695
        %v2466 = vpow.pop %v2465
        %v2467 = vmul.f32 %v2458, 1.442695
        %v2468 = vpow.pop %v2467
        %v2469 = vmul.f32 %v2459, 1.442695
        %v2470 = vpow.pop %v2469
        %v2471 = vmul.f32 %v2460, 1.442695
        %v2472 = vpow.pop %v2471
        %v2473 = vmul.f32 %v2461, 1.442695
        %v2474 = vpow.pop %v2473
        %v2475 = vmul.f32 %v2462, 1.442695
        %v2476 = vpow.pop %v2475
        %v2477 = vmul.f32 %v2463, 1.442695
        %v2478 = vpow.pop %v2477
        %v2479 = vmul.f32 %v2464, 1.442695
        %v2480 = vpow.pop %v2479
        %v2481 = vsel %vm597, %v2466, 0.0
        %2482 = vadd.xlane.f32.xlu0 %v2481
        %v2483 = vpop.xlane.xlu0 %2482
        %v2484 = vsel %vm597, %v2468, 0.0
        %2485 = vadd.xlane.f32.xlu0 %v2484
        %v2486 = vpop.xlane.xlu0 %2485
        %v2487 = vsel %vm597, %v2470, 0.0
        %2488 = vadd.xlane.f32.xlu0 %v2487
        %v2489 = vpop.xlane.xlu0 %2488
        %v2490 = vsel %vm597, %v2472, 0.0
        %2491 = vadd.xlane.f32.xlu0 %v2490
        %v2492 = vpop.xlane.xlu0 %2491
        %v2493 = vsel %vm597, %v2474, 0.0
        %2494 = vadd.xlane.f32.xlu0 %v2493
        %v2495 = vpop.xlane.xlu0 %2494
        %v2496 = vsel %vm597, %v2476, 0.0
        %2497 = vadd.xlane.f32.xlu0 %v2496
        %v2498 = vpop.xlane.xlu0 %2497
        %v2499 = vsel %vm597, %v2478, 0.0
        %2500 = vadd.xlane.f32.xlu0 %v2499
        %v2501 = vpop.xlane.xlu0 %2500
        %v2502 = vsel %vm597, %v2480, 0.0
        %2503 = vadd.xlane.f32.xlu0 %v2502
        %v2504 = vpop.xlane.xlu0 %2503
        %2505 = vrot.lane.b32.xlu0 %v2248, 48
        %v2506 = vpop.permute.xlu0 %2505
        %2507 = vrot.lane.b32.xlu0 %v2249, 48
        %v2508 = vpop.permute.xlu0 %2507
        %2509 = vrot.lane.b32.xlu0 %v2250, 48
        %v2510 = vpop.permute.xlu0 %2509
        %2511 = vrot.lane.b32.xlu0 %v2251, 48
        %v2512 = vpop.permute.xlu0 %2511
        %2513 = vrot.lane.b32.xlu0 %v2252, 48
        %v2514 = vpop.permute.xlu0 %2513
        %2515 = vrot.lane.b32.xlu0 %v2253, 48
        %v2516 = vpop.permute.xlu0 %2515
        %2517 = vrot.lane.b32.xlu0 %v2254, 48
        %v2518 = vpop.permute.xlu0 %2517
        %2519 = vrot.lane.b32.xlu0 %v2255, 48
        %v2520 = vpop.permute.xlu0 %2519
        %v2530 = vsel %vm597, %v2466, 0
        %v2533 = vsel %vm597, %v2468, 0
        %v2536 = vsel %vm597, %v2470, 0
        %v2539 = vsel %vm597, %v2472, 0
        %v2542 = vsel %vm597, %v2474, 0
        %v2545 = vsel %vm597, %v2476, 0
        %v2548 = vsel %vm597, %v2478, 0
        %v2551 = vsel %vm597, %v2480, 0
        %2553 = vmatprep.subr.mxu0 0.0
        %2554 = vmatpush1.msra.mxu0 %v2506
        %2555 = vmatprep.subr.mxu0 0.0
        %2556 = vmatpush1.msra.mxu0 %v2508
        %2557 = vmatprep.subr.mxu0 0.0
        %2558 = vmatpush1.msra.mxu0 %v2510
        %2559 = vmatprep.subr.mxu0 0.0
        %2560 = vmatpush1.msra.mxu0 %v2512
        %2561 = vmatprep.subr.mxu0 0.0
        %2562 = vmatpush1.msra.mxu0 %v2514
        %2563 = vmatprep.subr.mxu0 0.0
        %2564 = vmatpush1.msra.mxu0 %v2516
        %2565 = vmatprep.subr.mxu0 0.0
        %2566 = vmatpush1.msra.mxu0 %v2518
        %2567 = vmatprep.subr.mxu0 0.0
        %2568 = vmatpush1.msra.mxu0 %v2520
        %2569 = vmatprep.subr.mxu0 0.0
        %2570 = vmatpush1.msra.mxu0 0.0
        %2571 = vmatprep.subr.mxu0 0.0
        %2572 = vmatpush1.msra.mxu0 0.0
        %2573 = vmatprep.subr.mxu0 0.0
        %2574 = vmatpush1.msra.mxu0 0.0
        %2575 = vmatprep.subr.mxu0 0.0
        %2576 = vmatpush1.msra.mxu0 0.0
        %2577 = vmatprep.subr.mxu0 0.0
        %2578 = vmatpush1.msra.mxu0 0.0
        %2579 = vmatprep.subr.mxu0 0.0
        %2580 = vmatpush1.msra.mxu0 0.0
        %2581 = vmatprep.subr.mxu0 0.0
        %2582 = vmatpush1.msra.mxu0 0.0
        %2583 = vmatprep.subr.mxu0 0.0
        %2584 = vmatpush1.msra.mxu0 0.0
        %2585 = vmatprep.subr.mxu0 0.0
        %2586 = vmatpush1.msra.mxu0 0.0
        %2587 = vmatprep.subr.mxu0 0.0
        %2588 = vmatpush1.msra.mxu0 0.0
        %2589 = vmatprep.subr.mxu0 0.0
        %2590 = vmatpush1.msra.mxu0 0.0
        %2591 = vmatprep.subr.mxu0 0.0
        %2592 = vmatpush1.msra.mxu0 0.0
        %2593 = vmatprep.subr.mxu0 0.0
        %2594 = vmatpush1.msra.mxu0 0.0
        %2595 = vmatprep.subr.mxu0 0.0
        %2596 = vmatpush1.msra.mxu0 0.0
        %2597 = vmatprep.subr.mxu0 0.0
        %2598 = vmatpush1.msra.mxu0 0.0
        %2599 = vmatprep.subr.mxu0 0.0
        %2600 = vmatpush1.msra.mxu0 0.0
        %2601 = vmatprep.subr.mxu0 0.0
        %2602 = vmatpush1.msra.mxu0 0.0
        %2603 = vmatprep.subr.mxu0 0.0
        %2604 = vmatpush1.msra.mxu0 0.0
        %2605 = vmatprep.subr.mxu0 0.0
        %2606 = vmatpush1.msra.mxu0 0.0
        %2607 = vmatprep.subr.mxu0 0.0
        %2608 = vmatpush1.msra.mxu0 0.0
        %2609 = vmatprep.subr.mxu0 0.0
        %2610 = vmatpush1.msra.mxu0 0.0
        %2611 = vmatprep.subr.mxu0 0.0
        %2612 = vmatpush1.msra.mxu0 0.0
        %2613 = vmatprep.subr.mxu0 0.0
        %2614 = vmatpush1.msra.mxu0 0.0
        %2615 = vmatprep.subr.mxu0 0.0
        %2616 = vmatpush1.msra.mxu0 0.0
        %2617 = vmatprep.mubr.f32.mxu0 0.0
        %2618 = vmatmul.mubr.f32.gmra.mrb[0].mxu0 %v2530
        %v2619 = vpop.f32.mrb[0].mxu0
        %v2620 = vadd.f32 0.0, %v2619
        %v2621 = vpop.f32.mrb[0].mxu0
        %2622 = vmatprep.mubr.f32.mxu0 0.0
        %2623 = vmatmul.mubr.f32.gmra.mrb[0].mxu0 %v2533
        %v2624 = vpop.f32.mrb[0].mxu0
        %v2625 = vadd.f32 0.0, %v2624
        %v2626 = vpop.f32.mrb[0].mxu0
        %2627 = vmatprep.mubr.f32.mxu0 0.0
        %2628 = vmatmul.mubr.f32.gmra.mrb[0].mxu0 %v2536
        %v2629 = vpop.f32.mrb[0].mxu0
        %v2630 = vadd.f32 0.0, %v2629
        %v2631 = vpop.f32.mrb[0].mxu0
        %2632 = vmatprep.mubr.f32.mxu0 0.0
        %2633 = vmatmul.mubr.f32.gmra.mrb[0].mxu0 %v2539
        %v2634 = vpop.f32.mrb[0].mxu0
        %v2635 = vadd.f32 0.0, %v2634
        %v2636 = vpop.f32.mrb[0].mxu0
        %2637 = vmatprep.mubr.f32.mxu0 0.0
        %2638 = vmatmul.mubr.f32.gmra.mrb[0].mxu0 %v2542
        %v2639 = vpop.f32.mrb[0].mxu0
        %v2640 = vadd.f32 0.0, %v2639
        %v2641 = vpop.f32.mrb[0].mxu0
        %2642 = vmatprep.mubr.f32.mxu0 0.0
        %2643 = vmatmul.mubr.f32.gmra.mrb[0].mxu0 %v2545
        %v2644 = vpop.f32.mrb[0].mxu0
        %v2645 = vadd.f32 0.0, %v2644
        %v2646 = vpop.f32.mrb[0].mxu0
        %2647 = vmatprep.mubr.f32.mxu0 0.0
        %2648 = vmatmul.mubr.f32.gmra.mrb[0].mxu0 %v2548
        %v2649 = vpop.f32.mrb[0].mxu0
        %v2650 = vadd.f32 0.0, %v2649
        %v2651 = vpop.f32.mrb[0].mxu0
        %2652 = vmatprep.mubr.f32.mxu0 0.0
        %2653 = vmatmul.mubr.f32.gmra.mrb[0].mxu0 %v2551
        %v2654 = vpop.f32.mrb[0].mxu0
        %v2655 = vadd.f32 0.0, %v2654
        %v2656 = vpop.f32.mrb[0].mxu0
        %2657 = vdwg.mxu0
        %v2658 = vrcp.pop %v2483
        %v2659 = vrcp.pop %v2486
        %v2660 = vrcp.pop %v2489
        %v2661 = vrcp.pop %v2492
        %v2662 = vrcp.pop %v2495
        %v2663 = vrcp.pop %v2498
        %v2664 = vrcp.pop %v2501
        %v2665 = vrcp.pop %v2504
        %v2666 = vmul.f32 %v2620, %v2658
        %v2667 = vmul.f32 %v2625, %v2659
        %v2668 = vmul.f32 %v2630, %v2660
        %v2669 = vmul.f32 %v2635, %v2661
        %v2670 = vmul.f32 %v2640, %v2662
        %v2671 = vmul.f32 %v2645, %v2663
        %v2672 = vmul.f32 %v2650, %v2664
        %v2673 = vmul.f32 %v2655, %v2665
        %2682 = vrot.lane.b32.xlu0 %v2666, 16
        %v2683 = vpop.permute.xlu0 %2682
        %2684 = vrot.lane.b32.xlu0 %v2667, 16
        %v2685 = vpop.permute.xlu0 %2684
        %2686 = vrot.lane.b32.xlu0 %v2668, 16
        %v2687 = vpop.permute.xlu0 %2686
        %2688 = vrot.lane.b32.xlu0 %v2669, 16
        %v2689 = vpop.permute.xlu0 %2688
        %2690 = vrot.lane.b32.xlu0 %v2670, 16
        %v2691 = vpop.permute.xlu0 %2690
        %2692 = vrot.lane.b32.xlu0 %v2671, 16
        %v2693 = vpop.permute.xlu0 %2692
        %2694 = vrot.lane.b32.xlu0 %v2672, 16
        %v2695 = vpop.permute.xlu0 %2694
        %2696 = vrot.lane.b32.xlu0 %v2673, 16
        %v2697 = vpop.permute.xlu0 %2696
        %vm2706 = vcmask 162944
        %2707 = vst.msk [vmem:[#allocation3] sm:$0xff] %vm2706, %v2683
        %2708 = vst.msk [vmem:[#allocation3 + $0x8] sm:$0xff] %vm2706, %v2685
        %2709 = vst.msk [vmem:[#allocation3 + $0x10] sm:$0xff] %vm2706, %v2687
        %2710 = vst.msk [vmem:[#allocation3 + $0x18] sm:$0xff] %vm2706, %v2689
        %2711 = vst.msk [vmem:[#allocation3 + $0x20] sm:$0xff] %vm2706, %v2691
        %2712 = vst.msk [vmem:[#allocation3 + $0x28] sm:$0xff] %vm2706, %v2693
        %2713 = vst.msk [vmem:[#allocation3 + $0x30] sm:$0xff] %vm2706, %v2695
        %2714 = vst.msk [vmem:[#allocation3 + $0x38] sm:$0xff] %vm2706, %v2697
        %v2715 = vld [vmem:[#allocation2] sm:$0xff]
        %v2716 = vld [vmem:[#allocation2 + $0x8] sm:$0xff]
        %v2717 = vld [vmem:[#allocation2 + $0x10] sm:$0xff]
        %v2718 = vld [vmem:[#allocation2 + $0x18] sm:$0xff]
        %v2719 = vld [vmem:[#allocation2 + $0x20] sm:$0xff]
        %v2720 = vld [vmem:[#allocation2 + $0x28] sm:$0xff]
        %v2721 = vld [vmem:[#allocation2 + $0x30] sm:$0xff]
        %v2722 = vld [vmem:[#allocation2 + $0x38] sm:$0xff]
        %2731 = vrot.lane.b32.xlu0 %v2715, 108
        %v2732 = vpop.permute.xlu0 %2731
        %2733 = vrot.lane.b32.xlu0 %v2716, 108
        %v2734 = vpop.permute.xlu0 %2733
        %2735 = vrot.lane.b32.xlu0 %v2717, 108
        %v2736 = vpop.permute.xlu0 %2735
        %2737 = vrot.lane.b32.xlu0 %v2718, 108
        %v2738 = vpop.permute.xlu0 %2737
        %2739 = vrot.lane.b32.xlu0 %v2719, 108
        %v2740 = vpop.permute.xlu0 %2739
        %2741 = vrot.lane.b32.xlu0 %v2720, 108
        %v2742 = vpop.permute.xlu0 %2741
        %2743 = vrot.lane.b32.xlu0 %v2721, 108
        %v2744 = vpop.permute.xlu0 %2743
        %2745 = vrot.lane.b32.xlu0 %v2722, 108
        %v2746 = vpop.permute.xlu0 %2745
        %2747 = vrot.lane.b32.xlu0 %v2715, 76
        %v2748 = vpop.permute.xlu0 %2747
        %2749 = vrot.lane.b32.xlu0 %v2716, 76
        %v2750 = vpop.permute.xlu0 %2749
        %2751 = vrot.lane.b32.xlu0 %v2717, 76
        %v2752 = vpop.permute.xlu0 %2751
        %2753 = vrot.lane.b32.xlu0 %v2718, 76
        %v2754 = vpop.permute.xlu0 %2753
        %2755 = vrot.lane.b32.xlu0 %v2719, 76
        %v2756 = vpop.permute.xlu0 %2755
        %2757 = vrot.lane.b32.xlu0 %v2720, 76
        %v2758 = vpop.permute.xlu0 %2757
        %2759 = vrot.lane.b32.xlu0 %v2721, 76
        %v2760 = vpop.permute.xlu0 %2759
        %2761 = vrot.lane.b32.xlu0 %v2722, 76
        %v2762 = vpop.permute.xlu0 %2761
        %v2763 = vsel %vm459, %v2732, 0
        %v2765 = vsel %vm459, %v2734, 0
        %v2767 = vsel %vm459, %v2736, 0
        %v2769 = vsel %vm459, %v2738, 0
        %v2771 = vsel %vm459, %v2740, 0
        %v2773 = vsel %vm459, %v2742, 0
        %v2775 = vsel %vm459, %v2744, 0
        %v2777 = vsel %vm459, %v2746, 0
        %v2779 = vsel %vm459, %v2748, 0
        %v2781 = vsel %vm459, %v2750, 0
        %v2783 = vsel %vm459, %v2752, 0
        %v2785 = vsel %vm459, %v2754, 0
        %v2787 = vsel %vm459, %v2756, 0
        %v2789 = vsel %vm459, %v2758, 0
        %v2791 = vsel %vm459, %v2760, 0
        %v2793 = vsel %vm459, %v2762, 0
        %2795 = vmatprep.subr.mxu0 0.0
        %2796 = vmatpush1.xpose.msra.mxu0 %v2779
        %2797 = vmatprep.subr.mxu0 0.0
        %2798 = vmatpush1.xpose.msra.mxu0 %v2781
        %2799 = vmatprep.subr.mxu0 0.0
        %2800 = vmatpush1.xpose.msra.mxu0 %v2783
        %2801 = vmatprep.subr.mxu0 0.0
        %2802 = vmatpush1.xpose.msra.mxu0 %v2785
        %2803 = vmatprep.subr.mxu0 0.0
        %2804 = vmatpush1.xpose.msra.mxu0 %v2787
        %2805 = vmatprep.subr.mxu0 0.0
        %2806 = vmatpush1.xpose.msra.mxu0 %v2789
        %2807 = vmatprep.subr.mxu0 0.0
        %2808 = vmatpush1.xpose.msra.mxu0 %v2791
        %2809 = vmatprep.subr.mxu0 0.0
        %2810 = vmatpush1.xpose.msra.mxu0 %v2793
        %2811 = vmatprep.subr.mxu0 0.0
        %2812 = vmatpush1.xpose.msra.mxu0 0.0
        %2813 = vmatprep.subr.mxu0 0.0
        %2814 = vmatpush1.xpose.msra.mxu0 0.0
        %2815 = vmatprep.subr.mxu0 0.0
        %2816 = vmatpush1.xpose.msra.mxu0 0.0
        %2817 = vmatprep.subr.mxu0 0.0
        %2818 = vmatpush1.xpose.msra.mxu0 0.0
        %2819 = vmatprep.subr.mxu0 0.0
        %2820 = vmatpush1.xpose.msra.mxu0 0.0
        %2821 = vmatprep.subr.mxu0 0.0
        %2822 = vmatpush1.xpose.msra.mxu0 0.0
        %2823 = vmatprep.subr.mxu0 0.0
        %2824 = vmatpush1.xpose.msra.mxu0 0.0
        %2825 = vmatprep.subr.mxu0 0.0
        %2826 = vmatpush1.xpose.msra.mxu0 0.0
        %2827 = vmatprep.subr.mxu0 0.0
        %2828 = vmatpush1.xpose.msra.mxu0 0.0
        %2829 = vmatprep.subr.mxu0 0.0
        %2830 = vmatpush1.xpose.msra.mxu0 0.0
        %2831 = vmatprep.subr.mxu0 0.0
        %2832 = vmatpush1.xpose.msra.mxu0 0.0
        %2833 = vmatprep.subr.mxu0 0.0
        %2834 = vmatpush1.xpose.msra.mxu0 0.0
        %2835 = vmatprep.subr.mxu0 0.0
        %2836 = vmatpush1.xpose.msra.mxu0 0.0
        %2837 = vmatprep.subr.mxu0 0.0
        %2838 = vmatpush1.xpose.msra.mxu0 0.0
        %2839 = vmatprep.subr.mxu0 0.0
        %2840 = vmatpush1.xpose.msra.mxu0 0.0
        %2841 = vmatprep.subr.mxu0 0.0
        %2842 = vmatpush1.xpose.msra.mxu0 0.0
        %2843 = vmatprep.subr.mxu0 0.0
        %2844 = vmatpush1.xpose.msra.mxu0 0.0
        %2845 = vmatprep.subr.mxu0 0.0
        %2846 = vmatpush1.xpose.msra.mxu0 0.0
        %2847 = vmatprep.subr.mxu0 0.0
        %2848 = vmatpush1.xpose.msra.mxu0 0.0
        %2849 = vmatprep.subr.mxu0 0.0
        %2850 = vmatpush1.xpose.msra.mxu0 0.0
        %2851 = vmatprep.subr.mxu0 0.0
        %2852 = vmatpush1.xpose.msra.mxu0 0.0
        %2853 = vmatprep.subr.mxu0 0.0
        %2854 = vmatpush1.xpose.msra.mxu0 0.0
        %2855 = vmatprep.subr.mxu0 0.0
        %2856 = vmatpush1.xpose.msra.mxu0 0.0
        %2857 = vmatprep.subr.mxu0 0.0
        %2858 = vmatpush1.xpose.msra.mxu0 0.0
        %2859 = vmatprep.mubr.f32.mxu0 0.0
        %2860 = vmatmul.mubr.f32.gmra.mrb[0].mxu0 %v2763
        %v2861 = vpop.f32.mrb[0].mxu0
        %v2862 = vadd.f32 0.0, %v2861
        %v2863 = vpop.f32.mrb[0].mxu0
        %2864 = vmatprep.mubr.f32.mxu0 0.0
        %2865 = vmatmul.mubr.f32.gmra.mrb[0].mxu0 %v2765
        %v2866 = vpop.f32.mrb[0].mxu0
        %v2867 = vadd.f32 0.0, %v2866
        %v2868 = vpop.f32.mrb[0].mxu0
        %2869 = vmatprep.mubr.f32.mxu0 0.0
        %2870 = vmatmul.mubr.f32.gmra.mrb[0].mxu0 %v2767
        %v2871 = vpop.f32.mrb[0].mxu0
        %v2872 = vadd.f32 0.0, %v2871
        %v2873 = vpop.f32.mrb[0].mxu0
        %2874 = vmatprep.mubr.f32.mxu0 0.0
        %2875 = vmatmul.mubr.f32.gmra.mrb[0].mxu0 %v2769
        %v2876 = vpop.f32.mrb[0].mxu0
        %v2877 = vadd.f32 0.0, %v2876
        %v2878 = vpop.f32.mrb[0].mxu0
        %2879 = vmatprep.mubr.f32.mxu0 0.0
        %2880 = vmatmul.mubr.f32.gmra.mrb[0].mxu0 %v2771
        %v2881 = vpop.f32.mrb[0].mxu0
        %v2882 = vadd.f32 0.0, %v2881
        %v2883 = vpop.f32.mrb[0].mxu0
        %2884 = vmatprep.mubr.f32.mxu0 0.0
        %2885 = vmatmul.mubr.f32.gmra.mrb[0].mxu0 %v2773
        %v2886 = vpop.f32.mrb[0].mxu0
        %v2887 = vadd.f32 0.0, %v2886
        %v2888 = vpop.f32.mrb[0].mxu0
        %2889 = vmatprep.mubr.f32.mxu0 0.0
        %2890 = vmatmul.mubr.f32.gmra.mrb[0].mxu0 %v2775
        %v2891 = vpop.f32.mrb[0].mxu0
        %v2892 = vadd.f32 0.0, %v2891
        %v2893 = vpop.f32.mrb[0].mxu0
        %2894 = vmatprep.mubr.f32.mxu0 0.0
        %2895 = vmatmul.mubr.f32.gmra.mrb[0].mxu0 %v2777
        %v2896 = vpop.f32.mrb[0].mxu0
        %v2897 = vadd.f32 0.0, %v2896
        %v2898 = vpop.f32.mrb[0].mxu0
        %2899 = vdwg.mxu0
        %v2900 = vsel %vm597, %v2862, -inf
        %2901 = vmax.xlane.f32.xlu0 %v2900
        %v2902 = vpop.xlane.xlu0 %2901
        %v2903 = vsel %vm597, %v2867, -inf
        %2904 = vmax.xlane.f32.xlu0 %v2903
        %v2905 = vpop.xlane.xlu0 %2904
        %v2906 = vsel %vm597, %v2872, -inf
        %2907 = vmax.xlane.f32.xlu0 %v2906
        %v2908 = vpop.xlane.xlu0 %2907
        %v2909 = vsel %vm597, %v2877, -inf
        %2910 = vmax.xlane.f32.xlu0 %v2909
        %v2911 = vpop.xlane.xlu0 %2910
        %v2912 = vsel %vm597, %v2882, -inf
        %2913 = vmax.xlane.f32.xlu0 %v2912
        %v2914 = vpop.xlane.xlu0 %2913
        %v2915 = vsel %vm597, %v2887, -inf
        %2916 = vmax.xlane.f32.xlu0 %v2915
        %v2917 = vpop.xlane.xlu0 %2916
        %v2918 = vsel %vm597, %v2892, -inf
        %2919 = vmax.xlane.f32.xlu0 %v2918
        %v2920 = vpop.xlane.xlu0 %2919
        %v2921 = vsel %vm597, %v2897, -inf
        %2922 = vmax.xlane.f32.xlu0 %v2921
        %v2923 = vpop.xlane.xlu0 %2922
        %v2924 = vsub.f32 %v2862, %v2902
        %v2925 = vsub.f32 %v2867, %v2905
        %v2926 = vsub.f32 %v2872, %v2908
        %v2927 = vsub.f32 %v2877, %v2911
        %v2928 = vsub.f32 %v2882, %v2914
        %v2929 = vsub.f32 %v2887, %v2917
        %v2930 = vsub.f32 %v2892, %v2920
        %v2931 = vsub.f32 %v2897, %v2923
        %v2932 = vmul.f32 %v2924, 1.442695
        %v2933 = vpow.pop %v2932
        %v2934 = vmul.f32 %v2925, 1.442695
        %v2935 = vpow.pop %v2934
        %v2936 = vmul.f32 %v2926, 1.442695
        %v2937 = vpow.pop %v2936
        %v2938 = vmul.f32 %v2927, 1.442695
        %v2939 = vpow.pop %v2938
        %v2940 = vmul.f32 %v2928, 1.442695
        %v2941 = vpow.pop %v2940
        %v2942 = vmul.f32 %v2929, 1.442695
        %v2943 = vpow.pop %v2942
        %v2944 = vmul.f32 %v2930, 1.442695
        %v2945 = vpow.pop %v2944
        %v2946 = vmul.f32 %v2931, 1.442695
        %v2947 = vpow.pop %v2946
        %v2948 = vsel %vm597, %v2933, 0.0
        %2949 = vadd.xlane.f32.xlu0 %v2948
        %v2950 = vpop.xlane.xlu0 %2949
        %v2951 = vsel %vm597, %v2935, 0.0
        %2952 = vadd.xlane.f32.xlu0 %v2951
        %v2953 = vpop.xlane.xlu0 %2952
        %v2954 = vsel %vm597, %v2937, 0.0
        %2955 = vadd.xlane.f32.xlu0 %v2954
        %v2956 = vpop.xlane.xlu0 %2955
        %v2957 = vsel %vm597, %v2939, 0.0
        %2958 = vadd.xlane.f32.xlu0 %v2957
        %v2959 = vpop.xlane.xlu0 %2958
        %v2960 = vsel %vm597, %v2941, 0.0
        %2961 = vadd.xlane.f32.xlu0 %v2960
        %v2962 = vpop.xlane.xlu0 %2961
        %v2963 = vsel %vm597, %v2943, 0.0
        %2964 = vadd.xlane.f32.xlu0 %v2963
        %v2965 = vpop.xlane.xlu0 %2964
        %v2966 = vsel %vm597, %v2945, 0.0
        %2967 = vadd.xlane.f32.xlu0 %v2966
        %v2968 = vpop.xlane.xlu0 %2967
        %v2969 = vsel %vm597, %v2947, 0.0
        %2970 = vadd.xlane.f32.xlu0 %v2969
        %v2971 = vpop.xlane.xlu0 %2970
        %2972 = vrot.lane.b32.xlu0 %v2715, 44
        %v2973 = vpop.permute.xlu0 %2972
        %2974 = vrot.lane.b32.xlu0 %v2716, 44
        %v2975 = vpop.permute.xlu0 %2974
        %2976 = vrot.lane.b32.xlu0 %v2717, 44
        %v2977 = vpop.permute.xlu0 %2976
        %2978 = vrot.lane.b32.xlu0 %v2718, 44
        %v2979 = vpop.permute.xlu0 %2978
        %2980 = vrot.lane.b32.xlu0 %v2719, 44
        %v2981 = vpop.permute.xlu0 %2980
        %2982 = vrot.lane.b32.xlu0 %v2720, 44
        %v2983 = vpop.permute.xlu0 %2982
        %2984 = vrot.lane.b32.xlu0 %v2721, 44
        %v2985 = vpop.permute.xlu0 %2984
        %2986 = vrot.lane.b32.xlu0 %v2722, 44
        %v2987 = vpop.permute.xlu0 %2986
        %v2997 = vsel %vm597, %v2933, 0
        %v3000 = vsel %vm597, %v2935, 0
        %v3003 = vsel %vm597, %v2937, 0
        %v3006 = vsel %vm597, %v2939, 0
        %v3009 = vsel %vm597, %v2941, 0
        %v3012 = vsel %vm597, %v2943, 0
        %v3015 = vsel %vm597, %v2945, 0
        %v3018 = vsel %vm597, %v2947, 0
        %3020 = vmatprep.subr.mxu0 0.0
        %3021 = vmatpush1.msra.mxu0 %v2973
        %3022 = vmatprep.subr.mxu0 0.0
        %3023 = vmatpush1.msra.mxu0 %v2975
        %3024 = vmatprep.subr.mxu0 0.0
        %3025 = vmatpush1.msra.mxu0 %v2977
        %3026 = vmatprep.subr.mxu0 0.0
        %3027 = vmatpush1.msra.mxu0 %v2979
        %3028 = vmatprep.subr.mxu0 0.0
        %3029 = vmatpush1.msra.mxu0 %v2981
        %3030 = vmatprep.subr.mxu0 0.0
        %3031 = vmatpush1.msra.mxu0 %v2983
        %3032 = vmatprep.subr.mxu0 0.0
        %3033 = vmatpush1.msra.mxu0 %v2985
        %3034 = vmatprep.subr.mxu0 0.0
        %3035 = vmatpush1.msra.mxu0 %v2987
        %3036 = vmatprep.subr.mxu0 0.0
        %3037 = vmatpush1.msra.mxu0 0.0
        %3038 = vmatprep.subr.mxu0 0.0
        %3039 = vmatpush1.msra.mxu0 0.0
        %3040 = vmatprep.subr.mxu0 0.0
        %3041 = vmatpush1.msra.mxu0 0.0
        %3042 = vmatprep.subr.mxu0 0.0
        %3043 = vmatpush1.msra.mxu0 0.0
        %3044 = vmatprep.subr.mxu0 0.0
        %3045 = vmatpush1.msra.mxu0 0.0
        %3046 = vmatprep.subr.mxu0 0.0
        %3047 = vmatpush1.msra.mxu0 0.0
        %3048 = vmatprep.subr.mxu0 0.0
        %3049 = vmatpush1.msra.mxu0 0.0
        %3050 = vmatprep.subr.mxu0 0.0
        %3051 = vmatpush1.msra.mxu0 0.0
        %3052 = vmatprep.subr.mxu0 0.0
        %3053 = vmatpush1.msra.mxu0 0.0
        %3054 = vmatprep.subr.mxu0 0.0
        %3055 = vmatpush1.msra.mxu0 0.0
        %3056 = vmatprep.subr.mxu0 0.0
        %3057 = vmatpush1.msra.mxu0 0.0
        %3058 = vmatprep.subr.mxu0 0.0
        %3059 = vmatpush1.msra.mxu0 0.0
        %3060 = vmatprep.subr.mxu0 0.0
        %3061 = vmatpush1.msra.mxu0 0.0
        %3062 = vmatprep.subr.mxu0 0.0
        %3063 = vmatpush1.msra.mxu0 0.0
        %3064 = vmatprep.subr.mxu0 0.0
        %3065 = vmatpush1.msra.mxu0 0.0
        %3066 = vmatprep.subr.mxu0 0.0
        %3067 = vmatpush1.msra.mxu0 0.0
        %3068 = vmatprep.subr.mxu0 0.0
        %3069 = vmatpush1.msra.mxu0 0.0
        %3070 = vmatprep.subr.mxu0 0.0
        %3071 = vmatpush1.msra.mxu0 0.0
        %3072 = vmatprep.subr.mxu0 0.0
        %3073 = vmatpush1.msra.mxu0 0.0
        %3074 = vmatprep.subr.mxu0 0.0
        %3075 = vmatpush1.msra.mxu0 0.0
        %3076 = vmatprep.subr.mxu0 0.0
        %3077 = vmatpush1.msra.mxu0 0.0
        %3078 = vmatprep.subr.mxu0 0.0
        %3079 = vmatpush1.msra.mxu0 0.0
        %3080 = vmatprep.subr.mxu0 0.0
        %3081 = vmatpush1.msra.mxu0 0.0
        %3082 = vmatprep.subr.mxu0 0.0
        %3083 = vmatpush1.msra.mxu0 0.0
        %3084 = vmatprep.mubr.f32.mxu0 0.0
        %3085 = vmatmul.mubr.f32.gmra.mrb[0].mxu0 %v2997
        %v3086 = vpop.f32.mrb[0].mxu0
        %v3087 = vadd.f32 0.0, %v3086
        %v3088 = vpop.f32.mrb[0].mxu0
        %3089 = vmatprep.mubr.f32.mxu0 0.0
        %3090 = vmatmul.mubr.f32.gmra.mrb[0].mxu0 %v3000
        %v3091 = vpop.f32.mrb[0].mxu0
        %v3092 = vadd.f32 0.0, %v3091
        %v3093 = vpop.f32.mrb[0].mxu0
        %3094 = vmatprep.mubr.f32.mxu0 0.0
        %3095 = vmatmul.mubr.f32.gmra.mrb[0].mxu0 %v3003
        %v3096 = vpop.f32.mrb[0].mxu0
        %v3097 = vadd.f32 0.0, %v3096
        %v3098 = vpop.f32.mrb[0].mxu0
        %3099 = vmatprep.mubr.f32.mxu0 0.0
        %3100 = vmatmul.mubr.f32.gmra.mrb[0].mxu0 %v3006
        %v3101 = vpop.f32.mrb[0].mxu0
        %v3102 = vadd.f32 0.0, %v3101
        %v3103 = vpop.f32.mrb[0].mxu0
        %3104 = vmatprep.mubr.f32.mxu0 0.0
        %3105 = vmatmul.mubr.f32.gmra.mrb[0].mxu0 %v3009
        %v3106 = vpop.f32.mrb[0].mxu0
        %v3107 = vadd.f32 0.0, %v3106
        %v3108 = vpop.f32.mrb[0].mxu0
        %3109 = vmatprep.mubr.f32.mxu0 0.0
        %3110 = vmatmul.mubr.f32.gmra.mrb[0].mxu0 %v3012
        %v3111 = vpop.f32.mrb[0].mxu0
        %v3112 = vadd.f32 0.0, %v3111
        %v3113 = vpop.f32.mrb[0].mxu0
        %3114 = vmatprep.mubr.f32.mxu0 0.0
        %3115 = vmatmul.mubr.f32.gmra.mrb[0].mxu0 %v3015
        %v3116 = vpop.f32.mrb[0].mxu0
        %v3117 = vadd.f32 0.0, %v3116
        %v3118 = vpop.f32.mrb[0].mxu0
        %3119 = vmatprep.mubr.f32.mxu0 0.0
        %3120 = vmatmul.mubr.f32.gmra.mrb[0].mxu0 %v3018
        %v3121 = vpop.f32.mrb[0].mxu0
        %v3122 = vadd.f32 0.0, %v3121
        %v3123 = vpop.f32.mrb[0].mxu0
        %3124 = vdwg.mxu0
        %v3125 = vrcp.pop %v2950
        %v3126 = vrcp.pop %v2953
        %v3127 = vrcp.pop %v2956
        %v3128 = vrcp.pop %v2959
        %v3129 = vrcp.pop %v2962
        %v3130 = vrcp.pop %v2965
        %v3131 = vrcp.pop %v2968
        %v3132 = vrcp.pop %v2971
        %v3133 = vmul.f32 %v3087, %v3125
        %v3134 = vmul.f32 %v3092, %v3126
        %v3135 = vmul.f32 %v3097, %v3127
        %v3136 = vmul.f32 %v3102, %v3128
        %v3137 = vmul.f32 %v3107, %v3129
        %v3138 = vmul.f32 %v3112, %v3130
        %v3139 = vmul.f32 %v3117, %v3131
        %v3140 = vmul.f32 %v3122, %v3132
        %3149 = vrot.lane.b32.xlu0 %v3133, 20
        %v3150 = vpop.permute.xlu0 %3149
        %3151 = vrot.lane.b32.xlu0 %v3134, 20
        %v3152 = vpop.permute.xlu0 %3151
        %3153 = vrot.lane.b32.xlu0 %v3135, 20
        %v3154 = vpop.permute.xlu0 %3153
        %3155 = vrot.lane.b32.xlu0 %v3136, 20
        %v3156 = vpop.permute.xlu0 %3155
        %3157 = vrot.lane.b32.xlu0 %v3137, 20
        %v3158 = vpop.permute.xlu0 %3157
        %3159 = vrot.lane.b32.xlu0 %v3138, 20
        %v3160 = vpop.permute.xlu0 %3159
        %3161 = vrot.lane.b32.xlu0 %v3139, 20
        %v3162 = vpop.permute.xlu0 %3161
        %3163 = vrot.lane.b32.xlu0 %v3140, 20
        %v3164 = vpop.permute.xlu0 %3163
        %vm3173 = vcmask 195744
        %3174 = vst.msk [vmem:[#allocation3] sm:$0xff] %vm3173, %v3150
        %3175 = vst.msk [vmem:[#allocation3 + $0x8] sm:$0xff] %vm3173, %v3152
        %3176 = vst.msk [vmem:[#allocation3 + $0x10] sm:$0xff] %vm3173, %v3154
        %3177 = vst.msk [vmem:[#allocation3 + $0x18] sm:$0xff] %vm3173, %v3156
        %3178 = vst.msk [vmem:[#allocation3 + $0x20] sm:$0xff] %vm3173, %v3158
        %3179 = vst.msk [vmem:[#allocation3 + $0x28] sm:$0xff] %vm3173, %v3160
        %3180 = vst.msk [vmem:[#allocation3 + $0x30] sm:$0xff] %vm3173, %v3162
        %3181 = vst.msk [vmem:[#allocation3 + $0x38] sm:$0xff] %vm3173, %v3164
        %v3182 = vld [vmem:[#allocation2] sm:$0xff]
        %v3183 = vld [vmem:[#allocation2 + $0x8] sm:$0xff]
        %v3184 = vld [vmem:[#allocation2 + $0x10] sm:$0xff]
        %v3185 = vld [vmem:[#allocation2 + $0x18] sm:$0xff]
        %v3186 = vld [vmem:[#allocation2 + $0x20] sm:$0xff]
        %v3187 = vld [vmem:[#allocation2 + $0x28] sm:$0xff]
        %v3188 = vld [vmem:[#allocation2 + $0x30] sm:$0xff]
        %v3189 = vld [vmem:[#allocation2 + $0x38] sm:$0xff]
        %3198 = vrot.lane.b32.xlu0 %v3182, 104
        %v3199 = vpop.permute.xlu0 %3198
        %3200 = vrot.lane.b32.xlu0 %v3183, 104
        %v3201 = vpop.permute.xlu0 %3200
        %3202 = vrot.lane.b32.xlu0 %v3184, 104
        %v3203 = vpop.permute.xlu0 %3202
        %3204 = vrot.lane.b32.xlu0 %v3185, 104
        %v3205 = vpop.permute.xlu0 %3204
        %3206 = vrot.lane.b32.xlu0 %v3186, 104
        %v3207 = vpop.permute.xlu0 %3206
        %3208 = vrot.lane.b32.xlu0 %v3187, 104
        %v3209 = vpop.permute.xlu0 %3208
        %3210 = vrot.lane.b32.xlu0 %v3188, 104
        %v3211 = vpop.permute.xlu0 %3210
        %3212 = vrot.lane.b32.xlu0 %v3189, 104
        %v3213 = vpop.permute.xlu0 %3212
        %3214 = vrot.lane.b32.xlu0 %v3182, 72
        %v3215 = vpop.permute.xlu0 %3214
        %3216 = vrot.lane.b32.xlu0 %v3183, 72
        %v3217 = vpop.permute.xlu0 %3216
        %3218 = vrot.lane.b32.xlu0 %v3184, 72
        %v3219 = vpop.permute.xlu0 %3218
        %3220 = vrot.lane.b32.xlu0 %v3185, 72
        %v3221 = vpop.permute.xlu0 %3220
        %3222 = vrot.lane.b32.xlu0 %v3186, 72
        %v3223 = vpop.permute.xlu0 %3222
        %3224 = vrot.lane.b32.xlu0 %v3187, 72
        %v3225 = vpop.permute.xlu0 %3224
        %3226 = vrot.lane.b32.xlu0 %v3188, 72
        %v3227 = vpop.permute.xlu0 %3226
        %3228 = vrot.lane.b32.xlu0 %v3189, 72
        %v3229 = vpop.permute.xlu0 %3228
        %v3230 = vsel %vm459, %v3199, 0
        %v3232 = vsel %vm459, %v3201, 0
        %v3234 = vsel %vm459, %v3203, 0
        %v3236 = vsel %vm459, %v3205, 0
        %v3238 = vsel %vm459, %v3207, 0
        %v3240 = vsel %vm459, %v3209, 0
        %v3242 = vsel %vm459, %v3211, 0
        %v3244 = vsel %vm459, %v3213, 0
        %v3246 = vsel %vm459, %v3215, 0
        %v3248 = vsel %vm459, %v3217, 0
        %v3250 = vsel %vm459, %v3219, 0
        %v3252 = vsel %vm459, %v3221, 0
        %v3254 = vsel %vm459, %v3223, 0
        %v3256 = vsel %vm459, %v3225, 0
        %v3258 = vsel %vm459, %v3227, 0
        %v3260 = vsel %vm459, %v3229, 0
        %3262 = vmatprep.subr.mxu0 0.0
        %3263 = vmatpush1.xpose.msra.mxu0 %v3246
        %3264 = vmatprep.subr.mxu0 0.0
        %3265 = vmatpush1.xpose.msra.mxu0 %v3248
        %3266 = vmatprep.subr.mxu0 0.0
        %3267 = vmatpush1.xpose.msra.mxu0 %v3250
        %3268 = vmatprep.subr.mxu0 0.0
        %3269 = vmatpush1.xpose.msra.mxu0 %v3252
        %3270 = vmatprep.subr.mxu0 0.0
        %3271 = vmatpush1.xpose.msra.mxu0 %v3254
        %3272 = vmatprep.subr.mxu0 0.0
        %3273 = vmatpush1.xpose.msra.mxu0 %v3256
        %3274 = vmatprep.subr.mxu0 0.0
        %3275 = vmatpush1.xpose.msra.mxu0 %v3258
        %3276 = vmatprep.subr.mxu0 0.0
        %3277 = vmatpush1.xpose.msra.mxu0 %v3260
        %3278 = vmatprep.subr.mxu0 0.0
        %3279 = vmatpush1.xpose.msra.mxu0 0.0
        %3280 = vmatprep.subr.mxu0 0.0
        %3281 = vmatpush1.xpose.msra.mxu0 0.0
        %3282 = vmatprep.subr.mxu0 0.0
        %3283 = vmatpush1.xpose.msra.mxu0 0.0
        %3284 = vmatprep.subr.mxu0 0.0
        %3285 = vmatpush1.xpose.msra.mxu0 0.0
        %3286 = vmatprep.subr.mxu0 0.0
        %3287 = vmatpush1.xpose.msra.mxu0 0.0
        %3288 = vmatprep.subr.mxu0 0.0
        %3289 = vmatpush1.xpose.msra.mxu0 0.0
        %3290 = vmatprep.subr.mxu0 0.0
        %3291 = vmatpush1.xpose.msra.mxu0 0.0
        %3292 = vmatprep.subr.mxu0 0.0
        %3293 = vmatpush1.xpose.msra.mxu0 0.0
        %3294 = vmatprep.subr.mxu0 0.0
        %3295 = vmatpush1.xpose.msra.mxu0 0.0
        %3296 = vmatprep.subr.mxu0 0.0
        %3297 = vmatpush1.xpose.msra.mxu0 0.0
        %3298 = vmatprep.subr.mxu0 0.0
        %3299 = vmatpush1.xpose.msra.mxu0 0.0
        %3300 = vmatprep.subr.mxu0 0.0
        %3301 = vmatpush1.xpose.msra.mxu0 0.0
        %3302 = vmatprep.subr.mxu0 0.0
        %3303 = vmatpush1.xpose.msra.mxu0 0.0
        %3304 = vmatprep.subr.mxu0 0.0
        %3305 = vmatpush1.xpose.msra.mxu0 0.0
        %3306 = vmatprep.subr.mxu0 0.0
        %3307 = vmatpush1.xpose.msra.mxu0 0.0
        %3308 = vmatprep.subr.mxu0 0.0
        %3309 = vmatpush1.xpose.msra.mxu0 0.0
        %3310 = vmatprep.subr.mxu0 0.0
        %3311 = vmatpush1.xpose.msra.mxu0 0.0
        %3312 = vmatprep.subr.mxu0 0.0
        %3313 = vmatpush1.xpose.msra.mxu0 0.0
        %3314 = vmatprep.subr.mxu0 0.0
        %3315 = vmatpush1.xpose.msra.mxu0 0.0
        %3316 = vmatprep.subr.mxu0 0.0
        %3317 = vmatpush1.xpose.msra.mxu0 0.0
        %3318 = vmatprep.subr.mxu0 0.0
        %3319 = vmatpush1.xpose.msra.mxu0 0.0
        %3320 = vmatprep.subr.mxu0 0.0
        %3321 = vmatpush1.xpose.msra.mxu0 0.0
        %3322 = vmatprep.subr.mxu0 0.0
        %3323 = vmatpush1.xpose.msra.mxu0 0.0
        %3324 = vmatprep.subr.mxu0 0.0
        %3325 = vmatpush1.xpose.msra.mxu0 0.0
        %3326 = vmatprep.mubr.f32.mxu0 0.0
        %3327 = vmatmul.mubr.f32.gmra.mrb[0].mxu0 %v3230
        %v3328 = vpop.f32.mrb[0].mxu0
        %v3329 = vadd.f32 0.0, %v3328
        %v3330 = vpop.f32.mrb[0].mxu0
        %3331 = vmatprep.mubr.f32.mxu0 0.0
        %3332 = vmatmul.mubr.f32.gmra.mrb[0].mxu0 %v3232
        %v3333 = vpop.f32.mrb[0].mxu0
        %v3334 = vadd.f32 0.0, %v3333
        %v3335 = vpop.f32.mrb[0].mxu0
        %3336 = vmatprep.mubr.f32.mxu0 0.0
        %3337 = vmatmul.mubr.f32.gmra.mrb[0].mxu0 %v3234
        %v3338 = vpop.f32.mrb[0].mxu0
        %v3339 = vadd.f32 0.0, %v3338
        %v3340 = vpop.f32.mrb[0].mxu0
        %3341 = vmatprep.mubr.f32.mxu0 0.0
        %3342 = vmatmul.mubr.f32.gmra.mrb[0].mxu0 %v3236
        %v3343 = vpop.f32.mrb[0].mxu0
        %v3344 = vadd.f32 0.0, %v3343
        %v3345 = vpop.f32.mrb[0].mxu0
        %3346 = vmatprep.mubr.f32.mxu0 0.0
        %3347 = vmatmul.mubr.f32.gmra.mrb[0].mxu0 %v3238
        %v3348 = vpop.f32.mrb[0].mxu0
        %v3349 = vadd.f32 0.0, %v3348
        %v3350 = vpop.f32.mrb[0].mxu0
        %3351 = vmatprep.mubr.f32.mxu0 0.0
        %3352 = vmatmul.mubr.f32.gmra.mrb[0].mxu0 %v3240
        %v3353 = vpop.f32.mrb[0].mxu0
        %v3354 = vadd.f32 0.0, %v3353
        %v3355 = vpop.f32.mrb[0].mxu0
        %3356 = vmatprep.mubr.f32.mxu0 0.0
        %3357 = vmatmul.mubr.f32.gmra.mrb[0].mxu0 %v3242
        %v3358 = vpop.f32.mrb[0].mxu0
        %v3359 = vadd.f32 0.0, %v3358
        %v3360 = vpop.f32.mrb[0].mxu0
        %3361 = vmatprep.mubr.f32.mxu0 0.0
        %3362 = vmatmul.mubr.f32.gmra.mrb[0].mxu0 %v3244
        %v3363 = vpop.f32.mrb[0].mxu0
        %v3364 = vadd.f32 0.0, %v3363
        %v3365 = vpop.f32.mrb[0].mxu0
        %3366 = vdwg.mxu0
        %v3367 = vsel %vm597, %v3329, -inf
        %3368 = vmax.xlane.f32.xlu0 %v3367
        %v3369 = vpop.xlane.xlu0 %3368
        %v3370 = vsel %vm597, %v3334, -inf
        %3371 = vmax.xlane.f32.xlu0 %v3370
        %v3372 = vpop.xlane.xlu0 %3371
        %v3373 = vsel %vm597, %v3339, -inf
        %3374 = vmax.xlane.f32.xlu0 %v3373
        %v3375 = vpop.xlane.xlu0 %3374
        %v3376 = vsel %vm597, %v3344, -inf
        %3377 = vmax.xlane.f32.xlu0 %v3376
        %v3378 = vpop.xlane.xlu0 %3377
        %v3379 = vsel %vm597, %v3349, -inf
        %3380 = vmax.xlane.f32.xlu0 %v3379
        %v3381 = vpop.xlane.xlu0 %3380
        %v3382 = vsel %vm597, %v3354, -inf
        %3383 = vmax.xlane.f32.xlu0 %v3382
        %v3384 = vpop.xlane.xlu0 %3383
        %v3385 = vsel %vm597, %v3359, -inf
        %3386 = vmax.xlane.f32.xlu0 %v3385
        %v3387 = vpop.xlane.xlu0 %3386
        %v3388 = vsel %vm597, %v3364, -inf
        %3389 = vmax.xlane.f32.xlu0 %v3388
        %v3390 = vpop.xlane.xlu0 %3389
        %v3391 = vsub.f32 %v3329, %v3369
        %v3392 = vsub.f32 %v3334, %v3372
        %v3393 = vsub.f32 %v3339, %v3375
        %v3394 = vsub.f32 %v3344, %v3378
        %v3395 = vsub.f32 %v3349, %v3381
        %v3396 = vsub.f32 %v3354, %v3384
        %v3397 = vsub.f32 %v3359, %v3387
        %v3398 = vsub.f32 %v3364, %v3390
        %v3399 = vmul.f32 %v3391, 1.442695
        %v3400 = vpow.pop %v3399
        %v3401 = vmul.f32 %v3392, 1.442695
        %v3402 = vpow.pop %v3401
        %v3403 = vmul.f32 %v3393, 1.442695
        %v3404 = vpow.pop %v3403
        %v3405 = vmul.f32 %v3394, 1.442695
        %v3406 = vpow.pop %v3405
        %v3407 = vmul.f32 %v3395, 1.442695
        %v3408 = vpow.pop %v3407
        %v3409 = vmul.f32 %v3396, 1.442695
        %v3410 = vpow.pop %v3409
        %v3411 = vmul.f32 %v3397, 1.442695
        %v3412 = vpow.pop %v3411
        %v3413 = vmul.f32 %v3398, 1.442695
        %v3414 = vpow.pop %v3413
        %v3415 = vsel %vm597, %v3400, 0.0
        %3416 = vadd.xlane.f32.xlu0 %v3415
        %v3417 = vpop.xlane.xlu0 %3416
        %v3418 = vsel %vm597, %v3402, 0.0
        %3419 = vadd.xlane.f32.xlu0 %v3418
        %v3420 = vpop.xlane.xlu0 %3419
        %v3421 = vsel %vm597, %v3404, 0.0
        %3422 = vadd.xlane.f32.xlu0 %v3421
        %v3423 = vpop.xlane.xlu0 %3422
        %v3424 = vsel %vm597, %v3406, 0.0
        %3425 = vadd.xlane.f32.xlu0 %v3424
        %v3426 = vpop.xlane.xlu0 %3425
        %v3427 = vsel %vm597, %v3408, 0.0
        %3428 = vadd.xlane.f32.xlu0 %v3427
        %v3429 = vpop.xlane.xlu0 %3428
        %v3430 = vsel %vm597, %v3410, 0.0
        %3431 = vadd.xlane.f32.xlu0 %v3430
        %v3432 = vpop.xlane.xlu0 %3431
        %v3433 = vsel %vm597, %v3412, 0.0
        %3434 = vadd.xlane.f32.xlu0 %v3433
        %v3435 = vpop.xlane.xlu0 %3434
        %v3436 = vsel %vm597, %v3414, 0.0
        %3437 = vadd.xlane.f32.xlu0 %v3436
        %v3438 = vpop.xlane.xlu0 %3437
        %3439 = vrot.lane.b32.xlu0 %v3182, 40
        %v3440 = vpop.permute.xlu0 %3439
        %3441 = vrot.lane.b32.xlu0 %v3183, 40
        %v3442 = vpop.permute.xlu0 %3441
        %3443 = vrot.lane.b32.xlu0 %v3184, 40
        %v3444 = vpop.permute.xlu0 %3443
        %3445 = vrot.lane.b32.xlu0 %v3185, 40
        %v3446 = vpop.permute.xlu0 %3445
        %3447 = vrot.lane.b32.xlu0 %v3186, 40
        %v3448 = vpop.permute.xlu0 %3447
        %3449 = vrot.lane.b32.xlu0 %v3187, 40
        %v3450 = vpop.permute.xlu0 %3449
        %3451 = vrot.lane.b32.xlu0 %v3188, 40
        %v3452 = vpop.permute.xlu0 %3451
        %3453 = vrot.lane.b32.xlu0 %v3189, 40
        %v3454 = vpop.permute.xlu0 %3453
        %v3464 = vsel %vm597, %v3400, 0
        %v3467 = vsel %vm597, %v3402, 0
        %v3470 = vsel %vm597, %v3404, 0
        %v3473 = vsel %vm597, %v3406, 0
        %v3476 = vsel %vm597, %v3408, 0
        %v3479 = vsel %vm597, %v3410, 0
        %v3482 = vsel %vm597, %v3412, 0
        %v3485 = vsel %vm597, %v3414, 0
        %3487 = vmatprep.subr.mxu0 0.0
        %3488 = vmatpush1.msra.mxu0 %v3440
        %3489 = vmatprep.subr.mxu0 0.0
        %3490 = vmatpush1.msra.mxu0 %v3442
        %3491 = vmatprep.subr.mxu0 0.0
        %3492 = vmatpush1.msra.mxu0 %v3444
        %3493 = vmatprep.subr.mxu0 0.0
        %3494 = vmatpush1.msra.mxu0 %v3446
        %3495 = vmatprep.subr.mxu0 0.0
        %3496 = vmatpush1.msra.mxu0 %v3448
        %3497 = vmatprep.subr.mxu0 0.0
        %3498 = vmatpush1.msra.mxu0 %v3450
        %3499 = vmatprep.subr.mxu0 0.0
        %3500 = vmatpush1.msra.mxu0 %v3452
        %3501 = vmatprep.subr.mxu0 0.0
        %3502 = vmatpush1.msra.mxu0 %v3454
        %3503 = vmatprep.subr.mxu0 0.0
        %3504 = vmatpush1.msra.mxu0 0.0
        %3505 = vmatprep.subr.mxu0 0.0
        %3506 = vmatpush1.msra.mxu0 0.0
        %3507 = vmatprep.subr.mxu0 0.0
        %3508 = vmatpush1.msra.mxu0 0.0
        %3509 = vmatprep.subr.mxu0 0.0
        %3510 = vmatpush1.msra.mxu0 0.0
        %3511 = vmatprep.subr.mxu0 0.0
        %3512 = vmatpush1.msra.mxu0 0.0
        %3513 = vmatprep.subr.mxu0 0.0
        %3514 = vmatpush1.msra.mxu0 0.0
        %3515 = vmatprep.subr.mxu0 0.0
        %3516 = vmatpush1.msra.mxu0 0.0
        %3517 = vmatprep.subr.mxu0 0.0
        %3518 = vmatpush1.msra.mxu0 0.0
        %3519 = vmatprep.subr.mxu0 0.0
        %3520 = vmatpush1.msra.mxu0 0.0
        %3521 = vmatprep.subr.mxu0 0.0
        %3522 = vmatpush1.msra.mxu0 0.0
        %3523 = vmatprep.subr.mxu0 0.0
        %3524 = vmatpush1.msra.mxu0 0.0
        %3525 = vmatprep.subr.mxu0 0.0
        %3526 = vmatpush1.msra.mxu0 0.0
        %3527 = vmatprep.subr.mxu0 0.0
        %3528 = vmatpush1.msra.mxu0 0.0
        %3529 = vmatprep.subr.mxu0 0.0
        %3530 = vmatpush1.msra.mxu0 0.0
        %3531 = vmatprep.subr.mxu0 0.0
        %3532 = vmatpush1.msra.mxu0 0.0
        %3533 = vmatprep.subr.mxu0 0.0
        %3534 = vmatpush1.msra.mxu0 0.0
        %3535 = vmatprep.subr.mxu0 0.0
        %3536 = vmatpush1.msra.mxu0 0.0
        %3537 = vmatprep.subr.mxu0 0.0
        %3538 = vmatpush1.msra.mxu0 0.0
        %3539 = vmatprep.subr.mxu0 0.0
        %3540 = vmatpush1.msra.mxu0 0.0
        %3541 = vmatprep.subr.mxu0 0.0
        %3542 = vmatpush1.msra.mxu0 0.0
        %3543 = vmatprep.subr.mxu0 0.0
        %3544 = vmatpush1.msra.mxu0 0.0
        %3545 = vmatprep.subr.mxu0 0.0
        %3546 = vmatpush1.msra.mxu0 0.0
        %3547 = vmatprep.subr.mxu0 0.0
        %3548 = vmatpush1.msra.mxu0 0.0
        %3549 = vmatprep.subr.mxu0 0.0
        %3550 = vmatpush1.msra.mxu0 0.0
        %3551 = vmatprep.mubr.f32.mxu0 0.0
        %3552 = vmatmul.mubr.f32.gmra.mrb[0].mxu0 %v3464
        %v3553 = vpop.f32.mrb[0].mxu0
        %v3554 = vadd.f32 0.0, %v3553
        %v3555 = vpop.f32.mrb[0].mxu0
        %3556 = vmatprep.mubr.f32.mxu0 0.0
        %3557 = vmatmul.mubr.f32.gmra.mrb[0].mxu0 %v3467
        %v3558 = vpop.f32.mrb[0].mxu0
        %v3559 = vadd.f32 0.0, %v3558
        %v3560 = vpop.f32.mrb[0].mxu0
        %3561 = vmatprep.mubr.f32.mxu0 0.0
        %3562 = vmatmul.mubr.f32.gmra.mrb[0].mxu0 %v3470
        %v3563 = vpop.f32.mrb[0].mxu0
        %v3564 = vadd.f32 0.0, %v3563
        %v3565 = vpop.f32.mrb[0].mxu0
        %3566 = vmatprep.mubr.f32.mxu0 0.0
        %3567 = vmatmul.mubr.f32.gmra.mrb[0].mxu0 %v3473
        %v3568 = vpop.f32.mrb[0].mxu0
        %v3569 = vadd.f32 0.0, %v3568
        %v3570 = vpop.f32.mrb[0].mxu0
        %3571 = vmatprep.mubr.f32.mxu0 0.0
        %3572 = vmatmul.mubr.f32.gmra.mrb[0].mxu0 %v3476
        %v3573 = vpop.f32.mrb[0].mxu0
        %v3574 = vadd.f32 0.0, %v3573
        %v3575 = vpop.f32.mrb[0].mxu0
        %3576 = vmatprep.mubr.f32.mxu0 0.0
        %3577 = vmatmul.mubr.f32.gmra.mrb[0].mxu0 %v3479
        %v3578 = vpop.f32.mrb[0].mxu0
        %v3579 = vadd.f32 0.0, %v3578
        %v3580 = vpop.f32.mrb[0].mxu0
        %3581 = vmatprep.mubr.f32.mxu0 0.0
        %3582 = vmatmul.mubr.f32.gmra.mrb[0].mxu0 %v3482
        %v3583 = vpop.f32.mrb[0].mxu0
        %v3584 = vadd.f32 0.0, %v3583
        %v3585 = vpop.f32.mrb[0].mxu0
        %3586 = vmatprep.mubr.f32.mxu0 0.0
        %3587 = vmatmul.mubr.f32.gmra.mrb[0].mxu0 %v3485
        %v3588 = vpop.f32.mrb[0].mxu0
        %v3589 = vadd.f32 0.0, %v3588
        %v3590 = vpop.f32.mrb[0].mxu0
        %3591 = vdwg.mxu0
        %v3592 = vrcp.pop %v3417
        %v3593 = vrcp.pop %v3420
        %v3594 = vrcp.pop %v3423
        %v3595 = vrcp.pop %v3426
        %v3596 = vrcp.pop %v3429
        %v3597 = vrcp.pop %v3432
        %v3598 = vrcp.pop %v3435
        %v3599 = vrcp.pop %v3438
        %v3600 = vmul.f32 %v3554, %v3592
        %v3601 = vmul.f32 %v3559, %v3593
        %v3602 = vmul.f32 %v3564, %v3594
        %v3603 = vmul.f32 %v3569, %v3595
        %v3604 = vmul.f32 %v3574, %v3596
        %v3605 = vmul.f32 %v3579, %v3597
        %v3606 = vmul.f32 %v3584, %v3598
        %v3607 = vmul.f32 %v3589, %v3599
        %3616 = vrot.lane.b32.xlu0 %v3600, 24
        %v3617 = vpop.permute.xlu0 %3616
        %3618 = vrot.lane.b32.xlu0 %v3601, 24
        %v3619 = vpop.permute.xlu0 %3618
        %3620 = vrot.lane.b32.xlu0 %v3602, 24
        %v3621 = vpop.permute.xlu0 %3620
        %3622 = vrot.lane.b32.xlu0 %v3603, 24
        %v3623 = vpop.permute.xlu0 %3622
        %3624 = vrot.lane.b32.xlu0 %v3604, 24
        %v3625 = vpop.permute.xlu0 %3624
        %3626 = vrot.lane.b32.xlu0 %v3605, 24
        %v3627 = vpop.permute.xlu0 %3626
        %3628 = vrot.lane.b32.xlu0 %v3606, 24
        %v3629 = vpop.permute.xlu0 %3628
        %3630 = vrot.lane.b32.xlu0 %v3607, 24
        %v3631 = vpop.permute.xlu0 %3630
        %vm3640 = vcmask 228544
        %3641 = vst.msk [vmem:[#allocation3] sm:$0xff] %vm3640, %v3617
        %3642 = vst.msk [vmem:[#allocation3 + $0x8] sm:$0xff] %vm3640, %v3619
        %3643 = vst.msk [vmem:[#allocation3 + $0x10] sm:$0xff] %vm3640, %v3621
        %3644 = vst.msk [vmem:[#allocation3 + $0x18] sm:$0xff] %vm3640, %v3623
        %3645 = vst.msk [vmem:[#allocation3 + $0x20] sm:$0xff] %vm3640, %v3625
        %3646 = vst.msk [vmem:[#allocation3 + $0x28] sm:$0xff] %vm3640, %v3627
        %3647 = vst.msk [vmem:[#allocation3 + $0x30] sm:$0xff] %vm3640, %v3629
        %3648 = vst.msk [vmem:[#allocation3 + $0x38] sm:$0xff] %vm3640, %v3631
        %v3649 = vld [vmem:[#allocation2] sm:$0xff]
        %v3650 = vld [vmem:[#allocation2 + $0x8] sm:$0xff]
        %v3651 = vld [vmem:[#allocation2 + $0x10] sm:$0xff]
        %v3652 = vld [vmem:[#allocation2 + $0x18] sm:$0xff]
        %v3653 = vld [vmem:[#allocation2 + $0x20] sm:$0xff]
        %v3654 = vld [vmem:[#allocation2 + $0x28] sm:$0xff]
        %v3655 = vld [vmem:[#allocation2 + $0x30] sm:$0xff]
        %v3656 = vld [vmem:[#allocation2 + $0x38] sm:$0xff]
        %3665 = vrot.lane.b32.xlu0 %v3649, 100
        %v3666 = vpop.permute.xlu0 %3665
        %3667 = vrot.lane.b32.xlu0 %v3650, 100
        %v3668 = vpop.permute.xlu0 %3667
        %3669 = vrot.lane.b32.xlu0 %v3651, 100
        %v3670 = vpop.permute.xlu0 %3669
        %3671 = vrot.lane.b32.xlu0 %v3652, 100
        %v3672 = vpop.permute.xlu0 %3671
        %3673 = vrot.lane.b32.xlu0 %v3653, 100
        %v3674 = vpop.permute.xlu0 %3673
        %3675 = vrot.lane.b32.xlu0 %v3654, 100
        %v3676 = vpop.permute.xlu0 %3675
        %3677 = vrot.lane.b32.xlu0 %v3655, 100
        %v3678 = vpop.permute.xlu0 %3677
        %3679 = vrot.lane.b32.xlu0 %v3656, 100
        %v3680 = vpop.permute.xlu0 %3679
        %3681 = vrot.lane.b32.xlu0 %v3649, 68
        %v3682 = vpop.permute.xlu0 %3681
        %3683 = vrot.lane.b32.xlu0 %v3650, 68
        %v3684 = vpop.permute.xlu0 %3683
        %3685 = vrot.lane.b32.xlu0 %v3651, 68
        %v3686 = vpop.permute.xlu0 %3685
        %3687 = vrot.lane.b32.xlu0 %v3652, 68
        %v3688 = vpop.permute.xlu0 %3687
        %3689 = vrot.lane.b32.xlu0 %v3653, 68
        %v3690 = vpop.permute.xlu0 %3689
        %3691 = vrot.lane.b32.xlu0 %v3654, 68
        %v3692 = vpop.permute.xlu0 %3691
        %3693 = vrot.lane.b32.xlu0 %v3655, 68
        %v3694 = vpop.permute.xlu0 %3693
        %3695 = vrot.lane.b32.xlu0 %v3656, 68
        %v3696 = vpop.permute.xlu0 %3695
        %v3697 = vsel %vm459, %v3666, 0
        %v3699 = vsel %vm459, %v3668, 0
        %v3701 = vsel %vm459, %v3670, 0
        %v3703 = vsel %vm459, %v3672, 0
        %v3705 = vsel %vm459, %v3674, 0
        %v3707 = vsel %vm459, %v3676, 0
        %v3709 = vsel %vm459, %v3678, 0
        %v3711 = vsel %vm459, %v3680, 0
        %v3713 = vsel %vm459, %v3682, 0
        %v3715 = vsel %vm459, %v3684, 0
        %v3717 = vsel %vm459, %v3686, 0
        %v3719 = vsel %vm459, %v3688, 0
        %v3721 = vsel %vm459, %v3690, 0
        %v3723 = vsel %vm459, %v3692, 0
        %v3725 = vsel %vm459, %v3694, 0
        %v3727 = vsel %vm459, %v3696, 0
        %3729 = vmatprep.subr.mxu0 0.0
        %3730 = vmatpush1.xpose.msra.mxu0 %v3713
        %3731 = vmatprep.subr.mxu0 0.0
        %3732 = vmatpush1.xpose.msra.mxu0 %v3715
        %3733 = vmatprep.subr.mxu0 0.0
        %3734 = vmatpush1.xpose.msra.mxu0 %v3717
        %3735 = vmatprep.subr.mxu0 0.0
        %3736 = vmatpush1.xpose.msra.mxu0 %v3719
        %3737 = vmatprep.subr.mxu0 0.0
        %3738 = vmatpush1.xpose.msra.mxu0 %v3721
        %3739 = vmatprep.subr.mxu0 0.0
        %3740 = vmatpush1.xpose.msra.mxu0 %v3723
        %3741 = vmatprep.subr.mxu0 0.0
        %3742 = vmatpush1.xpose.msra.mxu0 %v3725
        %3743 = vmatprep.subr.mxu0 0.0
        %3744 = vmatpush1.xpose.msra.mxu0 %v3727
        %3745 = vmatprep.subr.mxu0 0.0
        %3746 = vmatpush1.xpose.msra.mxu0 0.0
        %3747 = vmatprep.subr.mxu0 0.0
        %3748 = vmatpush1.xpose.msra.mxu0 0.0
        %3749 = vmatprep.subr.mxu0 0.0
        %3750 = vmatpush1.xpose.msra.mxu0 0.0
        %3751 = vmatprep.subr.mxu0 0.0
        %3752 = vmatpush1.xpose.msra.mxu0 0.0
        %3753 = vmatprep.subr.mxu0 0.0
        %3754 = vmatpush1.xpose.msra.mxu0 0.0
        %3755 = vmatprep.subr.mxu0 0.0
        %3756 = vmatpush1.xpose.msra.mxu0 0.0
        %3757 = vmatprep.subr.mxu0 0.0
        %3758 = vmatpush1.xpose.msra.mxu0 0.0
        %3759 = vmatprep.subr.mxu0 0.0
        %3760 = vmatpush1.xpose.msra.mxu0 0.0
        %3761 = vmatprep.subr.mxu0 0.0
        %3762 = vmatpush1.xpose.msra.mxu0 0.0
        %3763 = vmatprep.subr.mxu0 0.0
        %3764 = vmatpush1.xpose.msra.mxu0 0.0
        %3765 = vmatprep.subr.mxu0 0.0
        %3766 = vmatpush1.xpose.msra.mxu0 0.0
        %3767 = vmatprep.subr.mxu0 0.0
        %3768 = vmatpush1.xpose.msra.mxu0 0.0
        %3769 = vmatprep.subr.mxu0 0.0
        %3770 = vmatpush1.xpose.msra.mxu0 0.0
        %3771 = vmatprep.subr.mxu0 0.0
        %3772 = vmatpush1.xpose.msra.mxu0 0.0
        %3773 = vmatprep.subr.mxu0 0.0
        %3774 = vmatpush1.xpose.msra.mxu0 0.0
        %3775 = vmatprep.subr.mxu0 0.0
        %3776 = vmatpush1.xpose.msra.mxu0 0.0
        %3777 = vmatprep.subr.mxu0 0.0
        %3778 = vmatpush1.xpose.msra.mxu0 0.0
        %3779 = vmatprep.subr.mxu0 0.0
        %3780 = vmatpush1.xpose.msra.mxu0 0.0
        %3781 = vmatprep.subr.mxu0 0.0
        %3782 = vmatpush1.xpose.msra.mxu0 0.0
        %3783 = vmatprep.subr.mxu0 0.0
        %3784 = vmatpush1.xpose.msra.mxu0 0.0
        %3785 = vmatprep.subr.mxu0 0.0
        %3786 = vmatpush1.xpose.msra.mxu0 0.0
        %3787 = vmatprep.subr.mxu0 0.0
        %3788 = vmatpush1.xpose.msra.mxu0 0.0
        %3789 = vmatprep.subr.mxu0 0.0
        %3790 = vmatpush1.xpose.msra.mxu0 0.0
        %3791 = vmatprep.subr.mxu0 0.0
        %3792 = vmatpush1.xpose.msra.mxu0 0.0
        %3793 = vmatprep.mubr.f32.mxu0 0.0
        %3794 = vmatmul.mubr.f32.gmra.mrb[0].mxu0 %v3697
        %v3795 = vpop.f32.mrb[0].mxu0
        %v3796 = vadd.f32 0.0, %v3795
        %v3797 = vpop.f32.mrb[0].mxu0
        %3798 = vmatprep.mubr.f32.mxu0 0.0
        %3799 = vmatmul.mubr.f32.gmra.mrb[0].mxu0 %v3699
        %v3800 = vpop.f32.mrb[0].mxu0
        %v3801 = vadd.f32 0.0, %v3800
        %v3802 = vpop.f32.mrb[0].mxu0
        %3803 = vmatprep.mubr.f32.mxu0 0.0
        %3804 = vmatmul.mubr.f32.gmra.mrb[0].mxu0 %v3701
        %v3805 = vpop.f32.mrb[0].mxu0
        %v3806 = vadd.f32 0.0, %v3805
        %v3807 = vpop.f32.mrb[0].mxu0
        %3808 = vmatprep.mubr.f32.mxu0 0.0
        %3809 = vmatmul.mubr.f32.gmra.mrb[0].mxu0 %v3703
        %v3810 = vpop.f32.mrb[0].mxu0
        %v3811 = vadd.f32 0.0, %v3810
        %v3812 = vpop.f32.mrb[0].mxu0
        %3813 = vmatprep.mubr.f32.mxu0 0.0
        %3814 = vmatmul.mubr.f32.gmra.mrb[0].mxu0 %v3705
        %v3815 = vpop.f32.mrb[0].mxu0
        %v3816 = vadd.f32 0.0, %v3815
        %v3817 = vpop.f32.mrb[0].mxu0
        %3818 = vmatprep.mubr.f32.mxu0 0.0
        %3819 = vmatmul.mubr.f32.gmra.mrb[0].mxu0 %v3707
        %v3820 = vpop.f32.mrb[0].mxu0
        %v3821 = vadd.f32 0.0, %v3820
        %v3822 = vpop.f32.mrb[0].mxu0
        %3823 = vmatprep.mubr.f32.mxu0 0.0
        %3824 = vmatmul.mubr.f32.gmra.mrb[0].mxu0 %v3709
        %v3825 = vpop.f32.mrb[0].mxu0
        %v3826 = vadd.f32 0.0, %v3825
        %v3827 = vpop.f32.mrb[0].mxu0
        %3828 = vmatprep.mubr.f32.mxu0 0.0
        %3829 = vmatmul.mubr.f32.gmra.mrb[0].mxu0 %v3711
        %v3830 = vpop.f32.mrb[0].mxu0
        %v3831 = vadd.f32 0.0, %v3830
        %v3832 = vpop.f32.mrb[0].mxu0
        %3833 = vdwg.mxu0
        %v3834 = vsel %vm597, %v3796, -inf
        %3835 = vmax.xlane.f32.xlu0 %v3834
        %v3836 = vpop.xlane.xlu0 %3835
        %v3837 = vsel %vm597, %v3801, -inf
        %3838 = vmax.xlane.f32.xlu0 %v3837
        %v3839 = vpop.xlane.xlu0 %3838
        %v3840 = vsel %vm597, %v3806, -inf
        %3841 = vmax.xlane.f32.xlu0 %v3840
        %v3842 = vpop.xlane.xlu0 %3841
        %v3843 = vsel %vm597, %v3811, -inf
        %3844 = vmax.xlane.f32.xlu0 %v3843
        %v3845 = vpop.xlane.xlu0 %3844
        %v3846 = vsel %vm597, %v3816, -inf
        %3847 = vmax.xlane.f32.xlu0 %v3846
        %v3848 = vpop.xlane.xlu0 %3847
        %v3849 = vsel %vm597, %v3821, -inf
        %3850 = vmax.xlane.f32.xlu0 %v3849
        %v3851 = vpop.xlane.xlu0 %3850
        %v3852 = vsel %vm597, %v3826, -inf
        %3853 = vmax.xlane.f32.xlu0 %v3852
        %v3854 = vpop.xlane.xlu0 %3853
        %v3855 = vsel %vm597, %v3831, -inf
        %3856 = vmax.xlane.f32.xlu0 %v3855
        %v3857 = vpop.xlane.xlu0 %3856
        %v3858 = vsub.f32 %v3796, %v3836
        %v3859 = vsub.f32 %v3801, %v3839
        %v3860 = vsub.f32 %v3806, %v3842
        %v3861 = vsub.f32 %v3811, %v3845
        %v3862 = vsub.f32 %v3816, %v3848
        %v3863 = vsub.f32 %v3821, %v3851
        %v3864 = vsub.f32 %v3826, %v3854
        %v3865 = vsub.f32 %v3831, %v3857
        %v3866 = vmul.f32 %v3858, 1.442695
        %v3867 = vpow.pop %v3866
        %v3868 = vmul.f32 %v3859, 1.442695
        %v3869 = vpow.pop %v3868
        %v3870 = vmul.f32 %v3860, 1.442695
        %v3871 = vpow.pop %v3870
        %v3872 = vmul.f32 %v3861, 1.442695
        %v3873 = vpow.pop %v3872
        %v3874 = vmul.f32 %v3862, 1.442695
        %v3875 = vpow.pop %v3874
        %v3876 = vmul.f32 %v3863, 1.442695
        %v3877 = vpow.pop %v3876
        %v3878 = vmul.f32 %v3864, 1.442695
        %v3879 = vpow.pop %v3878
        %v3880 = vmul.f32 %v3865, 1.442695
        %v3881 = vpow.pop %v3880
        %v3882 = vsel %vm597, %v3867, 0.0
        %3883 = vadd.xlane.f32.xlu0 %v3882
        %v3884 = vpop.xlane.xlu0 %3883
        %v3885 = vsel %vm597, %v3869, 0.0
        %3886 = vadd.xlane.f32.xlu0 %v3885
        %v3887 = vpop.xlane.xlu0 %3886
        %v3888 = vsel %vm597, %v3871, 0.0
        %3889 = vadd.xlane.f32.xlu0 %v3888
        %v3890 = vpop.xlane.xlu0 %3889
        %v3891 = vsel %vm597, %v3873, 0.0
        %3892 = vadd.xlane.f32.xlu0 %v3891
        %v3893 = vpop.xlane.xlu0 %3892
        %v3894 = vsel %vm597, %v3875, 0.0
        %3895 = vadd.xlane.f32.xlu0 %v3894
        %v3896 = vpop.xlane.xlu0 %3895
        %v3897 = vsel %vm597, %v3877, 0.0
        %3898 = vadd.xlane.f32.xlu0 %v3897
        %v3899 = vpop.xlane.xlu0 %3898
        %v3900 = vsel %vm597, %v3879, 0.0
        %3901 = vadd.xlane.f32.xlu0 %v3900
        %v3902 = vpop.xlane.xlu0 %3901
        %v3903 = vsel %vm597, %v3881, 0.0
        %3904 = vadd.xlane.f32.xlu0 %v3903
        %v3905 = vpop.xlane.xlu0 %3904
        %3906 = vrot.lane.b32.xlu0 %v3649, 36
        %v3907 = vpop.permute.xlu0 %3906
        %3908 = vrot.lane.b32.xlu0 %v3650, 36
        %v3909 = vpop.permute.xlu0 %3908
        %3910 = vrot.lane.b32.xlu0 %v3651, 36
        %v3911 = vpop.permute.xlu0 %3910
        %3912 = vrot.lane.b32.xlu0 %v3652, 36
        %v3913 = vpop.permute.xlu0 %3912
        %3914 = vrot.lane.b32.xlu0 %v3653, 36
        %v3915 = vpop.permute.xlu0 %3914
        %3916 = vrot.lane.b32.xlu0 %v3654, 36
        %v3917 = vpop.permute.xlu0 %3916
        %3918 = vrot.lane.b32.xlu0 %v3655, 36
        %v3919 = vpop.permute.xlu0 %3918
        %3920 = vrot.lane.b32.xlu0 %v3656, 36
        %v3921 = vpop.permute.xlu0 %3920
        %v3931 = vsel %vm597, %v3867, 0
        %v3934 = vsel %vm597, %v3869, 0
        %v3937 = vsel %vm597, %v3871, 0
        %v3940 = vsel %vm597, %v3873, 0
        %v3943 = vsel %vm597, %v3875, 0
        %v3946 = vsel %vm597, %v3877, 0
        %v3949 = vsel %vm597, %v3879, 0
        %v3952 = vsel %vm597, %v3881, 0
        %3954 = vmatprep.subr.mxu0 0.0
        %3955 = vmatpush1.msra.mxu0 %v3907
        %3956 = vmatprep.subr.mxu0 0.0
        %3957 = vmatpush1.msra.mxu0 %v3909
        %3958 = vmatprep.subr.mxu0 0.0
        %3959 = vmatpush1.msra.mxu0 %v3911
        %3960 = vmatprep.subr.mxu0 0.0
        %3961 = vmatpush1.msra.mxu0 %v3913
        %3962 = vmatprep.subr.mxu0 0.0
        %3963 = vmatpush1.msra.mxu0 %v3915
        %3964 = vmatprep.subr.mxu0 0.0
        %3965 = vmatpush1.msra.mxu0 %v3917
        %3966 = vmatprep.subr.mxu0 0.0
        %3967 = vmatpush1.msra.mxu0 %v3919
        %3968 = vmatprep.subr.mxu0 0.0
        %3969 = vmatpush1.msra.mxu0 %v3921
        %3970 = vmatprep.subr.mxu0 0.0
        %3971 = vmatpush1.msra.mxu0 0.0
        %3972 = vmatprep.subr.mxu0 0.0
        %3973 = vmatpush1.msra.mxu0 0.0
        %3974 = vmatprep.subr.mxu0 0.0
        %3975 = vmatpush1.msra.mxu0 0.0
        %3976 = vmatprep.subr.mxu0 0.0
        %3977 = vmatpush1.msra.mxu0 0.0
        %3978 = vmatprep.subr.mxu0 0.0
        %3979 = vmatpush1.msra.mxu0 0.0
        %3980 = vmatprep.subr.mxu0 0.0
        %3981 = vmatpush1.msra.mxu0 0.0
        %3982 = vmatprep.subr.mxu0 0.0
        %3983 = vmatpush1.msra.mxu0 0.0
        %3984 = vmatprep.subr.mxu0 0.0
        %3985 = vmatpush1.msra.mxu0 0.0
        %3986 = vmatprep.subr.mxu0 0.0
        %3987 = vmatpush1.msra.mxu0 0.0
        %3988 = vmatprep.subr.mxu0 0.0
        %3989 = vmatpush1.msra.mxu0 0.0
        %3990 = vmatprep.subr.mxu0 0.0
        %3991 = vmatpush1.msra.mxu0 0.0
        %3992 = vmatprep.subr.mxu0 0.0
        %3993 = vmatpush1.msra.mxu0 0.0
        %3994 = vmatprep.subr.mxu0 0.0
        %3995 = vmatpush1.msra.mxu0 0.0
        %3996 = vmatprep.subr.mxu0 0.0
        %3997 = vmatpush1.msra.mxu0 0.0
        %3998 = vmatprep.subr.mxu0 0.0
        %3999 = vmatpush1.msra.mxu0 0.0
        %4000 = vmatprep.subr.mxu0 0.0
        %4001 = vmatpush1.msra.mxu0 0.0
        %4002 = vmatprep.subr.mxu0 0.0
        %4003 = vmatpush1.msra.mxu0 0.0
        %4004 = vmatprep.subr.mxu0 0.0
        %4005 = vmatpush1.msra.mxu0 0.0
        %4006 = vmatprep.subr.mxu0 0.0
        %4007 = vmatpush1.msra.mxu0 0.0
        %4008 = vmatprep.subr.mxu0 0.0
        %4009 = vmatpush1.msra.mxu0 0.0
        %4010 = vmatprep.subr.mxu0 0.0
        %4011 = vmatpush1.msra.mxu0 0.0
        %4012 = vmatprep.subr.mxu0 0.0
        %4013 = vmatpush1.msra.mxu0 0.0
        %4014 = vmatprep.subr.mxu0 0.0
        %4015 = vmatpush1.msra.mxu0 0.0
        %4016 = vmatprep.subr.mxu0 0.0
        %4017 = vmatpush1.msra.mxu0 0.0
        %4018 = vmatprep.mubr.f32.mxu0 0.0
        %4019 = vmatmul.mubr.f32.gmra.mrb[0].mxu0 %v3931
        %v4020 = vpop.f32.mrb[0].mxu0
        %v4021 = vadd.f32 0.0, %v4020
        %v4022 = vpop.f32.mrb[0].mxu0
        %4023 = vmatprep.mubr.f32.mxu0 0.0
        %4024 = vmatmul.mubr.f32.gmra.mrb[0].mxu0 %v3934
        %v4025 = vpop.f32.mrb[0].mxu0
        %v4026 = vadd.f32 0.0, %v4025
        %v4027 = vpop.f32.mrb[0].mxu0
        %4028 = vmatprep.mubr.f32.mxu0 0.0
        %4029 = vmatmul.mubr.f32.gmra.mrb[0].mxu0 %v3937
        %v4030 = vpop.f32.mrb[0].mxu0
        %v4031 = vadd.f32 0.0, %v4030
        %v4032 = vpop.f32.mrb[0].mxu0
        %4033 = vmatprep.mubr.f32.mxu0 0.0
        %4034 = vmatmul.mubr.f32.gmra.mrb[0].mxu0 %v3940
        %v4035 = vpop.f32.mrb[0].mxu0
        %v4036 = vadd.f32 0.0, %v4035
        %v4037 = vpop.f32.mrb[0].mxu0
        %4038 = vmatprep.mubr.f32.mxu0 0.0
        %4039 = vmatmul.mubr.f32.gmra.mrb[0].mxu0 %v3943
        %v4040 = vpop.f32.mrb[0].mxu0
        %v4041 = vadd.f32 0.0, %v4040
        %v4042 = vpop.f32.mrb[0].mxu0
        %4043 = vmatprep.mubr.f32.mxu0 0.0
        %4044 = vmatmul.mubr.f32.gmra.mrb[0].mxu0 %v3946
        %v4045 = vpop.f32.mrb[0].mxu0
        %v4046 = vadd.f32 0.0, %v4045
        %v4047 = vpop.f32.mrb[0].mxu0
        %4048 = vmatprep.mubr.f32.mxu0 0.0
        %4049 = vmatmul.mubr.f32.gmra.mrb[0].mxu0 %v3949
        %v4050 = vpop.f32.mrb[0].mxu0
        %v4051 = vadd.f32 0.0, %v4050
        %v4052 = vpop.f32.mrb[0].mxu0
        %4053 = vmatprep.mubr.f32.mxu0 0.0
        %4054 = vmatmul.mubr.f32.gmra.mrb[0].mxu0 %v3952
        %v4055 = vpop.f32.mrb[0].mxu0
        %v4056 = vadd.f32 0.0, %v4055
        %v4057 = vpop.f32.mrb[0].mxu0
        %4058 = vdwg.mxu0
        %v4059 = vrcp.pop %v3884
        %v4060 = vrcp.pop %v3887
        %v4061 = vrcp.pop %v3890
        %v4062 = vrcp.pop %v3893
        %v4063 = vrcp.pop %v3896
        %v4064 = vrcp.pop %v3899
        %v4065 = vrcp.pop %v3902
        %v4066 = vrcp.pop %v3905
        %v4067 = vmul.f32 %v4021, %v4059
        %v4068 = vmul.f32 %v4026, %v4060
        %v4069 = vmul.f32 %v4031, %v4061
        %v4070 = vmul.f32 %v4036, %v4062
        %v4071 = vmul.f32 %v4041, %v4063
        %v4072 = vmul.f32 %v4046, %v4064
        %v4073 = vmul.f32 %v4051, %v4065
        %v4074 = vmul.f32 %v4056, %v4066
        %4083 = vrot.lane.b32.xlu0 %v4067, 28
        %v4084 = vpop.permute.xlu0 %4083
        %4085 = vrot.lane.b32.xlu0 %v4068, 28
        %v4086 = vpop.permute.xlu0 %4085
        %4087 = vrot.lane.b32.xlu0 %v4069, 28
        %v4088 = vpop.permute.xlu0 %4087
        %4089 = vrot.lane.b32.xlu0 %v4070, 28
        %v4090 = vpop.permute.xlu0 %4089
        %4091 = vrot.lane.b32.xlu0 %v4071, 28
        %v4092 = vpop.permute.xlu0 %4091
        %4093 = vrot.lane.b32.xlu0 %v4072, 28
        %v4094 = vpop.permute.xlu0 %4093
        %4095 = vrot.lane.b32.xlu0 %v4073, 28
        %v4096 = vpop.permute.xlu0 %4095
        %4097 = vrot.lane.b32.xlu0 %v4074, 28
        %v4098 = vpop.permute.xlu0 %4097
        %vm4107 = vcmask 261344
        %4108 = vst.msk [vmem:[#allocation3] sm:$0xff] %vm4107, %v4084
        %4109 = vst.msk [vmem:[#allocation3 + $0x8] sm:$0xff] %vm4107, %v4086
        %4110 = vst.msk [vmem:[#allocation3 + $0x10] sm:$0xff] %vm4107, %v4088
        %4111 = vst.msk [vmem:[#allocation3 + $0x18] sm:$0xff] %vm4107, %v4090
        %4112 = vst.msk [vmem:[#allocation3 + $0x20] sm:$0xff] %vm4107, %v4092
        %4113 = vst.msk [vmem:[#allocation3 + $0x28] sm:$0xff] %vm4107, %v4094
        %4114 = vst.msk [vmem:[#allocation3 + $0x30] sm:$0xff] %vm4107, %v4096
        %4115 = vst.msk [vmem:[#allocation3 + $0x38] sm:$0xff] %vm4107, %v4098
        %v4116 = vld [vmem:[#allocation3] sm:$0xff]
        %v4117 = vld [vmem:[#allocation3 + $0x8] sm:$0xff]
        %v4118 = vld [vmem:[#allocation3 + $0x10] sm:$0xff]
        %v4119 = vld [vmem:[#allocation3 + $0x18] sm:$0xff]
        %v4120 = vld [vmem:[#allocation3 + $0x20] sm:$0xff]
        %v4121 = vld [vmem:[#allocation3 + $0x28] sm:$0xff]
        %v4122 = vld [vmem:[#allocation3 + $0x30] sm:$0xff]
        %v4123 = vld [vmem:[#allocation3 + $0x38] sm:$0xff]
        %v4124 = vld [vmem:[%s3] sm:$0xff]
        %v4125 = vld [vmem:[%s3 + $0x8] sm:$0xff]
        %v4126 = vld [vmem:[%s3 + $0x10] sm:$0xff]
        %v4127 = vld [vmem:[%s3 + $0x18] sm:$0xff]
        %v4128 = vld [vmem:[%s4] sm:$0x1]
        %v4130 = vlaneseq
        %v4131 = vshrl.u32 %v4130, 7
        %v4132 = vsub.s32 0, %v4131
        %v4133 = vrot.slane %v4128, %v4132
        %v4136 = vsel %vm288, %v4116, 0
        %v4139 = vsel %vm288, %v4117, 0
        %v4142 = vsel %vm288, %v4118, 0
        %v4145 = vsel %vm288, %v4119, 0
        %v4148 = vsel %vm288, %v4120, 0
        %v4151 = vsel %vm288, %v4121, 0
        %v4154 = vsel %vm288, %v4122, 0
        %v4157 = vsel %vm288, %v4123, 0
        %4159 = vmatprep.subr.mxu0 0.0
        %4160 = vmatpush1.msra.mxu0 %v4124
        %4161 = vmatprep.subr.mxu0 0.0
        %4162 = vmatpush1.msra.mxu0 %v4125
        %4163 = vmatprep.subr.mxu0 0.0
        %4164 = vmatpush1.msra.mxu0 %v4126
        %4165 = vmatprep.subr.mxu0 0.0
        %4166 = vmatpush1.msra.mxu0 %v4127
        %4167 = vmatprep.subr.mxu0 0.0
        %4168 = vmatpush1.msra.mxu0 0.0
        %4169 = vmatprep.subr.mxu0 0.0
        %4170 = vmatpush1.msra.mxu0 0.0
        %4171 = vmatprep.subr.mxu0 0.0
        %4172 = vmatpush1.msra.mxu0 0.0
        %4173 = vmatprep.subr.mxu0 0.0
        %4174 = vmatpush1.msra.mxu0 0.0
        %4175 = vmatprep.subr.mxu0 0.0
        %4176 = vmatpush1.msra.mxu0 0.0
        %4177 = vmatprep.subr.mxu0 0.0
        %4178 = vmatpush1.msra.mxu0 0.0
        %4179 = vmatprep.subr.mxu0 0.0
        %4180 = vmatpush1.msra.mxu0 0.0
        %4181 = vmatprep.subr.mxu0 0.0
        %4182 = vmatpush1.msra.mxu0 0.0
        %4183 = vmatprep.subr.mxu0 0.0
        %4184 = vmatpush1.msra.mxu0 0.0
        %4185 = vmatprep.subr.mxu0 0.0
        %4186 = vmatpush1.msra.mxu0 0.0
        %4187 = vmatprep.subr.mxu0 0.0
        %4188 = vmatpush1.msra.mxu0 0.0
        %4189 = vmatprep.subr.mxu0 0.0
        %4190 = vmatpush1.msra.mxu0 0.0
        %4191 = vmatprep.subr.mxu0 0.0
        %4192 = vmatpush1.msra.mxu0 0.0
        %4193 = vmatprep.subr.mxu0 0.0
        %4194 = vmatpush1.msra.mxu0 0.0
        %4195 = vmatprep.subr.mxu0 0.0
        %4196 = vmatpush1.msra.mxu0 0.0
        %4197 = vmatprep.subr.mxu0 0.0
        %4198 = vmatpush1.msra.mxu0 0.0
        %4199 = vmatprep.subr.mxu0 0.0
        %4200 = vmatpush1.msra.mxu0 0.0
        %4201 = vmatprep.subr.mxu0 0.0
        %4202 = vmatpush1.msra.mxu0 0.0
        %4203 = vmatprep.subr.mxu0 0.0
        %4204 = vmatpush1.msra.mxu0 0.0
        %4205 = vmatprep.subr.mxu0 0.0
        %4206 = vmatpush1.msra.mxu0 0.0
        %4207 = vmatprep.subr.mxu0 0.0
        %4208 = vmatpush1.msra.mxu0 0.0
        %4209 = vmatprep.subr.mxu0 0.0
        %4210 = vmatpush1.msra.mxu0 0.0
        %4211 = vmatprep.subr.mxu0 0.0
        %4212 = vmatpush1.msra.mxu0 0.0
        %4213 = vmatprep.subr.mxu0 0.0
        %4214 = vmatpush1.msra.mxu0 0.0
        %4215 = vmatprep.subr.mxu0 0.0
        %4216 = vmatpush1.msra.mxu0 0.0
        %4217 = vmatprep.subr.mxu0 0.0
        %4218 = vmatpush1.msra.mxu0 0.0
        %4219 = vmatprep.subr.mxu0 0.0
        %4220 = vmatpush1.msra.mxu0 0.0
        %4221 = vmatprep.subr.mxu0 0.0
        %4222 = vmatpush1.msra.mxu0 0.0
        %4223 = vmatprep.mubr.f32.mxu0 0.0
        %4224 = vmatmul.mubr.f32.gmra.mrb[0].mxu0 %v4136
        %v4225 = vpop.f32.mrb[0].mxu0
        %v4226 = vadd.f32 %v4133, %v4225
        %v4227 = vpop.f32.mrb[0].mxu0
        %4228 = vmatprep.mubr.f32.mxu0 0.0
        %4229 = vmatmul.mubr.f32.gmra.mrb[0].mxu0 %v4139
        %v4230 = vpop.f32.mrb[0].mxu0
        %v4231 = vadd.f32 %v4133, %v4230
        %v4232 = vpop.f32.mrb[0].mxu0
        %4233 = vmatprep.mubr.f32.mxu0 0.0
        %4234 = vmatmul.mubr.f32.gmra.mrb[0].mxu0 %v4142
        %v4235 = vpop.f32.mrb[0].mxu0
        %v4236 = vadd.f32 %v4133, %v4235
        %v4237 = vpop.f32.mrb[0].mxu0
        %4238 = vmatprep.mubr.f32.mxu0 0.0
        %4239 = vmatmul.mubr.f32.gmra.mrb[0].mxu0 %v4145
        %v4240 = vpop.f32.mrb[0].mxu0
        %v4241 = vadd.f32 %v4133, %v4240
        %v4242 = vpop.f32.mrb[0].mxu0
        %4243 = vmatprep.mubr.f32.mxu0 0.0
        %4244 = vmatmul.mubr.f32.gmra.mrb[0].mxu0 %v4148
        %v4245 = vpop.f32.mrb[0].mxu0
        %v4246 = vadd.f32 %v4133, %v4245
        %v4247 = vpop.f32.mrb[0].mxu0
        %4248 = vmatprep.mubr.f32.mxu0 0.0
        %4249 = vmatmul.mubr.f32.gmra.mrb[0].mxu0 %v4151
        %v4250 = vpop.f32.mrb[0].mxu0
        %v4251 = vadd.f32 %v4133, %v4250
        %v4252 = vpop.f32.mrb[0].mxu0
        %4253 = vmatprep.mubr.f32.mxu0 0.0
        %4254 = vmatmul.mubr.f32.gmra.mrb[0].mxu0 %v4154
        %v4255 = vpop.f32.mrb[0].mxu0
        %v4256 = vadd.f32 %v4133, %v4255
        %v4257 = vpop.f32.mrb[0].mxu0
        %4258 = vmatprep.mubr.f32.mxu0 0.0
        %4259 = vmatmul.mubr.f32.gmra.mrb[0].mxu0 %v4157
        %v4260 = vpop.f32.mrb[0].mxu0
        %v4261 = vadd.f32 %v4133, %v4260
        %v4262 = vpop.f32.mrb[0].mxu0
        %4263 = vdwg.mxu0
        %4264 = vst [vmem:[%s255] sm:$0xff] %v4226
        %4265 = vst [vmem:[%s255 + $0x8] sm:$0xff] %v4231
        %4266 = vst [vmem:[%s255 + $0x10] sm:$0xff] %v4236
        %4267 = vst [vmem:[%s255 + $0x18] sm:$0xff] %v4241
        %4268 = vst [vmem:[%s255 + $0x20] sm:$0xff] %v4246
        %4269 = vst [vmem:[%s255 + $0x28] sm:$0xff] %v4251
        %4270 = vst [vmem:[%s255 + $0x30] sm:$0xff] %v4256
        %4271 = vst [vmem:[%s255 + $0x38] sm:$0xff] %v4261
        %s4272 = sand.u32 %s159, 1
        %s4273 = scalar_lea.sflag [#allocation5], %s4272
        %s4274 = sand.u32 %s159, 1
        %s4275 = smul.addr %s4274, 64
        %s4276 = scalar_lea.vmem [#allocation4], %s4275
        // Predicated region
        $region41: #{tpu_custom_call.1} parent=39 // pred_check
          %p4277 = pneg %p169
        $region42: #{tpu_custom_call.1} parent=39 // pred_check_branch
          %4279 = sbr.rel (%p4277) target = $region44
        $region43: #{tpu_custom_call.1} parent=39 // pred_region
          %s4281 = ssub.s32 1024, 1024
          %4282 = vsyncadd %s4273, %s4281
          %s4283 = smul.addr %s23, 8
          %s4284 = smul.addr %s4283, 128
          %s4285 = scalar_lea.hbm %s5, %s4284
          %s4286 = sshll.u32 %s4276, 4
          %s4287 = int_to_ptr.vmem [resolvable:$true] %s4286
          %4292 = dma.vmem_to_hbm [thread:$0]  %s4287, 1024, %s4285, %s4273, 128, 128, 8
        $region44: #{tpu_custom_call.1} parent=39 // pred_fallthru
          _
      $region40: #{tpu_custom_call.1} parent=5 // pred_fallthru
        _
      %p4293 = scmp.le.s32.totalorder 2, %s14
      // Predicated region
      $region45: #{tpu_custom_call.1} parent=5 // pred_check
        %p4294 = pneg %p4293
      $region46: #{tpu_custom_call.1} parent=5 // pred_check_branch
        %4296 = sbr.rel (%p4294) target = $region48
      $region47: #{tpu_custom_call.1} parent=5 // pred_region
        %s4297 = ssub.s32 %s14, 2
        // Predicated region
        $region49: #{tpu_custom_call.1} parent=47 // pred_check
          %p4298 = pneg %p175
        $region50: #{tpu_custom_call.1} parent=47 // pred_check_branch
          %4300 = sbr.rel (%p4298) target = $region52
        $region51: #{tpu_custom_call.1} parent=47 // pred_region
          %s4301 = sand.u32 %s160, 1
          %s4302 = scalar_lea.sflag [#allocation5], %s4301
          %s4303 = sand.u32 %s160, 1
          %s4304 = smul.addr %s4303, 64
          %s4305 = scalar_lea.vmem [#allocation4], %s4304
          %4306 = dma.done %s4302, 1024
        $region52: #{tpu_custom_call.1} parent=47 // pred_fallthru
          _
      $region48: #{tpu_custom_call.1} parent=5 // pred_fallthru
        _
    $region6: #{tpu_custom_call.1} parent=1 // loop_footer
      %s18 = sadd.s32 1, %s14
    $region7: #{tpu_custom_call.1} parent=1 // loop_footer_branch
      %13 = sbr.rel target = $region3
    $region8: #{tpu_custom_call.1} parent=1 // loop_exit
      _
    %4307 = vsyncpa [#allocation5], 1
    %s4308 = scalar_lea.sflag [#allocation5], 1
    %4309 = vsyncpa %s4308, 1

</llo_original>
